<compile_context>
chip_gen: v7x
topology: tpu7x:2x2x1
jax: 0.10.0
libtpu: 0.0.40
codegen_flags: <defaults>
</compile_context>

<pallas_src>
import functools
import math

import jax
import jax.numpy as jnp
from jax.experimental import pallas as pl
from jax.experimental.pallas import tpu as pltpu

VGG_16_CFG = [64, 64, 'M', 128, 128, 'M', 256, 256, 256, 'M',
              512, 512, 512, 'M', 512, 512, 512, 'M']
BN_EPS = 1e-5

# VMEM budgeting: keep every pallas_call comfortably under the smallest
# per-core VMEM across generations (v7x: 64 MiB per TensorCore).
_VMEM_LIMIT = 48 * 1024 * 1024
_CONV_VMEM_TARGET = 40 * 1024 * 1024


def _round_up(x, m):
    return (x + m - 1) // m * m


def _lane(c):      # lane (last-dim) padding in VMEM
    return _round_up(c, 128)


def _sub(s):       # sublane padding (conservative: bf16 packs 16 rows/vreg)
    return _round_up(s, 16)


# ----------------------------------------------------------------------------
# Fused matmul kernel: out = maybe_relu((A @ B) * scale + shift)
# Used by the FC layers and the tiny first conv (via im2col).
# ----------------------------------------------------------------------------
def _matmul_scale_shift_kernel(a_ref, b_ref, scale_ref, shift_ref, o_ref,
                               acc_ref, *, relu):
    k = pl.program_id(2)

    @pl.when(k == 0)
    def _():
        acc_ref[...] = jnp.zeros_like(acc_ref)

    acc_ref[...] += jnp.dot(a_ref[...], b_ref[...],
                            preferred_element_type=jnp.float32)

    @pl.when(k == pl.num_programs(2) - 1)
    def _():
        y = acc_ref[...] * scale_ref[...] + shift_ref[...]
        if relu:
            y = jnp.maximum(y, 0.0)
        o_ref[...] = y.astype(o_ref.dtype)


def _choose_tk(K):
    if K <= 4608:
        return K
    for cand in range(4096, 0, -128):
        if K % cand == 0:
            return cand
    return K


def _pick_tm(M, tk):
    if M < 512:
        return max(16, _round_up(M, 16))
    # Prefer a large tm that divides M (no padding copy) and keeps the bf16
    # A block <= ~4 MiB.
    for tm in (1024, 512, 256, 128):
        if M % tm == 0 and tm * _lane(tk) * 2 <= 4 * 1024 * 1024:
            return tm
    return 512


def fused_matmul(a, b, scale, shift, *, relu, out_dtype=jnp.bfloat16):
    """maybe_relu((a @ b) * scale + shift); scale/shift are per-column (f32).

    a and b are consumed as bf16 (MXU-native); accumulation is f32.
    """
    a = a.astype(jnp.bfloat16)
    b = b.astype(jnp.bfloat16)
    scale = scale.astype(jnp.float32)
    shift = shift.astype(jnp.float32)
    M, K = a.shape
    K2, N = b.shape
    assert K == K2
    tk = _choose_tk(K)
    tm = _pick_tm(M, tk)
    tn = 256 if N % 256 == 0 else 128
    Mp, Np = _round_up(M, tm), _round_up(N, tn)

    a_p = a if Mp == M else jnp.pad(a, ((0, Mp - M), (0, 0)))
    b_p = b if Np == N else jnp.pad(b, ((0, 0), (0, Np - N)))
    scale_p = scale.reshape(1, N)
    shift_p = shift.reshape(1, N)
    if Np != N:
        scale_p = jnp.pad(scale_p, ((0, 0), (0, Np - N)), constant_values=1.0)
        shift_p = jnp.pad(shift_p, ((0, 0), (0, Np - N)))

    grid = (Mp // tm, Np // tn, K // tk)
    out = pl.pallas_call(
        functools.partial(_matmul_scale_shift_kernel, relu=relu),
        out_shape=jax.ShapeDtypeStruct((Mp, Np), out_dtype),
        grid_spec=pltpu.PrefetchScalarGridSpec(
            num_scalar_prefetch=0,
            grid=grid,
            in_specs=[
                pl.BlockSpec((tm, tk), lambda i, j, k: (i, k)),
                pl.BlockSpec((tk, tn), lambda i, j, k: (k, j)),
                pl.BlockSpec((1, tn), lambda i, j, k: (0, j)),
                pl.BlockSpec((1, tn), lambda i, j, k: (0, j)),
            ],
            out_specs=pl.BlockSpec((tm, tn), lambda i, j, k: (i, j)),
            scratch_shapes=[pltpu.VMEM((tm, tn), jnp.float32)],
        ),
        compiler_params=pltpu.CompilerParams(
            dimension_semantics=("parallel", "parallel", "arbitrary"),
            vmem_limit_bytes=_VMEM_LIMIT,
        ),
    )(a_p, b_p, scale_p, shift_p)
    return out[:M, :N]


# ----------------------------------------------------------------------------
# Fused direct Conv3x3 (pad=1, stride=1) + folded BatchNorm(eval) + ReLU
# ----------------------------------------------------------------------------
def _conv3x3_kernel(x_ref, w_ref, scale_ref, shift_ref, o_ref, lhs_ref,
                    *, hb, wo, cin):
    """One (row-block, full-Cout) output tile.

    x_ref holds the whole halo-padded image for this batch element (fetched
    once, resident across row blocks).  The 3x3 patch matrix for this row
    block is assembled in the VMEM scratch `lhs_ref` (9 shifted slices) and
    contracted with the (9*Cin, Cout) weight matrix in one MXU matmul.
    """
    i = pl.program_id(1)
    r0 = i * hb
    for ky in range(3):
        xr = x_ref[0, pl.ds(r0 + ky, hb), :, :]            # (hb, wo+2, cin)
        for kx in range(3):
            t = ky * 3 + kx
            lhs_ref[:, t * cin:(t + 1) * cin] = (
                xr[:, kx:kx + wo, :].reshape(hb * wo, cin))
    y = jnp.dot(lhs_ref[...], w_ref[...],
                preferred_element_type=jnp.float32)
    y = y * scale_ref[...] + shift_ref[...]
    y = jnp.maximum(y, 0.0).astype(o_ref.dtype)
    o_ref[0] = y.reshape(hb, wo, -1)


def _conv_vmem_estimate(hb, H, W, cin, cout):
    # Conservative per-call VMEM estimate (double-buffered in/out blocks,
    # scratch, and in-kernel temporaries), in bytes.
    x_buf = (H + 2) * _sub(W + 2) * _lane(cin) * 2
    w_buf = _sub(9 * cin) * _lane(cout) * 2
    o_buf = hb * _sub(W) * _lane(cout) * 2
    ss_buf = 2 * 8 * _lane(cout) * 4
    m = hb * W
    lhs_buf = _sub(m) * _lane(9 * cin) * 2
    tmp = 2 * hb * _sub(W) * _lane(cin) * 2 + 2 * _sub(m) * _lane(cout) * 4
    return 2 * (x_buf + w_buf + o_buf + ss_buf) + lhs_buf + tmp


def _pick_hb(H, W, cin, cout):
    # Largest row block that (a) divides H, (b) leaves >=2 row blocks for
    # megacore sharding, (c) fits the VMEM target.
    for hb in range(H // 2, 0, -1):
        if H % hb:
            continue
        if _conv_vmem_estimate(hb, H, W, cin, cout) <= _CONV_VMEM_TARGET:
            return hb
    return 1


def conv3x3_bn_relu(x, w_mat, scale, shift):
    """x: (N,H,W,Cin) bf16; w_mat: (9*Cin, Cout) bf16 in (ky,kx,cin) row order."""
    N, H, W, cin = x.shape
    cout = w_mat.shape[1]
    xp = jnp.pad(x, ((0, 0), (1, 1), (1, 1), (0, 0)))      # halo pad only (~1x)
    hb = _pick_hb(H, W, cin, cout)
    grid = (N, H // hb)
    out = pl.pallas_call(
        functools.partial(_conv3x3_kernel, hb=hb, wo=W, cin=cin),
        out_shape=jax.ShapeDtypeStruct((N, H, W, cout), jnp.bfloat16),
        grid_spec=pltpu.PrefetchScalarGridSpec(
            num_scalar_prefetch=0,
            grid=grid,
            in_specs=[
                # Whole padded image: DMA'd once, resident across row blocks.
                pl.BlockSpec((1, H + 2, W + 2, cin), lambda n, i: (n, 0, 0, 0)),
                pl.BlockSpec((9 * cin, cout), lambda n, i: (0, 0)),
                pl.BlockSpec((1, cout), lambda n, i: (0, 0)),
                pl.BlockSpec((1, cout), lambda n, i: (0, 0)),
            ],
            out_specs=pl.BlockSpec((1, hb, W, cout), lambda n, i: (n, i, 0, 0)),
            scratch_shapes=[pltpu.VMEM((hb * W, 9 * cin), jnp.bfloat16)],
        ),
        compiler_params=pltpu.CompilerParams(
            dimension_semantics=("parallel", "parallel"),
            vmem_limit_bytes=_VMEM_LIMIT,
        ),
    )(xp, w_mat, scale.reshape(1, cout), shift.reshape(1, cout))
    return out


def conv3x3_im2col(x, w_mat, scale, shift):
    # Only used for the first layer (Cin=3): the 9x patch blow-up is ~2.6 MB.
    N, H, W, C = x.shape
    cout = w_mat.shape[1]
    xp = jnp.pad(x, ((0, 0), (1, 1), (1, 1), (0, 0)))
    patches = [xp[:, ky:ky + H, kx:kx + W, :]
               for ky in range(3) for kx in range(3)]
    cols = jnp.concatenate(patches, axis=-1).reshape(N * H * W, 9 * C)
    y = fused_matmul(cols, w_mat, scale, shift, relu=True)
    return y.reshape(N, H, W, cout)


# ----------------------------------------------------------------------------
# MaxPool 2x2 stride 2 (NHWC), many output rows per grid step
# ----------------------------------------------------------------------------
def _maxpool2x2_kernel(x_ref, o_ref, *, wh):
    x = x_ref[...]                                     # (rb, 2, W, C)
    rm = jnp.maximum(x[:, 0, :, :], x[:, 1, :, :])     # (rb, W, C)
    rm = rm.reshape(rm.shape[0], wh, 2, rm.shape[-1])  # (rb, Wh, 2, C)
    o_ref[...] = jnp.max(rm, axis=2)                   # (rb, Wh, C)


def _pick_rb(rows, W, C):
    per_row = 2 * _sub(W) * _lane(C) * 2
    best = 1
    for rb in range(1, rows + 1):
        if rows % rb:
            continue
        if rows // rb < 2 and rows > 1:
            continue
        if rb * per_row <= 2 * 1024 * 1024:
            best = rb
    return best


def maxpool2x2(x):
    N, H, W, C = x.shape
    Hh, Wh = H // 2, W // 2
    rows = N * Hh
    x4 = x.reshape(rows, 2, W, C)     # expose the row pair; layout-preserving
    rb = _pick_rb(rows, W, C)
    out = pl.pallas_call(
        functools.partial(_maxpool2x2_kernel, wh=Wh),
        out_shape=jax.ShapeDtypeStruct((rows, Wh, C), x.dtype),
        grid=(rows // rb,),
        in_specs=[pl.BlockSpec((rb, 2, W, C), lambda i: (i, 0, 0, 0))],
        out_specs=pl.BlockSpec((rb, Wh, C), lambda i: (i, 0, 0)),
        compiler_params=pltpu.CompilerParams(
            dimension_semantics=("parallel",),
            vmem_limit_bytes=_VMEM_LIMIT,
        ),
    )(x4)
    return out.reshape(N, Hh, Wh, C)


# ----------------------------------------------------------------------------
# Parameter init (deterministic, synthetic) & forward pass
# ----------------------------------------------------------------------------
def init_params(key, in_channels, n_classes):
    conv_params = []
    c = in_channels
    for v in VGG_16_CFG:
        if v == 'M':
            conv_params.append('M')
            continue
        key, kw, kb, kg, kbe, km, kv = jax.random.split(key, 7)
        w = jax.random.normal(kw, (3, 3, c, v), jnp.float32) / math.sqrt(9 * c)
        b = 0.01 * jax.random.normal(kb, (v,), jnp.float32)
        gamma = 1.0 + 0.1 * jax.random.normal(kg, (v,), jnp.float32)
        beta = 0.1 * jax.random.normal(kbe, (v,), jnp.float32)
        rmean = 0.1 * jax.random.normal(km, (v,), jnp.float32)
        rvar = jax.random.uniform(kv, (v,), jnp.float32, 0.5, 1.5)
        # Fold conv bias + eval-mode BatchNorm into per-channel scale/shift.
        # TODO(synk): training-mode BatchNorm (batch statistics) not modeled;
        # eval-mode running-stats semantics are used.
        s = gamma / jnp.sqrt(rvar + BN_EPS)
        shift = (b - rmean) * s + beta
        conv_params.append((w.reshape(9 * c, v).astype(jnp.bfloat16), s, shift))
        c = v

    fc_params = []
    for din, dout in [(512 * 7 * 7, 4096), (4096, 4096), (4096, n_classes)]:
        key, kw, kb = jax.random.split(key, 3)
        w = (jax.random.normal(kw, (din, dout), jnp.float32)
             / math.sqrt(din)).astype(jnp.bfloat16)
        b = 0.01 * jax.random.normal(kb, (dout,), jnp.float32)
        fc_params.append((w, b))
    return conv_params, fc_params


def vgg16_forward(x_nchw, conv_params, fc_params):
    # NCHW -> NHWC, bf16 activations (MXU-native, halves HBM traffic).
    x = jnp.transpose(x_nchw, (0, 2, 3, 1)).astype(jnp.bfloat16)
    for p in conv_params:
        if isinstance(p, str):          # 'M'
            x = maxpool2x2(x)
        else:
            w_mat, s, sh = p
            if x.shape[-1] < 16:        # first layer (tiny Cin): im2col path
                x = conv3x3_im2col(x, w_mat, s, sh)
            else:
                x = conv3x3_bn_relu(x, w_mat, s, sh)
    # Match PyTorch x.view(-1, 512*7*7): flatten in (C, H, W) order.
    N = x.shape[0]
    x = jnp.transpose(x, (0, 3, 1, 2)).reshape(N, 512 * 7 * 7)

    (w1, b1), (w2, b2), (w3, b3) = fc_params
    ones = lambda n: jnp.ones((n,), jnp.float32)
    x = fused_matmul(x, w1, ones(w1.shape[1]), b1, relu=True)
    # TODO(synk): nn.Dropout(0.5) is stochastic in training mode; identity
    # (eval) semantics are used here.
    x = fused_matmul(x, w2, ones(w2.shape[1]), b2, relu=True)
    x = fused_matmul(x, w3, ones(w3.shape[1]), b3, relu=False,
                     out_dtype=jnp.float32)
    return x


if __name__ == "__main__":
    key = jax.random.PRNGKey(0)
    key, kx, kp = jax.random.split(key, 3)
    in_channels, n_classes = 3, 10
    # 224x224 is the smallest spatial size consistent with the module's
    # hard-coded 512*7*7 flatten (5 stride-2 max-pools); batch kept at 1.
    x = jax.random.normal(kx, (1, in_channels, 224, 224), jnp.float32)
    conv_params, fc_params = init_params(kp, in_channels, n_classes)

    out = vgg16_forward(x, conv_params, fc_params)
    out = jax.block_until_ready(out)
    assert out.shape == (1, n_classes), out.shape
    assert bool(jnp.all(jnp.isfinite(out)))
    print("KERNEL_OK")
</pallas_src>

<mosaic_0001>
module attributes {stable_mosaic.version = 11 : i64} {
  func.func @_matmul_scale_shift_kernel(%arg0: i32, %arg1: i32, %arg2: i32, %arg3: memref<1024x27xbf16, #tpu.memory_space<vmem>>, %arg4: memref<27x128xbf16, #tpu.memory_space<vmem>>, %arg5: memref<1x128xf32, #tpu.memory_space<vmem>>, %arg6: memref<1x128xf32, #tpu.memory_space<vmem>>, %arg7: memref<1024x128xbf16, #tpu.memory_space<vmem>>, %arg8: memref<1024x128xf32, #tpu.memory_space<vmem>>) attributes {dimension_semantics = [#tpu.dimension_semantics<parallel>, #tpu.dimension_semantics<parallel>, #tpu.dimension_semantics<arbitrary>], iteration_bounds = array<i64: 49, 1, 1>, scalar_prefetch = 0 : i64, scratch_operands = 1 : i64, tpu.core_type = #tpu.core_type<tc>, window_params = [{transform_indices = @transform_0, window_bounds = array<i64: 1024, 27>}, {transform_indices = @transform_1, window_bounds = array<i64: 27, 128>}, {transform_indices = @transform_2, window_bounds = array<i64: 1, 128>}, {transform_indices = @transform_3, window_bounds = array<i64: 1, 128>}, {transform_indices = @transform_4, window_bounds = array<i64: 1024, 128>}]} {
    %c0_i32 = arith.constant 0 : i32
    %0 = arith.cmpi eq, %arg2, %c0_i32 : i32
    %1 = arith.extui %0 : i1 to i32
    %c0_i32_0 = arith.constant 0 : i32
    %2 = arith.cmpi ne, %1, %c0_i32_0 : i32
    scf.if %2 {
      %cst_10 = arith.constant 0.000000e+00 : f32
      %12 = vector.broadcast %cst_10 : f32 to vector<1024x128xf32>
      %c0_11 = arith.constant 0 : index
      %c0_12 = arith.constant 0 : index
      %13 = vector.load %arg8[%c0_11, %c0_12] : memref<1024x128xf32, #tpu.memory_space<vmem>>, vector<1024x128xf32>
      tpu.vector_store %arg8[%c0_11, %c0_12], %12 {strides = array<i32>} : memref<1024x128xf32, #tpu.memory_space<vmem>>, vector<1024x128xf32>,
    } else {
    }
    %c0 = arith.constant 0 : index
    %c0_1 = arith.constant 0 : index
    %3 = vector.load %arg8[%c0, %c0_1] : memref<1024x128xf32, #tpu.memory_space<vmem>>, vector<1024x128xf32>
    %c0_2 = arith.constant 0 : index
    %c0_3 = arith.constant 0 : index
    %4 = vector.load %arg3[%c0_2, %c0_3] : memref<1024x27xbf16, #tpu.memory_space<vmem>>, vector<1024x27xbf16>
    %c0_4 = arith.constant 0 : index
    %c0_5 = arith.constant 0 : index
    %5 = vector.load %arg4[%c0_4, %c0_5] : memref<27x128xbf16, #tpu.memory_space<vmem>>, vector<27x128xbf16>
    %cst = arith.constant dense<0.000000e+00> : vector<1024x128xf32>
    %6 = tpu.matmul %4, %5, %cst {dimension_numbers = #tpu.dot_dimension_numbers<[1], [0], [0], [1], [0, 0, 1, 1], [], []>} : vector<1024x27xbf16>, vector<27x128xbf16>, vector<1024x128xf32> -> vector<1024x128xf32>
    %7 = arith.addf %3, %6 : vector<1024x128xf32>
    %c0_6 = arith.constant 0 : index
    %c0_7 = arith.constant 0 : index
    %8 = vector.load %arg8[%c0_6, %c0_7] : memref<1024x128xf32, #tpu.memory_space<vmem>>, vector<1024x128xf32>
    tpu.vector_store %arg8[%c0_6, %c0_7], %7 {strides = array<i32>} : memref<1024x128xf32, #tpu.memory_space<vmem>>, vector<1024x128xf32>,
    %c0_i32_8 = arith.constant 0 : i32
    %9 = arith.cmpi eq, %arg2, %c0_i32_8 : i32
    %10 = arith.extui %9 : i1 to i32
    %c0_i32_9 = arith.constant 0 : i32
    %11 = arith.cmpi ne, %10, %c0_i32_9 : i32
    scf.if %11 {
      %c0_10 = arith.constant 0 : index
      %c0_11 = arith.constant 0 : index
      %12 = vector.load %arg8[%c0_10, %c0_11] : memref<1024x128xf32, #tpu.memory_space<vmem>>, vector<1024x128xf32>
      %c0_12 = arith.constant 0 : index
      %c0_13 = arith.constant 0 : index
      %13 = vector.load %arg5[%c0_12, %c0_13] : memref<1x128xf32, #tpu.memory_space<vmem>>, vector<1x128xf32>
      %14 = vector.broadcast %13 : vector<1x128xf32> to vector<1024x128xf32>
      %15 = arith.mulf %12, %14 : vector<1024x128xf32>
      %c0_14 = arith.constant 0 : index
      %c0_15 = arith.constant 0 : index
      %16 = vector.load %arg6[%c0_14, %c0_15] : memref<1x128xf32, #tpu.memory_space<vmem>>, vector<1x128xf32>
      %17 = vector.broadcast %16 : vector<1x128xf32> to vector<1024x128xf32>
      %18 = arith.addf %15, %17 : vector<1024x128xf32>
      %cst_16 = arith.constant 0.000000e+00 : f32
      %19 = vector.broadcast %cst_16 : f32 to vector<1024x128xf32>
      %20 = arith.maximumf %18, %19 : vector<1024x128xf32>
      %21 = arith.truncf %20 : vector<1024x128xf32> to vector<1024x128xbf16>
      %c0_17 = arith.constant 0 : index
      %c0_18 = arith.constant 0 : index
      %22 = vector.load %arg7[%c0_17, %c0_18] : memref<1024x128xbf16, #tpu.memory_space<vmem>>, vector<1024x128xbf16>
      tpu.vector_store %arg7[%c0_17, %c0_18], %21 {strides = array<i32>} : memref<1024x128xbf16, #tpu.memory_space<vmem>>, vector<1024x128xbf16>,
    } else {
    }
    return
  }
  func.func @transform_0(%arg0: i32, %arg1: i32, %arg2: i32) -> (i32, i32) {
    %c0_i32 = arith.constant 0 : i32
    return %arg0, %arg2 : i32, i32
  }
  func.func @transform_1(%arg0: i32, %arg1: i32, %arg2: i32) -> (i32, i32) {
    %c0_i32 = arith.constant 0 : i32
    return %arg2, %arg1 : i32, i32
  }
  func.func @transform_2(%arg0: i32, %arg1: i32, %arg2: i32) -> (i32, i32) {
    %c0_i32 = arith.constant 0 : i32
    %c0_i32_0 = arith.constant 0 : i32
    return %c0_i32, %arg1 : i32, i32
  }
  func.func @transform_3(%arg0: i32, %arg1: i32, %arg2: i32) -> (i32, i32) {
    %c0_i32 = arith.constant 0 : i32
    %c0_i32_0 = arith.constant 0 : i32
    return %c0_i32, %arg1 : i32, i32
  }
  func.func @transform_4(%arg0: i32, %arg1: i32, %arg2: i32) -> (i32, i32) {
    %c0_i32 = arith.constant 0 : i32
    return %arg0, %arg1 : i32, i32
  }
}

</mosaic_0001>

<llo_original>
// kernel: tpu_custom_call.1
$region0: #{tpu_custom_call.1}
  #allocation0 [shape = 'u32[]', space=smem, size = 0x4, offset = 0x4, fixed_abs, tag = 'smem constant byte address 0x4 - core index']
  #allocation1 [shape = 'u32[144,128]{1,0:T(1,128)}', space=vmem, size = 0x12000, scoped, tag = 'internal scratch']
  #allocation2 [shape = 'f32[1024,128]{1,0:T(8,128)}', space=vmem, size = 0x80000, scoped, tag = 'scratch operand']
  %s0 = inlined_call_operand.vmem [shape: bf16[50176,27], index: 0, kind: input, shape index: {}]
  %s1 = inlined_call_operand.vmem [shape: bf16[27,128], index: 1, kind: input, shape index: {}]
  %s2 = inlined_call_operand.vmem [shape: f32[1,128], index: 2, kind: input, shape index: {}]
  %s3 = inlined_call_operand.vmem [shape: f32[1,128], index: 3, kind: input, shape index: {}]
  %s4 = inlined_call_operand.hbm [shape: bf16[50176,128], index: 4, kind: output, shape index: {}]
  %s5 = sld [smem:[#allocation0]]
  $region57: #{tpu_custom_call.1} parent=0
    _
  %s7 = ssub.s32 1, %s5
  %s8 = scalar_select 0, %s7, %s5
  $region1: #{tpu_custom_call.1} parent=0
    #allocation3 [shape = 'u8[524288]{0}', space=vmem, size = 0x80000, scoped, tag = 'output window, operand 0']
    #allocation4 [shape = 's32[2]{0}', space=sflag, size = 0x8, scoped, tag = 'scoped memory for tpu_custom_call.1']
    %9 = vsyncpa [#allocation4], 0
    %s10 = scalar_lea.sflag [#allocation4], 1
    %11 = vsyncpa %s10, 0
    loop: start=0, step=1, limit=51
    $region2: #{tpu_custom_call.1} parent=1 // loop_pre_header
      _
    $region3: #{tpu_custom_call.1} parent=1 // loop_header
      %s13 = sphi 0, %s17
      %p14 = scmp.ge.s32.totalorder %s13, 51
      %s20 = sphi 0, %s39
      %s21 = sphi 0, %s35
      %s22 = sphi 0, %s31
      %s23 = sphi 0, %s20
      %s24 = sphi 0, %s21
      %s25 = sphi 0, %s22
      %s26 = sphi 0, %s23
      %s27 = sphi 0, %s24
      %s28 = sphi 0, %s25
      %s44 = sphi 0, %s46
      %s47 = sphi 0, %s44
      %s48 = sphi 0, %s47
      %s64 = sphi 0, %s48
      %s72 = sphi 0, %s74
      %s75 = sphi 0, %s72
      %s76 = sphi 0, %s75
      %s92 = sphi 0, %s76
      %s98 = sphi 0, %s100
      %s101 = sphi 0, %s98
      %s102 = sphi 0, %s101
      %s118 = sphi 0, %s102
      %s124 = sphi 0, %s126
      %s127 = sphi 0, %s124
      %s128 = sphi 0, %s127
      %s144 = sphi 0, %s128
      %s152 = sphi 0, %s154
      %s155 = sphi 0, %s152
      %s156 = sphi 0, %s155
      %s172 = sphi 0, %s156
    $region4: #{tpu_custom_call.1} parent=1 // loop_header_branch
      %16 = sbr.rel (%p14) target = $region8
    $region5: #{tpu_custom_call.1} parent=1 // loop_body
      %s18 = ssub.s32 %s13, 1
      %s19 = ssub.s32 %s13, 2
      %s29 = sadd.s32 1, %s22
      %p30 = scmp.ge.s32.totalorder %s29, 1
      %s31 = scalar_select %p30, 0, %s29
      %s32 = sadd.s32 1, %s21
      %s33 = scalar_select %p30, %s32, %s21
      %p34 = scmp.ge.s32.totalorder %s33, 1
      %s35 = scalar_select %p34, 0, %s33
      %s36 = sadd.s32 1, %s20
      %s37 = scalar_select %p34, %s36, %s20
      %p38 = scmp.ge.s32.totalorder %s37, 49
      %s39 = scalar_select %p38, 0, %s37
      %s40 = ssub.s32 %s20, %s39
      %s41 = ssub.s32 %s22, %s31
      %s42 = sor.u32 %s40, %s41
      %p43 = scmp.eq.s32.totalorder %s42, 0
      %s45 = sadd.s32 %s44, 1
      %s46 = scalar_select %p43, %s44, %s45
      %p49 = pneg %p43
      %p50 = scmp.eq.s32.totalorder %s13, 48
      %p51 = por %p49, %p50
      %p52 = scmp.ne.s32.totalorder %s44, %s47
      %p53 = scmp.eq.s32.totalorder %s13, 0
      %p54 = por %p52, %p53
      %p55 = scmp.ne.s32.totalorder %s44, %s47
      %p56 = scmp.eq.s32.totalorder %s18, 48
      %p57 = por %p55, %p56
      %p58 = scmp.ne.s32.totalorder %s47, %s48
      %p59 = scmp.eq.s32.totalorder %s18, 0
      %p60 = por %p58, %p59
      %p61 = scmp.ne.s32.totalorder %s47, %s48
      %p62 = scmp.eq.s32.totalorder %s19, 48
      %p63 = por %p61, %p62
      %p65 = scmp.ne.s32.totalorder %s48, %s64
      %p66 = scmp.eq.s32.totalorder %s19, 0
      %p67 = por %p65, %p66
      %s68 = ssub.s32 %s22, %s31
      %s69 = ssub.s32 %s21, %s35
      %s70 = sor.u32 %s68, %s69
      %p71 = scmp.eq.s32.totalorder %s70, 0
      %s73 = sadd.s32 %s72, 1
      %s74 = scalar_select %p71, %s72, %s73
      %p77 = pneg %p71
      %p78 = scmp.eq.s32.totalorder %s13, 48
      %p79 = por %p77, %p78
      %p80 = scmp.ne.s32.totalorder %s72, %s75
      %p81 = scmp.eq.s32.totalorder %s13, 0
      %p82 = por %p80, %p81
      %p83 = scmp.ne.s32.totalorder %s72, %s75
      %p84 = scmp.eq.s32.totalorder %s18, 48
      %p85 = por %p83, %p84
      %p86 = scmp.ne.s32.totalorder %s75, %s76
      %p87 = scmp.eq.s32.totalorder %s18, 0
      %p88 = por %p86, %p87
      %p89 = scmp.ne.s32.totalorder %s75, %s76
      %p90 = scmp.eq.s32.totalorder %s19, 48
      %p91 = por %p89, %p90
      %p93 = scmp.ne.s32.totalorder %s76, %s92
      %p94 = scmp.eq.s32.totalorder %s19, 0
      %p95 = por %p93, %p94
      %s96 = ssub.s32 %s21, %s35
      %p97 = scmp.eq.s32.totalorder %s96, 0
      %s99 = sadd.s32 %s98, 1
      %s100 = scalar_select %p97, %s98, %s99
      %p103 = pneg %p97
      %p104 = scmp.eq.s32.totalorder %s13, 48
      %p105 = por %p103, %p104
      %p106 = scmp.ne.s32.totalorder %s98, %s101
      %p107 = scmp.eq.s32.totalorder %s13, 0
      %p108 = por %p106, %p107
      %p109 = scmp.ne.s32.totalorder %s98, %s101
      %p110 = scmp.eq.s32.totalorder %s18, 48
      %p111 = por %p109, %p110
      %p112 = scmp.ne.s32.totalorder %s101, %s102
      %p113 = scmp.eq.s32.totalorder %s18, 0
      %p114 = por %p112, %p113
      %p115 = scmp.ne.s32.totalorder %s101, %s102
      %p116 = scmp.eq.s32.totalorder %s19, 48
      %p117 = por %p115, %p116
      %p119 = scmp.ne.s32.totalorder %s102, %s118
      %p120 = scmp.eq.s32.totalorder %s19, 0
      %p121 = por %p119, %p120
      %s122 = ssub.s32 %s21, %s35
      %p123 = scmp.eq.s32.totalorder %s122, 0
      %s125 = sadd.s32 %s124, 1
      %s126 = scalar_select %p123, %s124, %s125
      %p129 = pneg %p123
      %p130 = scmp.eq.s32.totalorder %s13, 48
      %p131 = por %p129, %p130
      %p132 = scmp.ne.s32.totalorder %s124, %s127
      %p133 = scmp.eq.s32.totalorder %s13, 0
      %p134 = por %p132, %p133
      %p135 = scmp.ne.s32.totalorder %s124, %s127
      %p136 = scmp.eq.s32.totalorder %s18, 48
      %p137 = por %p135, %p136
      %p138 = scmp.ne.s32.totalorder %s127, %s128
      %p139 = scmp.eq.s32.totalorder %s18, 0
      %p140 = por %p138, %p139
      %p141 = scmp.ne.s32.totalorder %s127, %s128
      %p142 = scmp.eq.s32.totalorder %s19, 48
      %p143 = por %p141, %p142
      %p145 = scmp.ne.s32.totalorder %s128, %s144
      %p146 = scmp.eq.s32.totalorder %s19, 0
      %p147 = por %p145, %p146
      %s148 = ssub.s32 %s20, %s39
      %s149 = ssub.s32 %s21, %s35
      %s150 = sor.u32 %s148, %s149
      %p151 = scmp.eq.s32.totalorder %s150, 0
      %s153 = sadd.s32 %s152, 1
      %s154 = scalar_select %p151, %s152, %s153
      %p157 = pneg %p151
      %p158 = scmp.eq.s32.totalorder %s13, 48
      %p159 = por %p157, %p158
      %p160 = scmp.ne.s32.totalorder %s152, %s155
      %p161 = scmp.eq.s32.totalorder %s13, 0
      %p162 = por %p160, %p161
      %p163 = scmp.ne.s32.totalorder %s152, %s155
      %p164 = scmp.eq.s32.totalorder %s18, 48
      %p165 = por %p163, %p164
      %p166 = scmp.ne.s32.totalorder %s155, %s156
      %p167 = scmp.eq.s32.totalorder %s18, 0
      %p168 = por %p166, %p167
      %p169 = scmp.ne.s32.totalorder %s155, %s156
      %p170 = scmp.eq.s32.totalorder %s19, 48
      %p171 = por %p169, %p170
      %p173 = scmp.ne.s32.totalorder %s156, %s172
      %p174 = scmp.eq.s32.totalorder %s19, 0
      %p175 = por %p173, %p174
      %p176 = scmp.le.s32.totalorder 1, %s13
      %p177 = scmp.lt.s32.totalorder %s13, 50
      %p178 = pnand %p176, %p177
      %p179 = pneg %p178
      // Predicated region
      $region9: #{tpu_custom_call.1} parent=5 // pred_check
        _
      $region10: #{tpu_custom_call.1} parent=5 // pred_check_branch
        %181 = sbr.rel (%p178) target = $region12
      $region11: #{tpu_custom_call.1} parent=5 // pred_region
        %s182 = ssub.s32 %s13, 1
        // Predicated region
        $region13: #{tpu_custom_call.1} parent=11 // pred_check
          %p183 = pneg %p88
        $region14: #{tpu_custom_call.1} parent=11 // pred_check_branch
          %185 = sbr.rel (%p183) target = $region16
        $region15: #{tpu_custom_call.1} parent=11 // pred_region
          %s186 = smul.u32 4, %s25
          %p187 = scmp.lt.s32.totalorder %s186, 3
          %s188 = scalar_select %p187, %s186, 3
          %p189 = scmp.lt.s32.totalorder %s24, 0
          %s190 = scalar_select %p189, %s24, 0
          %s191 = sadd.s32 %s190, %s188
          %s192 = smul.addr %s191, 4
          %s193 = scalar_lea.vmem %s1, %s192
          %s194 = smul.u32 4, %s25
        $region16: #{tpu_custom_call.1} parent=11 // pred_fallthru
          _
        // Predicated region
        $region17: #{tpu_custom_call.1} parent=11 // pred_check
          %p195 = pneg %p114
        $region18: #{tpu_custom_call.1} parent=11 // pred_check_branch
          %197 = sbr.rel (%p195) target = $region20
        $region19: #{tpu_custom_call.1} parent=11 // pred_region
          %p198 = scmp.lt.s32.totalorder %s24, 0
          %s199 = scalar_select %p198, %s24, 0
          %s200 = scalar_lea.vmem %s2, %s199
        $region20: #{tpu_custom_call.1} parent=11 // pred_fallthru
          _
        // Predicated region
        $region21: #{tpu_custom_call.1} parent=11 // pred_check
          %p201 = pneg %p140
        $region22: #{tpu_custom_call.1} parent=11 // pred_check_branch
          %203 = sbr.rel (%p201) target = $region24
        $region23: #{tpu_custom_call.1} parent=11 // pred_region
          %p204 = scmp.lt.s32.totalorder %s24, 0
          %s205 = scalar_select %p204, %s24, 0
          %s206 = scalar_lea.vmem %s3, %s205
        $region24: #{tpu_custom_call.1} parent=11 // pred_fallthru
          _
      $region12: #{tpu_custom_call.1} parent=5 // pred_fallthru
        _
      %p207 = scmp.lt.s32.totalorder %s13, 49
      // Predicated region
      $region25: #{tpu_custom_call.1} parent=5 // pred_check
        %p208 = pneg %p207
      $region26: #{tpu_custom_call.1} parent=5 // pred_check_branch
        %210 = sbr.rel (%p208) target = $region28
      $region27: #{tpu_custom_call.1} parent=5 // pred_region
        // Predicated region
        $region29: #{tpu_custom_call.1} parent=27 // pred_check
          %p211 = pneg %p54
        $region30: #{tpu_custom_call.1} parent=27 // pred_check_branch
          %213 = sbr.rel (%p211) target = $region32
        $region31: #{tpu_custom_call.1} parent=27 // pred_region
          %s214 = smul.u32 128, %s20
          %p215 = scmp.lt.s32.totalorder %s214, 6271
          %s216 = scalar_select %p215, %s214, 6271
          %p217 = scmp.lt.s32.totalorder %s22, 0
          %s218 = scalar_select %p217, %s22, 0
          %s219 = sadd.s32 %s218, %s216
          %s220 = smul.addr %s219, 4
          %s221 = scalar_lea.vmem %s0, %s220
          %s222 = smul.u32 128, %s20
        $region32: #{tpu_custom_call.1} parent=27 // pred_fallthru
          _
      $region28: #{tpu_custom_call.1} parent=5 // pred_fallthru
        _
      %p223 = scmp.le.s32.totalorder 1, %s13
      %p224 = scmp.lt.s32.totalorder %s13, 50
      %p225 = pnand %p223, %p224
      %p226 = pneg %p225
      // Predicated region
      $region33: #{tpu_custom_call.1} parent=5 // pred_check
        _
      $region34: #{tpu_custom_call.1} parent=5 // pred_check_branch
        %228 = sbr.rel (%p225) target = $region36
      $region35: #{tpu_custom_call.1} parent=5 // pred_region
        %s229 = ssub.s32 %s13, 1
        %s230 = smul.u32 128, %s23
        %p231 = scmp.lt.s32.totalorder %s230, 6271
        %s232 = scalar_select %p231, %s230, 6271
        %p233 = scmp.lt.s32.totalorder %s25, 0
        %s234 = scalar_select %p233, %s25, 0
        %s235 = sadd.s32 %s234, %s232
        %s236 = smul.addr %s235, 4
        %s237 = scalar_lea.vmem %s0, %s236
        %p238 = pneg %p60
        %p239 = pneg %p57
        %s240 = smul.u32 4, %s25
        %p241 = scmp.lt.s32.totalorder %s240, 3
        %s242 = scalar_select %p241, %s240, 3
        %p243 = scmp.lt.s32.totalorder %s24, 0
        %s244 = scalar_select %p243, %s24, 0
        %s245 = sadd.s32 %s244, %s242
        %s246 = smul.addr %s245, 4
        %s247 = scalar_lea.vmem %s1, %s246
        %p248 = pneg %p88
        %p249 = pneg %p85
        %p250 = scmp.lt.s32.totalorder %s24, 0
        %s251 = scalar_select %p250, %s24, 0
        %s252 = scalar_lea.vmem %s2, %s251
        %p253 = pneg %p114
        %p254 = pneg %p111
        %p255 = scmp.lt.s32.totalorder %s24, 0
        %s256 = scalar_select %p255, %s24, 0
        %s257 = scalar_lea.vmem %s3, %s256
        %p258 = pneg %p140
        %p259 = pneg %p137
        %p260 = pneg %p168
        %p261 = pneg %p165
        %s262 = sand.u32 %s155, 1
        %s263 = scalar_lea.sflag [#allocation4], %s262
        %s264 = sand.u32 %s155, 1
        %s265 = smul.addr %s264, 512
        %s266 = scalar_lea.vmem [#allocation3], %s265
        %s267 = smul.u32 128, %s23
        %p268 = scmp.lt.s32.totalorder %s267, 6271
        %s269 = scalar_select %p268, %s267, 6271
        %p270 = scmp.lt.s32.totalorder %s25, 0
        %s271 = scalar_select %p270, %s25, 0
        %s272 = sadd.s32 %s271, %s269
        %s273 = smul.addr %s272, 4
        %s274 = scalar_lea.vmem %s0, %s273
        %s275 = smul.u32 128, %s23
        %s276 = smul.u32 4, %s25
        %p277 = scmp.lt.s32.totalorder %s276, 3
        %s278 = scalar_select %p277, %s276, 3
        %p279 = scmp.lt.s32.totalorder %s24, 0
        %s280 = scalar_select %p279, %s24, 0
        %s281 = sadd.s32 %s280, %s278
        %s282 = smul.addr %s281, 4
        %s283 = scalar_lea.vmem %s1, %s282
        %s284 = smul.u32 4, %s25
        %p285 = scmp.lt.s32.totalorder %s24, 0
        %s286 = scalar_select %p285, %s24, 0
        %s287 = scalar_lea.vmem %s2, %s286
        %p288 = scmp.lt.s32.totalorder %s24, 0
        %s289 = scalar_select %p288, %s24, 0
        %s290 = scalar_lea.vmem %s3, %s289
        %s291 = smul.u32 128, %s23
        %p293 = scmp.eq.s32.totalorder %s25, 0
        // Predicated region
        $region37: #{tpu_custom_call.1} parent=35 // pred_check
          %p294 = pneg %p293
        $region38: #{tpu_custom_call.1} parent=35 // pred_check_branch
          %296 = sbr.rel (%p294) target = $region40
        $region39: #{tpu_custom_call.1} parent=35 // pred_region
          %297 = vst [vmem:[#allocation2] sm:$0xff] 0.0
          %298 = vst [vmem:[#allocation2 + $0x8] sm:$0xff] 0.0
          %299 = vst [vmem:[#allocation2 + $0x10] sm:$0xff] 0.0
          %300 = vst [vmem:[#allocation2 + $0x18] sm:$0xff] 0.0
          %301 = vst [vmem:[#allocation2 + $0x20] sm:$0xff] 0.0
          %302 = vst [vmem:[#allocation2 + $0x28] sm:$0xff] 0.0
          %303 = vst [vmem:[#allocation2 + $0x30] sm:$0xff] 0.0
          %304 = vst [vmem:[#allocation2 + $0x38] sm:$0xff] 0.0
          %305 = vst [vmem:[#allocation2 + $0x40] sm:$0xff] 0.0
          %306 = vst [vmem:[#allocation2 + $0x48] sm:$0xff] 0.0
          %307 = vst [vmem:[#allocation2 + $0x50] sm:$0xff] 0.0
          %308 = vst [vmem:[#allocation2 + $0x58] sm:$0xff] 0.0
          %309 = vst [vmem:[#allocation2 + $0x60] sm:$0xff] 0.0
          %310 = vst [vmem:[#allocation2 + $0x68] sm:$0xff] 0.0
          %311 = vst [vmem:[#allocation2 + $0x70] sm:$0xff] 0.0
          %312 = vst [vmem:[#allocation2 + $0x78] sm:$0xff] 0.0
          %313 = vst [vmem:[#allocation2 + $0x80] sm:$0xff] 0.0
          %314 = vst [vmem:[#allocation2 + $0x88] sm:$0xff] 0.0
          %315 = vst [vmem:[#allocation2 + $0x90] sm:$0xff] 0.0
          %316 = vst [vmem:[#allocation2 + $0x98] sm:$0xff] 0.0
          %317 = vst [vmem:[#allocation2 + $0xa0] sm:$0xff] 0.0
          %318 = vst [vmem:[#allocation2 + $0xa8] sm:$0xff] 0.0
          %319 = vst [vmem:[#allocation2 + $0xb0] sm:$0xff] 0.0
          %320 = vst [vmem:[#allocation2 + $0xb8] sm:$0xff] 0.0
          %321 = vst [vmem:[#allocation2 + $0xc0] sm:$0xff] 0.0
          %322 = vst [vmem:[#allocation2 + $0xc8] sm:$0xff] 0.0
          %323 = vst [vmem:[#allocation2 + $0xd0] sm:$0xff] 0.0
          %324 = vst [vmem:[#allocation2 + $0xd8] sm:$0xff] 0.0
          %325 = vst [vmem:[#allocation2 + $0xe0] sm:$0xff] 0.0
          %326 = vst [vmem:[#allocation2 + $0xe8] sm:$0xff] 0.0
          %327 = vst [vmem:[#allocation2 + $0xf0] sm:$0xff] 0.0
          %328 = vst [vmem:[#allocation2 + $0xf8] sm:$0xff] 0.0
          %329 = vst [vmem:[#allocation2 + $0x100] sm:$0xff] 0.0
          %330 = vst [vmem:[#allocation2 + $0x108] sm:$0xff] 0.0
          %331 = vst [vmem:[#allocation2 + $0x110] sm:$0xff] 0.0
          %332 = vst [vmem:[#allocation2 + $0x118] sm:$0xff] 0.0
          %333 = vst [vmem:[#allocation2 + $0x120] sm:$0xff] 0.0
          %334 = vst [vmem:[#allocation2 + $0x128] sm:$0xff] 0.0
          %335 = vst [vmem:[#allocation2 + $0x130] sm:$0xff] 0.0
          %336 = vst [vmem:[#allocation2 + $0x138] sm:$0xff] 0.0
          %337 = vst [vmem:[#allocation2 + $0x140] sm:$0xff] 0.0
          %338 = vst [vmem:[#allocation2 + $0x148] sm:$0xff] 0.0
          %339 = vst [vmem:[#allocation2 + $0x150] sm:$0xff] 0.0
          %340 = vst [vmem:[#allocation2 + $0x158] sm:$0xff] 0.0
          %341 = vst [vmem:[#allocation2 + $0x160] sm:$0xff] 0.0
          %342 = vst [vmem:[#allocation2 + $0x168] sm:$0xff] 0.0
          %343 = vst [vmem:[#allocation2 + $0x170] sm:$0xff] 0.0
          %344 = vst [vmem:[#allocation2 + $0x178] sm:$0xff] 0.0
          %345 = vst [vmem:[#allocation2 + $0x180] sm:$0xff] 0.0
          %346 = vst [vmem:[#allocation2 + $0x188] sm:$0xff] 0.0
          %347 = vst [vmem:[#allocation2 + $0x190] sm:$0xff] 0.0
          %348 = vst [vmem:[#allocation2 + $0x198] sm:$0xff] 0.0
          %349 = vst [vmem:[#allocation2 + $0x1a0] sm:$0xff] 0.0
          %350 = vst [vmem:[#allocation2 + $0x1a8] sm:$0xff] 0.0
          %351 = vst [vmem:[#allocation2 + $0x1b0] sm:$0xff] 0.0
          %352 = vst [vmem:[#allocation2 + $0x1b8] sm:$0xff] 0.0
          %353 = vst [vmem:[#allocation2 + $0x1c0] sm:$0xff] 0.0
          %354 = vst [vmem:[#allocation2 + $0x1c8] sm:$0xff] 0.0
          %355 = vst [vmem:[#allocation2 + $0x1d0] sm:$0xff] 0.0
          %356 = vst [vmem:[#allocation2 + $0x1d8] sm:$0xff] 0.0
          %357 = vst [vmem:[#allocation2 + $0x1e0] sm:$0xff] 0.0
          %358 = vst [vmem:[#allocation2 + $0x1e8] sm:$0xff] 0.0
          %359 = vst [vmem:[#allocation2 + $0x1f0] sm:$0xff] 0.0
          %360 = vst [vmem:[#allocation2 + $0x1f8] sm:$0xff] 0.0
          %361 = vst [vmem:[#allocation2 + $0x200] sm:$0xff] 0.0
          %362 = vst [vmem:[#allocation2 + $0x208] sm:$0xff] 0.0
          %363 = vst [vmem:[#allocation2 + $0x210] sm:$0xff] 0.0
          %364 = vst [vmem:[#allocation2 + $0x218] sm:$0xff] 0.0
          %365 = vst [vmem:[#allocation2 + $0x220] sm:$0xff] 0.0
          %366 = vst [vmem:[#allocation2 + $0x228] sm:$0xff] 0.0
          %367 = vst [vmem:[#allocation2 + $0x230] sm:$0xff] 0.0
          %368 = vst [vmem:[#allocation2 + $0x238] sm:$0xff] 0.0
          %369 = vst [vmem:[#allocation2 + $0x240] sm:$0xff] 0.0
          %370 = vst [vmem:[#allocation2 + $0x248] sm:$0xff] 0.0
          %371 = vst [vmem:[#allocation2 + $0x250] sm:$0xff] 0.0
          %372 = vst [vmem:[#allocation2 + $0x258] sm:$0xff] 0.0
          %373 = vst [vmem:[#allocation2 + $0x260] sm:$0xff] 0.0
          %374 = vst [vmem:[#allocation2 + $0x268] sm:$0xff] 0.0
          %375 = vst [vmem:[#allocation2 + $0x270] sm:$0xff] 0.0
          %376 = vst [vmem:[#allocation2 + $0x278] sm:$0xff] 0.0
          %377 = vst [vmem:[#allocation2 + $0x280] sm:$0xff] 0.0
          %378 = vst [vmem:[#allocation2 + $0x288] sm:$0xff] 0.0
          %379 = vst [vmem:[#allocation2 + $0x290] sm:$0xff] 0.0
          %380 = vst [vmem:[#allocation2 + $0x298] sm:$0xff] 0.0
          %381 = vst [vmem:[#allocation2 + $0x2a0] sm:$0xff] 0.0
          %382 = vst [vmem:[#allocation2 + $0x2a8] sm:$0xff] 0.0
          %383 = vst [vmem:[#allocation2 + $0x2b0] sm:$0xff] 0.0
          %384 = vst [vmem:[#allocation2 + $0x2b8] sm:$0xff] 0.0
          %385 = vst [vmem:[#allocation2 + $0x2c0] sm:$0xff] 0.0
          %386 = vst [vmem:[#allocation2 + $0x2c8] sm:$0xff] 0.0
          %387 = vst [vmem:[#allocation2 + $0x2d0] sm:$0xff] 0.0
          %388 = vst [vmem:[#allocation2 + $0x2d8] sm:$0xff] 0.0
          %389 = vst [vmem:[#allocation2 + $0x2e0] sm:$0xff] 0.0
          %390 = vst [vmem:[#allocation2 + $0x2e8] sm:$0xff] 0.0
          %391 = vst [vmem:[#allocation2 + $0x2f0] sm:$0xff] 0.0
          %392 = vst [vmem:[#allocation2 + $0x2f8] sm:$0xff] 0.0
          %393 = vst [vmem:[#allocation2 + $0x300] sm:$0xff] 0.0
          %394 = vst [vmem:[#allocation2 + $0x308] sm:$0xff] 0.0
          %395 = vst [vmem:[#allocation2 + $0x310] sm:$0xff] 0.0
          %396 = vst [vmem:[#allocation2 + $0x318] sm:$0xff] 0.0
          %397 = vst [vmem:[#allocation2 + $0x320] sm:$0xff] 0.0
          %398 = vst [vmem:[#allocation2 + $0x328] sm:$0xff] 0.0
          %399 = vst [vmem:[#allocation2 + $0x330] sm:$0xff] 0.0
          %400 = vst [vmem:[#allocation2 + $0x338] sm:$0xff] 0.0
          %401 = vst [vmem:[#allocation2 + $0x340] sm:$0xff] 0.0
          %402 = vst [vmem:[#allocation2 + $0x348] sm:$0xff] 0.0
          %403 = vst [vmem:[#allocation2 + $0x350] sm:$0xff] 0.0
          %404 = vst [vmem:[#allocation2 + $0x358] sm:$0xff] 0.0
          %405 = vst [vmem:[#allocation2 + $0x360] sm:$0xff] 0.0
          %406 = vst [vmem:[#allocation2 + $0x368] sm:$0xff] 0.0
          %407 = vst [vmem:[#allocation2 + $0x370] sm:$0xff] 0.0
          %408 = vst [vmem:[#allocation2 + $0x378] sm:$0xff] 0.0
          %409 = vst [vmem:[#allocation2 + $0x380] sm:$0xff] 0.0
          %410 = vst [vmem:[#allocation2 + $0x388] sm:$0xff] 0.0
          %411 = vst [vmem:[#allocation2 + $0x390] sm:$0xff] 0.0
          %412 = vst [vmem:[#allocation2 + $0x398] sm:$0xff] 0.0
          %413 = vst [vmem:[#allocation2 + $0x3a0] sm:$0xff] 0.0
          %414 = vst [vmem:[#allocation2 + $0x3a8] sm:$0xff] 0.0
          %415 = vst [vmem:[#allocation2 + $0x3b0] sm:$0xff] 0.0
          %416 = vst [vmem:[#allocation2 + $0x3b8] sm:$0xff] 0.0
          %417 = vst [vmem:[#allocation2 + $0x3c0] sm:$0xff] 0.0
          %418 = vst [vmem:[#allocation2 + $0x3c8] sm:$0xff] 0.0
          %419 = vst [vmem:[#allocation2 + $0x3d0] sm:$0xff] 0.0
          %420 = vst [vmem:[#allocation2 + $0x3d8] sm:$0xff] 0.0
          %421 = vst [vmem:[#allocation2 + $0x3e0] sm:$0xff] 0.0
          %422 = vst [vmem:[#allocation2 + $0x3e8] sm:$0xff] 0.0
          %423 = vst [vmem:[#allocation2 + $0x3f0] sm:$0xff] 0.0
          %424 = vst [vmem:[#allocation2 + $0x3f8] sm:$0xff] 0.0
        $region40: #{tpu_custom_call.1} parent=35 // pred_fallthru
          _
        %v425 = vld [vmem:[#allocation2] sm:$0xff]
        %v426 = vld [vmem:[#allocation2 + $0x8] sm:$0xff]
        %v427 = vld [vmem:[#allocation2 + $0x10] sm:$0xff]
        %v428 = vld [vmem:[#allocation2 + $0x18] sm:$0xff]
        %v429 = vld [vmem:[#allocation2 + $0x20] sm:$0xff]
        %v430 = vld [vmem:[#allocation2 + $0x28] sm:$0xff]
        %v431 = vld [vmem:[#allocation2 + $0x30] sm:$0xff]
        %v432 = vld [vmem:[#allocation2 + $0x38] sm:$0xff]
        %v433 = vld [vmem:[#allocation2 + $0x40] sm:$0xff]
        %v434 = vld [vmem:[#allocation2 + $0x48] sm:$0xff]
        %v435 = vld [vmem:[#allocation2 + $0x50] sm:$0xff]
        %v436 = vld [vmem:[#allocation2 + $0x58] sm:$0xff]
        %v437 = vld [vmem:[#allocation2 + $0x60] sm:$0xff]
        %v438 = vld [vmem:[#allocation2 + $0x68] sm:$0xff]
        %v439 = vld [vmem:[#allocation2 + $0x70] sm:$0xff]
        %v440 = vld [vmem:[#allocation2 + $0x78] sm:$0xff]
        %v441 = vld [vmem:[#allocation2 + $0x80] sm:$0xff]
        %v442 = vld [vmem:[#allocation2 + $0x88] sm:$0xff]
        %v443 = vld [vmem:[#allocation2 + $0x90] sm:$0xff]
        %v444 = vld [vmem:[#allocation2 + $0x98] sm:$0xff]
        %v445 = vld [vmem:[#allocation2 + $0xa0] sm:$0xff]
        %v446 = vld [vmem:[#allocation2 + $0xa8] sm:$0xff]
        %v447 = vld [vmem:[#allocation2 + $0xb0] sm:$0xff]
        %v448 = vld [vmem:[#allocation2 + $0xb8] sm:$0xff]
        %v449 = vld [vmem:[#allocation2 + $0xc0] sm:$0xff]
        %v450 = vld [vmem:[#allocation2 + $0xc8] sm:$0xff]
        %v451 = vld [vmem:[#allocation2 + $0xd0] sm:$0xff]
        %v452 = vld [vmem:[#allocation2 + $0xd8] sm:$0xff]
        %v453 = vld [vmem:[#allocation2 + $0xe0] sm:$0xff]
        %v454 = vld [vmem:[#allocation2 + $0xe8] sm:$0xff]
        %v455 = vld [vmem:[#allocation2 + $0xf0] sm:$0xff]
        %v456 = vld [vmem:[#allocation2 + $0xf8] sm:$0xff]
        %v457 = vld [vmem:[#allocation2 + $0x100] sm:$0xff]
        %v458 = vld [vmem:[#allocation2 + $0x108] sm:$0xff]
        %v459 = vld [vmem:[#allocation2 + $0x110] sm:$0xff]
        %v460 = vld [vmem:[#allocation2 + $0x118] sm:$0xff]
        %v461 = vld [vmem:[#allocation2 + $0x120] sm:$0xff]
        %v462 = vld [vmem:[#allocation2 + $0x128] sm:$0xff]
        %v463 = vld [vmem:[#allocation2 + $0x130] sm:$0xff]
        %v464 = vld [vmem:[#allocation2 + $0x138] sm:$0xff]
        %v465 = vld [vmem:[#allocation2 + $0x140] sm:$0xff]
        %v466 = vld [vmem:[#allocation2 + $0x148] sm:$0xff]
        %v467 = vld [vmem:[#allocation2 + $0x150] sm:$0xff]
        %v468 = vld [vmem:[#allocation2 + $0x158] sm:$0xff]
        %v469 = vld [vmem:[#allocation2 + $0x160] sm:$0xff]
        %v470 = vld [vmem:[#allocation2 + $0x168] sm:$0xff]
        %v471 = vld [vmem:[#allocation2 + $0x170] sm:$0xff]
        %v472 = vld [vmem:[#allocation2 + $0x178] sm:$0xff]
        %v473 = vld [vmem:[#allocation2 + $0x180] sm:$0xff]
        %v474 = vld [vmem:[#allocation2 + $0x188] sm:$0xff]
        %v475 = vld [vmem:[#allocation2 + $0x190] sm:$0xff]
        %v476 = vld [vmem:[#allocation2 + $0x198] sm:$0xff]
        %v477 = vld [vmem:[#allocation2 + $0x1a0] sm:$0xff]
        %v478 = vld [vmem:[#allocation2 + $0x1a8] sm:$0xff]
        %v479 = vld [vmem:[#allocation2 + $0x1b0] sm:$0xff]
        %v480 = vld [vmem:[#allocation2 + $0x1b8] sm:$0xff]
        %v481 = vld [vmem:[#allocation2 + $0x1c0] sm:$0xff]
        %v482 = vld [vmem:[#allocation2 + $0x1c8] sm:$0xff]
        %v483 = vld [vmem:[#allocation2 + $0x1d0] sm:$0xff]
        %v484 = vld [vmem:[#allocation2 + $0x1d8] sm:$0xff]
        %v485 = vld [vmem:[#allocation2 + $0x1e0] sm:$0xff]
        %v486 = vld [vmem:[#allocation2 + $0x1e8] sm:$0xff]
        %v487 = vld [vmem:[#allocation2 + $0x1f0] sm:$0xff]
        %v488 = vld [vmem:[#allocation2 + $0x1f8] sm:$0xff]
        %v489 = vld [vmem:[#allocation2 + $0x200] sm:$0xff]
        %v490 = vld [vmem:[#allocation2 + $0x208] sm:$0xff]
        %v491 = vld [vmem:[#allocation2 + $0x210] sm:$0xff]
        %v492 = vld [vmem:[#allocation2 + $0x218] sm:$0xff]
        %v493 = vld [vmem:[#allocation2 + $0x220] sm:$0xff]
        %v494 = vld [vmem:[#allocation2 + $0x228] sm:$0xff]
        %v495 = vld [vmem:[#allocation2 + $0x230] sm:$0xff]
        %v496 = vld [vmem:[#allocation2 + $0x238] sm:$0xff]
        %v497 = vld [vmem:[#allocation2 + $0x240] sm:$0xff]
        %v498 = vld [vmem:[#allocation2 + $0x248] sm:$0xff]
        %v499 = vld [vmem:[#allocation2 + $0x250] sm:$0xff]
        %v500 = vld [vmem:[#allocation2 + $0x258] sm:$0xff]
        %v501 = vld [vmem:[#allocation2 + $0x260] sm:$0xff]
        %v502 = vld [vmem:[#allocation2 + $0x268] sm:$0xff]
        %v503 = vld [vmem:[#allocation2 + $0x270] sm:$0xff]
        %v504 = vld [vmem:[#allocation2 + $0x278] sm:$0xff]
        %v505 = vld [vmem:[#allocation2 + $0x280] sm:$0xff]
        %v506 = vld [vmem:[#allocation2 + $0x288] sm:$0xff]
        %v507 = vld [vmem:[#allocation2 + $0x290] sm:$0xff]
        %v508 = vld [vmem:[#allocation2 + $0x298] sm:$0xff]
        %v509 = vld [vmem:[#allocation2 + $0x2a0] sm:$0xff]
        %v510 = vld [vmem:[#allocation2 + $0x2a8] sm:$0xff]
        %v511 = vld [vmem:[#allocation2 + $0x2b0] sm:$0xff]
        %v512 = vld [vmem:[#allocation2 + $0x2b8] sm:$0xff]
        %v513 = vld [vmem:[#allocation2 + $0x2c0] sm:$0xff]
        %v514 = vld [vmem:[#allocation2 + $0x2c8] sm:$0xff]
        %v515 = vld [vmem:[#allocation2 + $0x2d0] sm:$0xff]
        %v516 = vld [vmem:[#allocation2 + $0x2d8] sm:$0xff]
        %v517 = vld [vmem:[#allocation2 + $0x2e0] sm:$0xff]
        %v518 = vld [vmem:[#allocation2 + $0x2e8] sm:$0xff]
        %v519 = vld [vmem:[#allocation2 + $0x2f0] sm:$0xff]
        %v520 = vld [vmem:[#allocation2 + $0x2f8] sm:$0xff]
        %v521 = vld [vmem:[#allocation2 + $0x300] sm:$0xff]
        %v522 = vld [vmem:[#allocation2 + $0x308] sm:$0xff]
        %v523 = vld [vmem:[#allocation2 + $0x310] sm:$0xff]
        %v524 = vld [vmem:[#allocation2 + $0x318] sm:$0xff]
        %v525 = vld [vmem:[#allocation2 + $0x320] sm:$0xff]
        %v526 = vld [vmem:[#allocation2 + $0x328] sm:$0xff]
        %v527 = vld [vmem:[#allocation2 + $0x330] sm:$0xff]
        %v528 = vld [vmem:[#allocation2 + $0x338] sm:$0xff]
        %v529 = vld [vmem:[#allocation2 + $0x340] sm:$0xff]
        %v530 = vld [vmem:[#allocation2 + $0x348] sm:$0xff]
        %v531 = vld [vmem:[#allocation2 + $0x350] sm:$0xff]
        %v532 = vld [vmem:[#allocation2 + $0x358] sm:$0xff]
        %v533 = vld [vmem:[#allocation2 + $0x360] sm:$0xff]
        %v534 = vld [vmem:[#allocation2 + $0x368] sm:$0xff]
        %v535 = vld [vmem:[#allocation2 + $0x370] sm:$0xff]
        %v536 = vld [vmem:[#allocation2 + $0x378] sm:$0xff]
        %v537 = vld [vmem:[#allocation2 + $0x380] sm:$0xff]
        %v538 = vld [vmem:[#allocation2 + $0x388] sm:$0xff]
        %v539 = vld [vmem:[#allocation2 + $0x390] sm:$0xff]
        %v540 = vld [vmem:[#allocation2 + $0x398] sm:$0xff]
        %v541 = vld [vmem:[#allocation2 + $0x3a0] sm:$0xff]
        %v542 = vld [vmem:[#allocation2 + $0x3a8] sm:$0xff]
        %v543 = vld [vmem:[#allocation2 + $0x3b0] sm:$0xff]
        %v544 = vld [vmem:[#allocation2 + $0x3b8] sm:$0xff]
        %v545 = vld [vmem:[#allocation2 + $0x3c0] sm:$0xff]
        %v546 = vld [vmem:[#allocation2 + $0x3c8] sm:$0xff]
        %v547 = vld [vmem:[#allocation2 + $0x3d0] sm:$0xff]
        %v548 = vld [vmem:[#allocation2 + $0x3d8] sm:$0xff]
        %v549 = vld [vmem:[#allocation2 + $0x3e0] sm:$0xff]
        %v550 = vld [vmem:[#allocation2 + $0x3e8] sm:$0xff]
        %v551 = vld [vmem:[#allocation2 + $0x3f0] sm:$0xff]
        %v552 = vld [vmem:[#allocation2 + $0x3f8] sm:$0xff]
        %v553 = vld [vmem:[%s274] sm:$0xf]
        %v554 = vld [vmem:[%s274 + $0x4] sm:$0xf]
        %v555 = vld [vmem:[%s274 + $0x8] sm:$0xf]
        %v556 = vld [vmem:[%s274 + $0xc] sm:$0xf]
        %v557 = vld [vmem:[%s274 + $0x10] sm:$0xf]
        %v558 = vld [vmem:[%s274 + $0x14] sm:$0xf]
        %v559 = vld [vmem:[%s274 + $0x18] sm:$0xf]
        %v560 = vld [vmem:[%s274 + $0x1c] sm:$0xf]
        %v561 = vld [vmem:[%s274 + $0x20] sm:$0xf]
        %v562 = vld [vmem:[%s274 + $0x24] sm:$0xf]
        %v563 = vld [vmem:[%s274 + $0x28] sm:$0xf]
        %v564 = vld [vmem:[%s274 + $0x2c] sm:$0xf]
        %v565 = vld [vmem:[%s274 + $0x30] sm:$0xf]
        %v566 = vld [vmem:[%s274 + $0x34] sm:$0xf]
        %v567 = vld [vmem:[%s274 + $0x38] sm:$0xf]
        %v568 = vld [vmem:[%s274 + $0x3c] sm:$0xf]
        %v569 = vld [vmem:[%s274 + $0x40] sm:$0xf]
        %v570 = vld [vmem:[%s274 + $0x44] sm:$0xf]
        %v571 = vld [vmem:[%s274 + $0x48] sm:$0xf]
        %v572 = vld [vmem:[%s274 + $0x4c] sm:$0xf]
        %v573 = vld [vmem:[%s274 + $0x50] sm:$0xf]
        %v574 = vld [vmem:[%s274 + $0x54] sm:$0xf]
        %v575 = vld [vmem:[%s274 + $0x58] sm:$0xf]
        %v576 = vld [vmem:[%s274 + $0x5c] sm:$0xf]
        %v577 = vld [vmem:[%s274 + $0x60] sm:$0xf]
        %v578 = vld [vmem:[%s274 + $0x64] sm:$0xf]
        %v579 = vld [vmem:[%s274 + $0x68] sm:$0xf]
        %v580 = vld [vmem:[%s274 + $0x6c] sm:$0xf]
        %v581 = vld [vmem:[%s274 + $0x70] sm:$0xf]
        %v582 = vld [vmem:[%s274 + $0x74] sm:$0xf]
        %v583 = vld [vmem:[%s274 + $0x78] sm:$0xf]
        %v584 = vld [vmem:[%s274 + $0x7c] sm:$0xf]
        %v585 = vld [vmem:[%s274 + $0x80] sm:$0xf]
        %v586 = vld [vmem:[%s274 + $0x84] sm:$0xf]
        %v587 = vld [vmem:[%s274 + $0x88] sm:$0xf]
        %v588 = vld [vmem:[%s274 + $0x8c] sm:$0xf]
        %v589 = vld [vmem:[%s274 + $0x90] sm:$0xf]
        %v590 = vld [vmem:[%s274 + $0x94] sm:$0xf]
        %v591 = vld [vmem:[%s274 + $0x98] sm:$0xf]
        %v592 = vld [vmem:[%s274 + $0x9c] sm:$0xf]
        %v593 = vld [vmem:[%s274 + $0xa0] sm:$0xf]
        %v594 = vld [vmem:[%s274 + $0xa4] sm:$0xf]
        %v595 = vld [vmem:[%s274 + $0xa8] sm:$0xf]
        %v596 = vld [vmem:[%s274 + $0xac] sm:$0xf]
        %v597 = vld [vmem:[%s274 + $0xb0] sm:$0xf]
        %v598 = vld [vmem:[%s274 + $0xb4] sm:$0xf]
        %v599 = vld [vmem:[%s274 + $0xb8] sm:$0xf]
        %v600 = vld [vmem:[%s274 + $0xbc] sm:$0xf]
        %v601 = vld [vmem:[%s274 + $0xc0] sm:$0xf]
        %v602 = vld [vmem:[%s274 + $0xc4] sm:$0xf]
        %v603 = vld [vmem:[%s274 + $0xc8] sm:$0xf]
        %v604 = vld [vmem:[%s274 + $0xcc] sm:$0xf]
        %v605 = vld [vmem:[%s274 + $0xd0] sm:$0xf]
        %v606 = vld [vmem:[%s274 + $0xd4] sm:$0xf]
        %v607 = vld [vmem:[%s274 + $0xd8] sm:$0xf]
        %v608 = vld [vmem:[%s274 + $0xdc] sm:$0xf]
        %v609 = vld [vmem:[%s274 + $0xe0] sm:$0xf]
        %v610 = vld [vmem:[%s274 + $0xe4] sm:$0xf]
        %v611 = vld [vmem:[%s274 + $0xe8] sm:$0xf]
        %v612 = vld [vmem:[%s274 + $0xec] sm:$0xf]
        %v613 = vld [vmem:[%s274 + $0xf0] sm:$0xf]
        %v614 = vld [vmem:[%s274 + $0xf4] sm:$0xf]
        %v615 = vld [vmem:[%s274 + $0xf8] sm:$0xf]
        %v616 = vld [vmem:[%s274 + $0xfc] sm:$0xf]
        %v617 = vld [vmem:[%s274 + $0x100] sm:$0xf]
        %v618 = vld [vmem:[%s274 + $0x104] sm:$0xf]
        %v619 = vld [vmem:[%s274 + $0x108] sm:$0xf]
        %v620 = vld [vmem:[%s274 + $0x10c] sm:$0xf]
        %v621 = vld [vmem:[%s274 + $0x110] sm:$0xf]
        %v622 = vld [vmem:[%s274 + $0x114] sm:$0xf]
        %v623 = vld [vmem:[%s274 + $0x118] sm:$0xf]
        %v624 = vld [vmem:[%s274 + $0x11c] sm:$0xf]
        %v625 = vld [vmem:[%s274 + $0x120] sm:$0xf]
        %v626 = vld [vmem:[%s274 + $0x124] sm:$0xf]
        %v627 = vld [vmem:[%s274 + $0x128] sm:$0xf]
        %v628 = vld [vmem:[%s274 + $0x12c] sm:$0xf]
        %v629 = vld [vmem:[%s274 + $0x130] sm:$0xf]
        %v630 = vld [vmem:[%s274 + $0x134] sm:$0xf]
        %v631 = vld [vmem:[%s274 + $0x138] sm:$0xf]
        %v632 = vld [vmem:[%s274 + $0x13c] sm:$0xf]
        %v633 = vld [vmem:[%s274 + $0x140] sm:$0xf]
        %v634 = vld [vmem:[%s274 + $0x144] sm:$0xf]
        %v635 = vld [vmem:[%s274 + $0x148] sm:$0xf]
        %v636 = vld [vmem:[%s274 + $0x14c] sm:$0xf]
        %v637 = vld [vmem:[%s274 + $0x150] sm:$0xf]
        %v638 = vld [vmem:[%s274 + $0x154] sm:$0xf]
        %v639 = vld [vmem:[%s274 + $0x158] sm:$0xf]
        %v640 = vld [vmem:[%s274 + $0x15c] sm:$0xf]
        %v641 = vld [vmem:[%s274 + $0x160] sm:$0xf]
        %v642 = vld [vmem:[%s274 + $0x164] sm:$0xf]
        %v643 = vld [vmem:[%s274 + $0x168] sm:$0xf]
        %v644 = vld [vmem:[%s274 + $0x16c] sm:$0xf]
        %v645 = vld [vmem:[%s274 + $0x170] sm:$0xf]
        %v646 = vld [vmem:[%s274 + $0x174] sm:$0xf]
        %v647 = vld [vmem:[%s274 + $0x178] sm:$0xf]
        %v648 = vld [vmem:[%s274 + $0x17c] sm:$0xf]
        %v649 = vld [vmem:[%s274 + $0x180] sm:$0xf]
        %v650 = vld [vmem:[%s274 + $0x184] sm:$0xf]
        %v651 = vld [vmem:[%s274 + $0x188] sm:$0xf]
        %v652 = vld [vmem:[%s274 + $0x18c] sm:$0xf]
        %v653 = vld [vmem:[%s274 + $0x190] sm:$0xf]
        %v654 = vld [vmem:[%s274 + $0x194] sm:$0xf]
        %v655 = vld [vmem:[%s274 + $0x198] sm:$0xf]
        %v656 = vld [vmem:[%s274 + $0x19c] sm:$0xf]
        %v657 = vld [vmem:[%s274 + $0x1a0] sm:$0xf]
        %v658 = vld [vmem:[%s274 + $0x1a4] sm:$0xf]
        %v659 = vld [vmem:[%s274 + $0x1a8] sm:$0xf]
        %v660 = vld [vmem:[%s274 + $0x1ac] sm:$0xf]
        %v661 = vld [vmem:[%s274 + $0x1b0] sm:$0xf]
        %v662 = vld [vmem:[%s274 + $0x1b4] sm:$0xf]
        %v663 = vld [vmem:[%s274 + $0x1b8] sm:$0xf]
        %v664 = vld [vmem:[%s274 + $0x1bc] sm:$0xf]
        %v665 = vld [vmem:[%s274 + $0x1c0] sm:$0xf]
        %v666 = vld [vmem:[%s274 + $0x1c4] sm:$0xf]
        %v667 = vld [vmem:[%s274 + $0x1c8] sm:$0xf]
        %v668 = vld [vmem:[%s274 + $0x1cc] sm:$0xf]
        %v669 = vld [vmem:[%s274 + $0x1d0] sm:$0xf]
        %v670 = vld [vmem:[%s274 + $0x1d4] sm:$0xf]
        %v671 = vld [vmem:[%s274 + $0x1d8] sm:$0xf]
        %v672 = vld [vmem:[%s274 + $0x1dc] sm:$0xf]
        %v673 = vld [vmem:[%s274 + $0x1e0] sm:$0xf]
        %v674 = vld [vmem:[%s274 + $0x1e4] sm:$0xf]
        %v675 = vld [vmem:[%s274 + $0x1e8] sm:$0xf]
        %v676 = vld [vmem:[%s274 + $0x1ec] sm:$0xf]
        %v677 = vld [vmem:[%s274 + $0x1f0] sm:$0xf]
        %v678 = vld [vmem:[%s274 + $0x1f4] sm:$0xf]
        %v679 = vld [vmem:[%s274 + $0x1f8] sm:$0xf]
        %v680 = vld [vmem:[%s274 + $0x1fc] sm:$0xf]
        %v681 = vld [vmem:[%s283] sm:$0xf]
        %v682 = vld [vmem:[%s283 + $0x4] sm:$0xf]
        %v683 = vld [vmem:[%s283 + $0x8] sm:$0xf]
        %v684 = vld [vmem:[%s283 + $0xc] sm:$0x3]
        %v813 = vunpack.c.l.b16 %v553
        %v814 = vunpack.c.l.b16 %v554
        %v815 = vunpack.c.l.b16 %v555
        %v816 = vunpack.c.l.b16 %v556
        %v817 = vunpack.c.l.b16 %v557
        %v818 = vunpack.c.l.b16 %v558
        %v819 = vunpack.c.l.b16 %v559
        %v820 = vunpack.c.l.b16 %v560
        %v821 = vunpack.c.l.b16 %v561
        %v822 = vunpack.c.l.b16 %v562
        %v823 = vunpack.c.l.b16 %v563
        %v824 = vunpack.c.l.b16 %v564
        %v825 = vunpack.c.l.b16 %v565
        %v826 = vunpack.c.l.b16 %v566
        %v827 = vunpack.c.l.b16 %v567
        %v828 = vunpack.c.l.b16 %v568
        %v829 = vunpack.c.l.b16 %v569
        %v830 = vunpack.c.l.b16 %v570
        %v831 = vunpack.c.l.b16 %v571
        %v832 = vunpack.c.l.b16 %v572
        %v833 = vunpack.c.l.b16 %v573
        %v834 = vunpack.c.l.b16 %v574
        %v835 = vunpack.c.l.b16 %v575
        %v836 = vunpack.c.l.b16 %v576
        %v837 = vunpack.c.l.b16 %v577
        %v838 = vunpack.c.l.b16 %v578
        %v839 = vunpack.c.l.b16 %v579
        %v840 = vunpack.c.l.b16 %v580
        %v841 = vunpack.c.l.b16 %v581
        %v842 = vunpack.c.l.b16 %v582
        %v843 = vunpack.c.l.b16 %v583
        %v844 = vunpack.c.l.b16 %v584
        %v845 = vunpack.c.l.b16 %v585
        %v846 = vunpack.c.l.b16 %v586
        %v847 = vunpack.c.l.b16 %v587
        %v848 = vunpack.c.l.b16 %v588
        %v849 = vunpack.c.l.b16 %v589
        %v850 = vunpack.c.l.b16 %v590
        %v851 = vunpack.c.l.b16 %v591
        %v852 = vunpack.c.l.b16 %v592
        %v853 = vunpack.c.l.b16 %v593
        %v854 = vunpack.c.l.b16 %v594
        %v855 = vunpack.c.l.b16 %v595
        %v856 = vunpack.c.l.b16 %v596
        %v857 = vunpack.c.l.b16 %v597
        %v858 = vunpack.c.l.b16 %v598
        %v859 = vunpack.c.l.b16 %v599
        %v860 = vunpack.c.l.b16 %v600
        %v861 = vunpack.c.l.b16 %v601
        %v862 = vunpack.c.l.b16 %v602
        %v863 = vunpack.c.l.b16 %v603
        %v864 = vunpack.c.l.b16 %v604
        %v865 = vunpack.c.l.b16 %v605
        %v866 = vunpack.c.l.b16 %v606
        %v867 = vunpack.c.l.b16 %v607
        %v868 = vunpack.c.l.b16 %v608
        %v869 = vunpack.c.l.b16 %v609
        %v870 = vunpack.c.l.b16 %v610
        %v871 = vunpack.c.l.b16 %v611
        %v872 = vunpack.c.l.b16 %v612
        %v873 = vunpack.c.l.b16 %v613
        %v874 = vunpack.c.l.b16 %v614
        %v875 = vunpack.c.l.b16 %v615
        %v876 = vunpack.c.l.b16 %v616
        %v877 = vunpack.c.l.b16 %v617
        %v878 = vunpack.c.l.b16 %v618
        %v879 = vunpack.c.l.b16 %v619
        %v880 = vunpack.c.l.b16 %v620
        %v881 = vunpack.c.l.b16 %v621
        %v882 = vunpack.c.l.b16 %v622
        %v883 = vunpack.c.l.b16 %v623
        %v884 = vunpack.c.l.b16 %v624
        %v885 = vunpack.c.l.b16 %v625
        %v886 = vunpack.c.l.b16 %v626
        %v887 = vunpack.c.l.b16 %v627
        %v888 = vunpack.c.l.b16 %v628
        %v889 = vunpack.c.l.b16 %v629
        %v890 = vunpack.c.l.b16 %v630
        %v891 = vunpack.c.l.b16 %v631
        %v892 = vunpack.c.l.b16 %v632
        %v893 = vunpack.c.l.b16 %v633
        %v894 = vunpack.c.l.b16 %v634
        %v895 = vunpack.c.l.b16 %v635
        %v896 = vunpack.c.l.b16 %v636
        %v897 = vunpack.c.l.b16 %v637
        %v898 = vunpack.c.l.b16 %v638
        %v899 = vunpack.c.l.b16 %v639
        %v900 = vunpack.c.l.b16 %v640
        %v901 = vunpack.c.l.b16 %v641
        %v902 = vunpack.c.l.b16 %v642
        %v903 = vunpack.c.l.b16 %v643
        %v904 = vunpack.c.l.b16 %v644
        %v905 = vunpack.c.l.b16 %v645
        %v906 = vunpack.c.l.b16 %v646
        %v907 = vunpack.c.l.b16 %v647
        %v908 = vunpack.c.l.b16 %v648
        %v909 = vunpack.c.l.b16 %v649
        %v910 = vunpack.c.l.b16 %v650
        %v911 = vunpack.c.l.b16 %v651
        %v912 = vunpack.c.l.b16 %v652
        %v913 = vunpack.c.l.b16 %v653
        %v914 = vunpack.c.l.b16 %v654
        %v915 = vunpack.c.l.b16 %v655
        %v916 = vunpack.c.l.b16 %v656
        %v917 = vunpack.c.l.b16 %v657
        %v918 = vunpack.c.l.b16 %v658
        %v919 = vunpack.c.l.b16 %v659
        %v920 = vunpack.c.l.b16 %v660
        %v921 = vunpack.c.l.b16 %v661
        %v922 = vunpack.c.l.b16 %v662
        %v923 = vunpack.c.l.b16 %v663
        %v924 = vunpack.c.l.b16 %v664
        %v925 = vunpack.c.l.b16 %v665
        %v926 = vunpack.c.l.b16 %v666
        %v927 = vunpack.c.l.b16 %v667
        %v928 = vunpack.c.l.b16 %v668
        %v929 = vunpack.c.l.b16 %v669
        %v930 = vunpack.c.l.b16 %v670
        %v931 = vunpack.c.l.b16 %v671
        %v932 = vunpack.c.l.b16 %v672
        %v933 = vunpack.c.l.b16 %v673
        %v934 = vunpack.c.l.b16 %v674
        %v935 = vunpack.c.l.b16 %v675
        %v936 = vunpack.c.l.b16 %v676
        %v937 = vunpack.c.l.b16 %v677
        %v938 = vunpack.c.l.b16 %v678
        %v939 = vunpack.c.l.b16 %v679
        %v940 = vunpack.c.l.b16 %v680
        %v941 = vpack.c.b16 %v814, %v813
        %v942 = vpack.c.b16 %v816, %v815
        %v943 = vpack.c.b16 %v818, %v817
        %v944 = vpack.c.b16 %v820, %v819
        %v945 = vpack.c.b16 %v822, %v821
        %v946 = vpack.c.b16 %v824, %v823
        %v947 = vpack.c.b16 %v826, %v825
        %v948 = vpack.c.b16 %v828, %v827
        %v949 = vpack.c.b16 %v830, %v829
        %v950 = vpack.c.b16 %v832, %v831
        %v951 = vpack.c.b16 %v834, %v833
        %v952 = vpack.c.b16 %v836, %v835
        %v953 = vpack.c.b16 %v838, %v837
        %v954 = vpack.c.b16 %v840, %v839
        %v955 = vpack.c.b16 %v842, %v841
        %v956 = vpack.c.b16 %v844, %v843
        %v957 = vpack.c.b16 %v846, %v845
        %v958 = vpack.c.b16 %v848, %v847
        %v959 = vpack.c.b16 %v850, %v849
        %v960 = vpack.c.b16 %v852, %v851
        %v961 = vpack.c.b16 %v854, %v853
        %v962 = vpack.c.b16 %v856, %v855
        %v963 = vpack.c.b16 %v858, %v857
        %v964 = vpack.c.b16 %v860, %v859
        %v965 = vpack.c.b16 %v862, %v861
        %v966 = vpack.c.b16 %v864, %v863
        %v967 = vpack.c.b16 %v866, %v865
        %v968 = vpack.c.b16 %v868, %v867
        %v969 = vpack.c.b16 %v870, %v869
        %v970 = vpack.c.b16 %v872, %v871
        %v971 = vpack.c.b16 %v874, %v873
        %v972 = vpack.c.b16 %v876, %v875
        %v973 = vpack.c.b16 %v878, %v877
        %v974 = vpack.c.b16 %v880, %v879
        %v975 = vpack.c.b16 %v882, %v881
        %v976 = vpack.c.b16 %v884, %v883
        %v977 = vpack.c.b16 %v886, %v885
        %v978 = vpack.c.b16 %v888, %v887
        %v979 = vpack.c.b16 %v890, %v889
        %v980 = vpack.c.b16 %v892, %v891
        %v981 = vpack.c.b16 %v894, %v893
        %v982 = vpack.c.b16 %v896, %v895
        %v983 = vpack.c.b16 %v898, %v897
        %v984 = vpack.c.b16 %v900, %v899
        %v985 = vpack.c.b16 %v902, %v901
        %v986 = vpack.c.b16 %v904, %v903
        %v987 = vpack.c.b16 %v906, %v905
        %v988 = vpack.c.b16 %v908, %v907
        %v989 = vpack.c.b16 %v910, %v909
        %v990 = vpack.c.b16 %v912, %v911
        %v991 = vpack.c.b16 %v914, %v913
        %v992 = vpack.c.b16 %v916, %v915
        %v993 = vpack.c.b16 %v918, %v917
        %v994 = vpack.c.b16 %v920, %v919
        %v995 = vpack.c.b16 %v922, %v921
        %v996 = vpack.c.b16 %v924, %v923
        %v997 = vpack.c.b16 %v926, %v925
        %v998 = vpack.c.b16 %v928, %v927
        %v999 = vpack.c.b16 %v930, %v929
        %v1000 = vpack.c.b16 %v932, %v931
        %v1001 = vpack.c.b16 %v934, %v933
        %v1002 = vpack.c.b16 %v936, %v935
        %v1003 = vpack.c.b16 %v938, %v937
        %v1004 = vpack.c.b16 %v940, %v939
        %v1009 = vunpack.c.l.b16 %v681
        %v1010 = vunpack.c.l.b16 %v682
        %v1011 = vunpack.c.l.b16 %v683
        %v1012 = vunpack.c.l.b16 %v684
        %v1013 = vpack.c.b16 %v1010, %v1009
        %v1014 = vpack.c.b16 %v1012, %v1011
        %vm1016 = vcmask 220160
        %v1018 = vsel %vm1016, %v941, 0
        %v1021 = vsel %vm1016, %v942, 0
        %v1024 = vsel %vm1016, %v943, 0
        %v1027 = vsel %vm1016, %v944, 0
        %v1030 = vsel %vm1016, %v945, 0
        %v1033 = vsel %vm1016, %v946, 0
        %v1036 = vsel %vm1016, %v947, 0
        %v1039 = vsel %vm1016, %v948, 0
        %v1042 = vsel %vm1016, %v949, 0
        %v1045 = vsel %vm1016, %v950, 0
        %v1048 = vsel %vm1016, %v951, 0
        %v1051 = vsel %vm1016, %v952, 0
        %v1054 = vsel %vm1016, %v953, 0
        %v1057 = vsel %vm1016, %v954, 0
        %v1060 = vsel %vm1016, %v955, 0
        %v1063 = vsel %vm1016, %v956, 0
        %v1066 = vsel %vm1016, %v957, 0
        %v1069 = vsel %vm1016, %v958, 0
        %v1072 = vsel %vm1016, %v959, 0
        %v1075 = vsel %vm1016, %v960, 0
        %v1078 = vsel %vm1016, %v961, 0
        %v1081 = vsel %vm1016, %v962, 0
        %v1084 = vsel %vm1016, %v963, 0
        %v1087 = vsel %vm1016, %v964, 0
        %v1090 = vsel %vm1016, %v965, 0
        %v1093 = vsel %vm1016, %v966, 0
        %v1096 = vsel %vm1016, %v967, 0
        %v1099 = vsel %vm1016, %v968, 0
        %v1102 = vsel %vm1016, %v969, 0
        %v1105 = vsel %vm1016, %v970, 0
        %v1108 = vsel %vm1016, %v971, 0
        %v1111 = vsel %vm1016, %v972, 0
        %v1114 = vsel %vm1016, %v973, 0
        %v1117 = vsel %vm1016, %v974, 0
        %v1120 = vsel %vm1016, %v975, 0
        %v1123 = vsel %vm1016, %v976, 0
        %v1126 = vsel %vm1016, %v977, 0
        %v1129 = vsel %vm1016, %v978, 0
        %v1132 = vsel %vm1016, %v979, 0
        %v1135 = vsel %vm1016, %v980, 0
        %v1138 = vsel %vm1016, %v981, 0
        %v1141 = vsel %vm1016, %v982, 0
        %v1144 = vsel %vm1016, %v983, 0
        %v1147 = vsel %vm1016, %v984, 0
        %v1150 = vsel %vm1016, %v985, 0
        %v1153 = vsel %vm1016, %v986, 0
        %v1156 = vsel %vm1016, %v987, 0
        %v1159 = vsel %vm1016, %v988, 0
        %v1162 = vsel %vm1016, %v989, 0
        %v1165 = vsel %vm1016, %v990, 0
        %v1168 = vsel %vm1016, %v991, 0
        %v1171 = vsel %vm1016, %v992, 0
        %v1174 = vsel %vm1016, %v993, 0
        %v1177 = vsel %vm1016, %v994, 0
        %v1180 = vsel %vm1016, %v995, 0
        %v1183 = vsel %vm1016, %v996, 0
        %v1186 = vsel %vm1016, %v997, 0
        %v1189 = vsel %vm1016, %v998, 0
        %v1192 = vsel %vm1016, %v999, 0
        %v1195 = vsel %vm1016, %v1000, 0
        %v1198 = vsel %vm1016, %v1001, 0
        %v1201 = vsel %vm1016, %v1002, 0
        %v1204 = vsel %vm1016, %v1003, 0
        %v1207 = vsel %vm1016, %v1004, 0
        %vm1209 = vcmask 1044480
        %vm1210 = vcmask 1045504
        %v1211 = vsel %vm1209, 4294967295, 65535
        %v1212 = vsel %vm1210, %v1211, 0
        %v1214 = vand.u32 %v1014, %v1212
        %1216 = vmatprep.subr.bf16.mxu0 0
        %1217 = vmatpush1.bf16.msra.mxu0 %v1013
        %1218 = vmatprep.subr.bf16.mxu0 0
        %1219 = vmatpush1.bf16.msra.mxu0 %v1214
        %1220 = vmatprep.subr.bf16.mxu0 0
        %1221 = vmatpush1.bf16.msra.mxu0 0
        %1222 = vmatprep.subr.bf16.mxu0 0
        %1223 = vmatpush1.bf16.msra.mxu0 0
        %1224 = vmatprep.subr.bf16.mxu0 0
        %1225 = vmatpush1.bf16.msra.mxu0 0
        %1226 = vmatprep.subr.bf16.mxu0 0
        %1227 = vmatpush1.bf16.msra.mxu0 0
        %1228 = vmatprep.subr.bf16.mxu0 0
        %1229 = vmatpush1.bf16.msra.mxu0 0
        %1230 = vmatprep.subr.bf16.mxu0 0
        %1231 = vmatpush1.bf16.msra.mxu0 0
        %1232 = vmatprep.subr.bf16.mxu0 0
        %1233 = vmatpush1.bf16.msra.mxu0 0
        %1234 = vmatprep.subr.bf16.mxu0 0
        %1235 = vmatpush1.bf16.msra.mxu0 0
        %1236 = vmatprep.subr.bf16.mxu0 0
        %1237 = vmatpush1.bf16.msra.mxu0 0
        %1238 = vmatprep.subr.bf16.mxu0 0
        %1239 = vmatpush1.bf16.msra.mxu0 0
        %1240 = vmatprep.subr.bf16.mxu0 0
        %1241 = vmatpush1.bf16.msra.mxu0 0
        %1242 = vmatprep.subr.bf16.mxu0 0
        %1243 = vmatpush1.bf16.msra.mxu0 0
        %1244 = vmatprep.subr.bf16.mxu0 0
        %1245 = vmatpush1.bf16.msra.mxu0 0
        %1246 = vmatprep.subr.bf16.mxu0 0
        %1247 = vmatpush1.bf16.msra.mxu0 0
        %1248 = vmatprep.mubr.bf16.mxu0 0
        %1249 = vmatmul.mubr.bf16.gmra.mrb[0].mxu0 %v1018
        %v1250 = vpop.f32.mrb[0].mxu0
        %v1251 = vadd.f32 0.0, %v1250
        %v1252 = vpop.f32.mrb[0].mxu0
        %v1253 = vpop.f32.mrb[0].mxu0
        %v1254 = vadd.f32 0.0, %v1253
        %v1255 = vpop.f32.mrb[0].mxu0
        %1256 = vmatprep.mubr.bf16.mxu0 0
        %1257 = vmatmul.mubr.bf16.gmra.mrb[0].mxu0 %v1021
        %v1258 = vpop.f32.mrb[0].mxu0
        %v1259 = vadd.f32 0.0, %v1258
        %v1260 = vpop.f32.mrb[0].mxu0
        %v1261 = vpop.f32.mrb[0].mxu0
        %v1262 = vadd.f32 0.0, %v1261
        %v1263 = vpop.f32.mrb[0].mxu0
        %1264 = vmatprep.mubr.bf16.mxu0 0
        %1265 = vmatmul.mubr.bf16.gmra.mrb[0].mxu0 %v1024
        %v1266 = vpop.f32.mrb[0].mxu0
        %v1267 = vadd.f32 0.0, %v1266
        %v1268 = vpop.f32.mrb[0].mxu0
        %v1269 = vpop.f32.mrb[0].mxu0
        %v1270 = vadd.f32 0.0, %v1269
        %v1271 = vpop.f32.mrb[0].mxu0
        %1272 = vmatprep.mubr.bf16.mxu0 0
        %1273 = vmatmul.mubr.bf16.gmra.mrb[0].mxu0 %v1027
        %v1274 = vpop.f32.mrb[0].mxu0
        %v1275 = vadd.f32 0.0, %v1274
        %v1276 = vpop.f32.mrb[0].mxu0
        %v1277 = vpop.f32.mrb[0].mxu0
        %v1278 = vadd.f32 0.0, %v1277
        %v1279 = vpop.f32.mrb[0].mxu0
        %1280 = vmatprep.mubr.bf16.mxu0 0
        %1281 = vmatmul.mubr.bf16.gmra.mrb[0].mxu0 %v1030
        %v1282 = vpop.f32.mrb[0].mxu0
        %v1283 = vadd.f32 0.0, %v1282
        %v1284 = vpop.f32.mrb[0].mxu0
        %v1285 = vpop.f32.mrb[0].mxu0
        %v1286 = vadd.f32 0.0, %v1285
        %v1287 = vpop.f32.mrb[0].mxu0
        %1288 = vmatprep.mubr.bf16.mxu0 0
        %1289 = vmatmul.mubr.bf16.gmra.mrb[0].mxu0 %v1033
        %v1290 = vpop.f32.mrb[0].mxu0
        %v1291 = vadd.f32 0.0, %v1290
        %v1292 = vpop.f32.mrb[0].mxu0
        %v1293 = vpop.f32.mrb[0].mxu0
        %v1294 = vadd.f32 0.0, %v1293
        %v1295 = vpop.f32.mrb[0].mxu0
        %1296 = vmatprep.mubr.bf16.mxu0 0
        %1297 = vmatmul.mubr.bf16.gmra.mrb[0].mxu0 %v1036
        %v1298 = vpop.f32.mrb[0].mxu0
        %v1299 = vadd.f32 0.0, %v1298
        %v1300 = vpop.f32.mrb[0].mxu0
        %v1301 = vpop.f32.mrb[0].mxu0
        %v1302 = vadd.f32 0.0, %v1301
        %v1303 = vpop.f32.mrb[0].mxu0
        %1304 = vmatprep.mubr.bf16.mxu0 0
        %1305 = vmatmul.mubr.bf16.gmra.mrb[0].mxu0 %v1039
        %v1306 = vpop.f32.mrb[0].mxu0
        %v1307 = vadd.f32 0.0, %v1306
        %v1308 = vpop.f32.mrb[0].mxu0
        %v1309 = vpop.f32.mrb[0].mxu0
        %v1310 = vadd.f32 0.0, %v1309
        %v1311 = vpop.f32.mrb[0].mxu0
        %1312 = vmatprep.mubr.bf16.mxu0 0
        %1313 = vmatmul.mubr.bf16.gmra.mrb[0].mxu0 %v1042
        %v1314 = vpop.f32.mrb[0].mxu0
        %v1315 = vadd.f32 0.0, %v1314
        %v1316 = vpop.f32.mrb[0].mxu0
        %v1317 = vpop.f32.mrb[0].mxu0
        %v1318 = vadd.f32 0.0, %v1317
        %v1319 = vpop.f32.mrb[0].mxu0
        %1320 = vmatprep.mubr.bf16.mxu0 0
        %1321 = vmatmul.mubr.bf16.gmra.mrb[0].mxu0 %v1045
        %v1322 = vpop.f32.mrb[0].mxu0
        %v1323 = vadd.f32 0.0, %v1322
        %v1324 = vpop.f32.mrb[0].mxu0
        %v1325 = vpop.f32.mrb[0].mxu0
        %v1326 = vadd.f32 0.0, %v1325
        %v1327 = vpop.f32.mrb[0].mxu0
        %1328 = vmatprep.mubr.bf16.mxu0 0
        %1329 = vmatmul.mubr.bf16.gmra.mrb[0].mxu0 %v1048
        %v1330 = vpop.f32.mrb[0].mxu0
        %v1331 = vadd.f32 0.0, %v1330
        %v1332 = vpop.f32.mrb[0].mxu0
        %v1333 = vpop.f32.mrb[0].mxu0
        %v1334 = vadd.f32 0.0, %v1333
        %v1335 = vpop.f32.mrb[0].mxu0
        %1336 = vmatprep.mubr.bf16.mxu0 0
        %1337 = vmatmul.mubr.bf16.gmra.mrb[0].mxu0 %v1051
        %v1338 = vpop.f32.mrb[0].mxu0
        %v1339 = vadd.f32 0.0, %v1338
        %v1340 = vpop.f32.mrb[0].mxu0
        %v1341 = vpop.f32.mrb[0].mxu0
        %v1342 = vadd.f32 0.0, %v1341
        %v1343 = vpop.f32.mrb[0].mxu0
        %1344 = vmatprep.mubr.bf16.mxu0 0
        %1345 = vmatmul.mubr.bf16.gmra.mrb[0].mxu0 %v1054
        %v1346 = vpop.f32.mrb[0].mxu0
        %v1347 = vadd.f32 0.0, %v1346
        %v1348 = vpop.f32.mrb[0].mxu0
        %v1349 = vpop.f32.mrb[0].mxu0
        %v1350 = vadd.f32 0.0, %v1349
        %v1351 = vpop.f32.mrb[0].mxu0
        %1352 = vmatprep.mubr.bf16.mxu0 0
        %1353 = vmatmul.mubr.bf16.gmra.mrb[0].mxu0 %v1057
        %v1354 = vpop.f32.mrb[0].mxu0
        %v1355 = vadd.f32 0.0, %v1354
        %v1356 = vpop.f32.mrb[0].mxu0
        %v1357 = vpop.f32.mrb[0].mxu0
        %v1358 = vadd.f32 0.0, %v1357
        %v1359 = vpop.f32.mrb[0].mxu0
        %1360 = vmatprep.mubr.bf16.mxu0 0
        %1361 = vmatmul.mubr.bf16.gmra.mrb[0].mxu0 %v1060
        %v1362 = vpop.f32.mrb[0].mxu0
        %v1363 = vadd.f32 0.0, %v1362
        %v1364 = vpop.f32.mrb[0].mxu0
        %v1365 = vpop.f32.mrb[0].mxu0
        %v1366 = vadd.f32 0.0, %v1365
        %v1367 = vpop.f32.mrb[0].mxu0
        %1368 = vmatprep.mubr.bf16.mxu0 0
        %1369 = vmatmul.mubr.bf16.gmra.mrb[0].mxu0 %v1063
        %v1370 = vpop.f32.mrb[0].mxu0
        %v1371 = vadd.f32 0.0, %v1370
        %v1372 = vpop.f32.mrb[0].mxu0
        %v1373 = vpop.f32.mrb[0].mxu0
        %v1374 = vadd.f32 0.0, %v1373
        %v1375 = vpop.f32.mrb[0].mxu0
        %1376 = vmatprep.mubr.bf16.mxu0 0
        %1377 = vmatmul.mubr.bf16.gmra.mrb[0].mxu0 %v1066
        %v1378 = vpop.f32.mrb[0].mxu0
        %v1379 = vadd.f32 0.0, %v1378
        %v1380 = vpop.f32.mrb[0].mxu0
        %v1381 = vpop.f32.mrb[0].mxu0
        %v1382 = vadd.f32 0.0, %v1381
        %v1383 = vpop.f32.mrb[0].mxu0
        %1384 = vmatprep.mubr.bf16.mxu0 0
        %1385 = vmatmul.mubr.bf16.gmra.mrb[0].mxu0 %v1069
        %v1386 = vpop.f32.mrb[0].mxu0
        %v1387 = vadd.f32 0.0, %v1386
        %v1388 = vpop.f32.mrb[0].mxu0
        %v1389 = vpop.f32.mrb[0].mxu0
        %v1390 = vadd.f32 0.0, %v1389
        %v1391 = vpop.f32.mrb[0].mxu0
        %1392 = vmatprep.mubr.bf16.mxu0 0
        %1393 = vmatmul.mubr.bf16.gmra.mrb[0].mxu0 %v1072
        %v1394 = vpop.f32.mrb[0].mxu0
        %v1395 = vadd.f32 0.0, %v1394
        %v1396 = vpop.f32.mrb[0].mxu0
        %v1397 = vpop.f32.mrb[0].mxu0
        %v1398 = vadd.f32 0.0, %v1397
        %v1399 = vpop.f32.mrb[0].mxu0
        %1400 = vmatprep.mubr.bf16.mxu0 0
        %1401 = vmatmul.mubr.bf16.gmra.mrb[0].mxu0 %v1075
        %v1402 = vpop.f32.mrb[0].mxu0
        %v1403 = vadd.f32 0.0, %v1402
        %v1404 = vpop.f32.mrb[0].mxu0
        %v1405 = vpop.f32.mrb[0].mxu0
        %v1406 = vadd.f32 0.0, %v1405
        %v1407 = vpop.f32.mrb[0].mxu0
        %1408 = vmatprep.mubr.bf16.mxu0 0
        %1409 = vmatmul.mubr.bf16.gmra.mrb[0].mxu0 %v1078
        %v1410 = vpop.f32.mrb[0].mxu0
        %v1411 = vadd.f32 0.0, %v1410
        %v1412 = vpop.f32.mrb[0].mxu0
        %v1413 = vpop.f32.mrb[0].mxu0
        %v1414 = vadd.f32 0.0, %v1413
        %v1415 = vpop.f32.mrb[0].mxu0
        %1416 = vmatprep.mubr.bf16.mxu0 0
        %1417 = vmatmul.mubr.bf16.gmra.mrb[0].mxu0 %v1081
        %v1418 = vpop.f32.mrb[0].mxu0
        %v1419 = vadd.f32 0.0, %v1418
        %v1420 = vpop.f32.mrb[0].mxu0
        %v1421 = vpop.f32.mrb[0].mxu0
        %v1422 = vadd.f32 0.0, %v1421
        %v1423 = vpop.f32.mrb[0].mxu0
        %1424 = vmatprep.mubr.bf16.mxu0 0
        %1425 = vmatmul.mubr.bf16.gmra.mrb[0].mxu0 %v1084
        %v1426 = vpop.f32.mrb[0].mxu0
        %v1427 = vadd.f32 0.0, %v1426
        %v1428 = vpop.f32.mrb[0].mxu0
        %v1429 = vpop.f32.mrb[0].mxu0
        %v1430 = vadd.f32 0.0, %v1429
        %v1431 = vpop.f32.mrb[0].mxu0
        %1432 = vmatprep.mubr.bf16.mxu0 0
        %1433 = vmatmul.mubr.bf16.gmra.mrb[0].mxu0 %v1087
        %v1434 = vpop.f32.mrb[0].mxu0
        %v1435 = vadd.f32 0.0, %v1434
        %v1436 = vpop.f32.mrb[0].mxu0
        %v1437 = vpop.f32.mrb[0].mxu0
        %v1438 = vadd.f32 0.0, %v1437
        %v1439 = vpop.f32.mrb[0].mxu0
        %1440 = vmatprep.mubr.bf16.mxu0 0
        %1441 = vmatmul.mubr.bf16.gmra.mrb[0].mxu0 %v1090
        %v1442 = vpop.f32.mrb[0].mxu0
        %v1443 = vadd.f32 0.0, %v1442
        %v1444 = vpop.f32.mrb[0].mxu0
        %v1445 = vpop.f32.mrb[0].mxu0
        %v1446 = vadd.f32 0.0, %v1445
        %v1447 = vpop.f32.mrb[0].mxu0
        %1448 = vmatprep.mubr.bf16.mxu0 0
        %1449 = vmatmul.mubr.bf16.gmra.mrb[0].mxu0 %v1093
        %v1450 = vpop.f32.mrb[0].mxu0
        %v1451 = vadd.f32 0.0, %v1450
        %v1452 = vpop.f32.mrb[0].mxu0
        %v1453 = vpop.f32.mrb[0].mxu0
        %v1454 = vadd.f32 0.0, %v1453
        %v1455 = vpop.f32.mrb[0].mxu0
        %1456 = vmatprep.mubr.bf16.mxu0 0
        %1457 = vmatmul.mubr.bf16.gmra.mrb[0].mxu0 %v1096
        %v1458 = vpop.f32.mrb[0].mxu0
        %v1459 = vadd.f32 0.0, %v1458
        %v1460 = vpop.f32.mrb[0].mxu0
        %v1461 = vpop.f32.mrb[0].mxu0
        %v1462 = vadd.f32 0.0, %v1461
        %v1463 = vpop.f32.mrb[0].mxu0
        %1464 = vmatprep.mubr.bf16.mxu0 0
        %1465 = vmatmul.mubr.bf16.gmra.mrb[0].mxu0 %v1099
        %v1466 = vpop.f32.mrb[0].mxu0
        %v1467 = vadd.f32 0.0, %v1466
        %v1468 = vpop.f32.mrb[0].mxu0
        %v1469 = vpop.f32.mrb[0].mxu0
        %v1470 = vadd.f32 0.0, %v1469
        %v1471 = vpop.f32.mrb[0].mxu0
        %1472 = vmatprep.mubr.bf16.mxu0 0
        %1473 = vmatmul.mubr.bf16.gmra.mrb[0].mxu0 %v1102
        %v1474 = vpop.f32.mrb[0].mxu0
        %v1475 = vadd.f32 0.0, %v1474
        %v1476 = vpop.f32.mrb[0].mxu0
        %v1477 = vpop.f32.mrb[0].mxu0
        %v1478 = vadd.f32 0.0, %v1477
        %v1479 = vpop.f32.mrb[0].mxu0
        %1480 = vmatprep.mubr.bf16.mxu0 0
        %1481 = vmatmul.mubr.bf16.gmra.mrb[0].mxu0 %v1105
        %v1482 = vpop.f32.mrb[0].mxu0
        %v1483 = vadd.f32 0.0, %v1482
        %v1484 = vpop.f32.mrb[0].mxu0
        %v1485 = vpop.f32.mrb[0].mxu0
        %v1486 = vadd.f32 0.0, %v1485
        %v1487 = vpop.f32.mrb[0].mxu0
        %1488 = vmatprep.mubr.bf16.mxu0 0
        %1489 = vmatmul.mubr.bf16.gmra.mrb[0].mxu0 %v1108
        %v1490 = vpop.f32.mrb[0].mxu0
        %v1491 = vadd.f32 0.0, %v1490
        %v1492 = vpop.f32.mrb[0].mxu0
        %v1493 = vpop.f32.mrb[0].mxu0
        %v1494 = vadd.f32 0.0, %v1493
        %v1495 = vpop.f32.mrb[0].mxu0
        %1496 = vmatprep.mubr.bf16.mxu0 0
        %1497 = vmatmul.mubr.bf16.gmra.mrb[0].mxu0 %v1111
        %v1498 = vpop.f32.mrb[0].mxu0
        %v1499 = vadd.f32 0.0, %v1498
        %v1500 = vpop.f32.mrb[0].mxu0
        %v1501 = vpop.f32.mrb[0].mxu0
        %v1502 = vadd.f32 0.0, %v1501
        %v1503 = vpop.f32.mrb[0].mxu0
        %1504 = vmatprep.mubr.bf16.mxu0 0
        %1505 = vmatmul.mubr.bf16.gmra.mrb[0].mxu0 %v1114
        %v1506 = vpop.f32.mrb[0].mxu0
        %v1507 = vadd.f32 0.0, %v1506
        %v1508 = vpop.f32.mrb[0].mxu0
        %v1509 = vpop.f32.mrb[0].mxu0
        %v1510 = vadd.f32 0.0, %v1509
        %v1511 = vpop.f32.mrb[0].mxu0
        %1512 = vmatprep.mubr.bf16.mxu0 0
        %1513 = vmatmul.mubr.bf16.gmra.mrb[0].mxu0 %v1117
        %v1514 = vpop.f32.mrb[0].mxu0
        %v1515 = vadd.f32 0.0, %v1514
        %v1516 = vpop.f32.mrb[0].mxu0
        %v1517 = vpop.f32.mrb[0].mxu0
        %v1518 = vadd.f32 0.0, %v1517
        %v1519 = vpop.f32.mrb[0].mxu0
        %1520 = vmatprep.mubr.bf16.mxu0 0
        %1521 = vmatmul.mubr.bf16.gmra.mrb[0].mxu0 %v1120
        %v1522 = vpop.f32.mrb[0].mxu0
        %v1523 = vadd.f32 0.0, %v1522
        %v1524 = vpop.f32.mrb[0].mxu0
        %v1525 = vpop.f32.mrb[0].mxu0
        %v1526 = vadd.f32 0.0, %v1525
        %v1527 = vpop.f32.mrb[0].mxu0
        %1528 = vmatprep.mubr.bf16.mxu0 0
        %1529 = vmatmul.mubr.bf16.gmra.mrb[0].mxu0 %v1123
        %v1530 = vpop.f32.mrb[0].mxu0
        %v1531 = vadd.f32 0.0, %v1530
        %v1532 = vpop.f32.mrb[0].mxu0
        %v1533 = vpop.f32.mrb[0].mxu0
        %v1534 = vadd.f32 0.0, %v1533
        %v1535 = vpop.f32.mrb[0].mxu0
        %1536 = vmatprep.mubr.bf16.mxu0 0
        %1537 = vmatmul.mubr.bf16.gmra.mrb[0].mxu0 %v1126
        %v1538 = vpop.f32.mrb[0].mxu0
        %v1539 = vadd.f32 0.0, %v1538
        %v1540 = vpop.f32.mrb[0].mxu0
        %v1541 = vpop.f32.mrb[0].mxu0
        %v1542 = vadd.f32 0.0, %v1541
        %v1543 = vpop.f32.mrb[0].mxu0
        %1544 = vmatprep.mubr.bf16.mxu0 0
        %1545 = vmatmul.mubr.bf16.gmra.mrb[0].mxu0 %v1129
        %v1546 = vpop.f32.mrb[0].mxu0
        %v1547 = vadd.f32 0.0, %v1546
        %v1548 = vpop.f32.mrb[0].mxu0
        %v1549 = vpop.f32.mrb[0].mxu0
        %v1550 = vadd.f32 0.0, %v1549
        %v1551 = vpop.f32.mrb[0].mxu0
        %1552 = vmatprep.mubr.bf16.mxu0 0
        %1553 = vmatmul.mubr.bf16.gmra.mrb[0].mxu0 %v1132
        %v1554 = vpop.f32.mrb[0].mxu0
        %v1555 = vadd.f32 0.0, %v1554
        %v1556 = vpop.f32.mrb[0].mxu0
        %v1557 = vpop.f32.mrb[0].mxu0
        %v1558 = vadd.f32 0.0, %v1557
        %v1559 = vpop.f32.mrb[0].mxu0
        %1560 = vmatprep.mubr.bf16.mxu0 0
        %1561 = vmatmul.mubr.bf16.gmra.mrb[0].mxu0 %v1135
        %v1562 = vpop.f32.mrb[0].mxu0
        %v1563 = vadd.f32 0.0, %v1562
        %v1564 = vpop.f32.mrb[0].mxu0
        %v1565 = vpop.f32.mrb[0].mxu0
        %v1566 = vadd.f32 0.0, %v1565
        %v1567 = vpop.f32.mrb[0].mxu0
        %1568 = vmatprep.mubr.bf16.mxu0 0
        %1569 = vmatmul.mubr.bf16.gmra.mrb[0].mxu0 %v1138
        %v1570 = vpop.f32.mrb[0].mxu0
        %v1571 = vadd.f32 0.0, %v1570
        %v1572 = vpop.f32.mrb[0].mxu0
        %v1573 = vpop.f32.mrb[0].mxu0
        %v1574 = vadd.f32 0.0, %v1573
        %v1575 = vpop.f32.mrb[0].mxu0
        %1576 = vmatprep.mubr.bf16.mxu0 0
        %1577 = vmatmul.mubr.bf16.gmra.mrb[0].mxu0 %v1141
        %v1578 = vpop.f32.mrb[0].mxu0
        %v1579 = vadd.f32 0.0, %v1578
        %v1580 = vpop.f32.mrb[0].mxu0
        %v1581 = vpop.f32.mrb[0].mxu0
        %v1582 = vadd.f32 0.0, %v1581
        %v1583 = vpop.f32.mrb[0].mxu0
        %1584 = vmatprep.mubr.bf16.mxu0 0
        %1585 = vmatmul.mubr.bf16.gmra.mrb[0].mxu0 %v1144
        %v1586 = vpop.f32.mrb[0].mxu0
        %v1587 = vadd.f32 0.0, %v1586
        %v1588 = vpop.f32.mrb[0].mxu0
        %v1589 = vpop.f32.mrb[0].mxu0
        %v1590 = vadd.f32 0.0, %v1589
        %v1591 = vpop.f32.mrb[0].mxu0
        %1592 = vmatprep.mubr.bf16.mxu0 0
        %1593 = vmatmul.mubr.bf16.gmra.mrb[0].mxu0 %v1147
        %v1594 = vpop.f32.mrb[0].mxu0
        %v1595 = vadd.f32 0.0, %v1594
        %v1596 = vpop.f32.mrb[0].mxu0
        %v1597 = vpop.f32.mrb[0].mxu0
        %v1598 = vadd.f32 0.0, %v1597
        %v1599 = vpop.f32.mrb[0].mxu0
        %1600 = vmatprep.mubr.bf16.mxu0 0
        %1601 = vmatmul.mubr.bf16.gmra.mrb[0].mxu0 %v1150
        %v1602 = vpop.f32.mrb[0].mxu0
        %v1603 = vadd.f32 0.0, %v1602
        %v1604 = vpop.f32.mrb[0].mxu0
        %v1605 = vpop.f32.mrb[0].mxu0
        %v1606 = vadd.f32 0.0, %v1605
        %v1607 = vpop.f32.mrb[0].mxu0
        %1608 = vmatprep.mubr.bf16.mxu0 0
        %1609 = vmatmul.mubr.bf16.gmra.mrb[0].mxu0 %v1153
        %v1610 = vpop.f32.mrb[0].mxu0
        %v1611 = vadd.f32 0.0, %v1610
        %v1612 = vpop.f32.mrb[0].mxu0
        %v1613 = vpop.f32.mrb[0].mxu0
        %v1614 = vadd.f32 0.0, %v1613
        %v1615 = vpop.f32.mrb[0].mxu0
        %1616 = vmatprep.mubr.bf16.mxu0 0
        %1617 = vmatmul.mubr.bf16.gmra.mrb[0].mxu0 %v1156
        %v1618 = vpop.f32.mrb[0].mxu0
        %v1619 = vadd.f32 0.0, %v1618
        %v1620 = vpop.f32.mrb[0].mxu0
        %v1621 = vpop.f32.mrb[0].mxu0
        %v1622 = vadd.f32 0.0, %v1621
        %v1623 = vpop.f32.mrb[0].mxu0
        %1624 = vmatprep.mubr.bf16.mxu0 0
        %1625 = vmatmul.mubr.bf16.gmra.mrb[0].mxu0 %v1159
        %v1626 = vpop.f32.mrb[0].mxu0
        %v1627 = vadd.f32 0.0, %v1626
        %v1628 = vpop.f32.mrb[0].mxu0
        %v1629 = vpop.f32.mrb[0].mxu0
        %v1630 = vadd.f32 0.0, %v1629
        %v1631 = vpop.f32.mrb[0].mxu0
        %1632 = vmatprep.mubr.bf16.mxu0 0
        %1633 = vmatmul.mubr.bf16.gmra.mrb[0].mxu0 %v1162
        %v1634 = vpop.f32.mrb[0].mxu0
        %v1635 = vadd.f32 0.0, %v1634
        %v1636 = vpop.f32.mrb[0].mxu0
        %v1637 = vpop.f32.mrb[0].mxu0
        %v1638 = vadd.f32 0.0, %v1637
        %v1639 = vpop.f32.mrb[0].mxu0
        %1640 = vmatprep.mubr.bf16.mxu0 0
        %1641 = vmatmul.mubr.bf16.gmra.mrb[0].mxu0 %v1165
        %v1642 = vpop.f32.mrb[0].mxu0
        %v1643 = vadd.f32 0.0, %v1642
        %v1644 = vpop.f32.mrb[0].mxu0
        %v1645 = vpop.f32.mrb[0].mxu0
        %v1646 = vadd.f32 0.0, %v1645
        %v1647 = vpop.f32.mrb[0].mxu0
        %1648 = vmatprep.mubr.bf16.mxu0 0
        %1649 = vmatmul.mubr.bf16.gmra.mrb[0].mxu0 %v1168
        %v1650 = vpop.f32.mrb[0].mxu0
        %v1651 = vadd.f32 0.0, %v1650
        %v1652 = vpop.f32.mrb[0].mxu0
        %v1653 = vpop.f32.mrb[0].mxu0
        %v1654 = vadd.f32 0.0, %v1653
        %v1655 = vpop.f32.mrb[0].mxu0
        %1656 = vmatprep.mubr.bf16.mxu0 0
        %1657 = vmatmul.mubr.bf16.gmra.mrb[0].mxu0 %v1171
        %v1658 = vpop.f32.mrb[0].mxu0
        %v1659 = vadd.f32 0.0, %v1658
        %v1660 = vpop.f32.mrb[0].mxu0
        %v1661 = vpop.f32.mrb[0].mxu0
        %v1662 = vadd.f32 0.0, %v1661
        %v1663 = vpop.f32.mrb[0].mxu0
        %1664 = vmatprep.mubr.bf16.mxu0 0
        %1665 = vmatmul.mubr.bf16.gmra.mrb[0].mxu0 %v1174
        %v1666 = vpop.f32.mrb[0].mxu0
        %v1667 = vadd.f32 0.0, %v1666
        %v1668 = vpop.f32.mrb[0].mxu0
        %v1669 = vpop.f32.mrb[0].mxu0
        %v1670 = vadd.f32 0.0, %v1669
        %v1671 = vpop.f32.mrb[0].mxu0
        %1672 = vmatprep.mubr.bf16.mxu0 0
        %1673 = vmatmul.mubr.bf16.gmra.mrb[0].mxu0 %v1177
        %v1674 = vpop.f32.mrb[0].mxu0
        %v1675 = vadd.f32 0.0, %v1674
        %v1676 = vpop.f32.mrb[0].mxu0
        %v1677 = vpop.f32.mrb[0].mxu0
        %v1678 = vadd.f32 0.0, %v1677
        %v1679 = vpop.f32.mrb[0].mxu0
        %1680 = vmatprep.mubr.bf16.mxu0 0
        %1681 = vmatmul.mubr.bf16.gmra.mrb[0].mxu0 %v1180
        %v1682 = vpop.f32.mrb[0].mxu0
        %v1683 = vadd.f32 0.0, %v1682
        %v1684 = vpop.f32.mrb[0].mxu0
        %v1685 = vpop.f32.mrb[0].mxu0
        %v1686 = vadd.f32 0.0, %v1685
        %v1687 = vpop.f32.mrb[0].mxu0
        %1688 = vmatprep.mubr.bf16.mxu0 0
        %1689 = vmatmul.mubr.bf16.gmra.mrb[0].mxu0 %v1183
        %v1690 = vpop.f32.mrb[0].mxu0
        %v1691 = vadd.f32 0.0, %v1690
        %v1692 = vpop.f32.mrb[0].mxu0
        %v1693 = vpop.f32.mrb[0].mxu0
        %v1694 = vadd.f32 0.0, %v1693
        %v1695 = vpop.f32.mrb[0].mxu0
        %1696 = vmatprep.mubr.bf16.mxu0 0
        %1697 = vmatmul.mubr.bf16.gmra.mrb[0].mxu0 %v1186
        %v1698 = vpop.f32.mrb[0].mxu0
        %v1699 = vadd.f32 0.0, %v1698
        %v1700 = vpop.f32.mrb[0].mxu0
        %v1701 = vpop.f32.mrb[0].mxu0
        %v1702 = vadd.f32 0.0, %v1701
        %v1703 = vpop.f32.mrb[0].mxu0
        %1704 = vmatprep.mubr.bf16.mxu0 0
        %1705 = vmatmul.mubr.bf16.gmra.mrb[0].mxu0 %v1189
        %v1706 = vpop.f32.mrb[0].mxu0
        %v1707 = vadd.f32 0.0, %v1706
        %v1708 = vpop.f32.mrb[0].mxu0
        %v1709 = vpop.f32.mrb[0].mxu0
        %v1710 = vadd.f32 0.0, %v1709
        %v1711 = vpop.f32.mrb[0].mxu0
        %1712 = vmatprep.mubr.bf16.mxu0 0
        %1713 = vmatmul.mubr.bf16.gmra.mrb[0].mxu0 %v1192
        %v1714 = vpop.f32.mrb[0].mxu0
        %v1715 = vadd.f32 0.0, %v1714
        %v1716 = vpop.f32.mrb[0].mxu0
        %v1717 = vpop.f32.mrb[0].mxu0
        %v1718 = vadd.f32 0.0, %v1717
        %v1719 = vpop.f32.mrb[0].mxu0
        %1720 = vmatprep.mubr.bf16.mxu0 0
        %1721 = vmatmul.mubr.bf16.gmra.mrb[0].mxu0 %v1195
        %v1722 = vpop.f32.mrb[0].mxu0
        %v1723 = vadd.f32 0.0, %v1722
        %v1724 = vpop.f32.mrb[0].mxu0
        %v1725 = vpop.f32.mrb[0].mxu0
        %v1726 = vadd.f32 0.0, %v1725
        %v1727 = vpop.f32.mrb[0].mxu0
        %1728 = vmatprep.mubr.bf16.mxu0 0
        %1729 = vmatmul.mubr.bf16.gmra.mrb[0].mxu0 %v1198
        %v1730 = vpop.f32.mrb[0].mxu0
        %v1731 = vadd.f32 0.0, %v1730
        %v1732 = vpop.f32.mrb[0].mxu0
        %v1733 = vpop.f32.mrb[0].mxu0
        %v1734 = vadd.f32 0.0, %v1733
        %v1735 = vpop.f32.mrb[0].mxu0
        %1736 = vmatprep.mubr.bf16.mxu0 0
        %1737 = vmatmul.mubr.bf16.gmra.mrb[0].mxu0 %v1201
        %v1738 = vpop.f32.mrb[0].mxu0
        %v1739 = vadd.f32 0.0, %v1738
        %v1740 = vpop.f32.mrb[0].mxu0
        %v1741 = vpop.f32.mrb[0].mxu0
        %v1742 = vadd.f32 0.0, %v1741
        %v1743 = vpop.f32.mrb[0].mxu0
        %1744 = vmatprep.mubr.bf16.mxu0 0
        %1745 = vmatmul.mubr.bf16.gmra.mrb[0].mxu0 %v1204
        %v1746 = vpop.f32.mrb[0].mxu0
        %v1747 = vadd.f32 0.0, %v1746
        %v1748 = vpop.f32.mrb[0].mxu0
        %v1749 = vpop.f32.mrb[0].mxu0
        %v1750 = vadd.f32 0.0, %v1749
        %v1751 = vpop.f32.mrb[0].mxu0
        %1752 = vmatprep.mubr.bf16.mxu0 0
        %1753 = vmatmul.mubr.bf16.gmra.mrb[0].mxu0 %v1207
        %v1754 = vpop.f32.mrb[0].mxu0
        %v1755 = vadd.f32 0.0, %v1754
        %v1756 = vpop.f32.mrb[0].mxu0
        %v1757 = vpop.f32.mrb[0].mxu0
        %v1758 = vadd.f32 0.0, %v1757
        %v1759 = vpop.f32.mrb[0].mxu0
        %1760 = vdwg.mxu0
        %v1761 = vadd.f32 %v425, %v1251
        %v1762 = vadd.f32 %v426, %v1254
        %v1763 = vadd.f32 %v427, %v1259
        %v1764 = vadd.f32 %v428, %v1262
        %v1765 = vadd.f32 %v429, %v1267
        %v1766 = vadd.f32 %v430, %v1270
        %v1767 = vadd.f32 %v431, %v1275
        %v1768 = vadd.f32 %v432, %v1278
        %v1769 = vadd.f32 %v433, %v1283
        %v1770 = vadd.f32 %v434, %v1286
        %v1771 = vadd.f32 %v435, %v1291
        %v1772 = vadd.f32 %v436, %v1294
        %v1773 = vadd.f32 %v437, %v1299
        %v1774 = vadd.f32 %v438, %v1302
        %v1775 = vadd.f32 %v439, %v1307
        %v1776 = vadd.f32 %v440, %v1310
        %v1777 = vadd.f32 %v441, %v1315
        %v1778 = vadd.f32 %v442, %v1318
        %v1779 = vadd.f32 %v443, %v1323
        %v1780 = vadd.f32 %v444, %v1326
        %v1781 = vadd.f32 %v445, %v1331
        %v1782 = vadd.f32 %v446, %v1334
        %v1783 = vadd.f32 %v447, %v1339
        %v1784 = vadd.f32 %v448, %v1342
        %v1785 = vadd.f32 %v449, %v1347
        %v1786 = vadd.f32 %v450, %v1350
        %v1787 = vadd.f32 %v451, %v1355
        %v1788 = vadd.f32 %v452, %v1358
        %v1789 = vadd.f32 %v453, %v1363
        %v1790 = vadd.f32 %v454, %v1366
        %v1791 = vadd.f32 %v455, %v1371
        %v1792 = vadd.f32 %v456, %v1374
        %v1793 = vadd.f32 %v457, %v1379
        %v1794 = vadd.f32 %v458, %v1382
        %v1795 = vadd.f32 %v459, %v1387
        %v1796 = vadd.f32 %v460, %v1390
        %v1797 = vadd.f32 %v461, %v1395
        %v1798 = vadd.f32 %v462, %v1398
        %v1799 = vadd.f32 %v463, %v1403
        %v1800 = vadd.f32 %v464, %v1406
        %v1801 = vadd.f32 %v465, %v1411
        %v1802 = vadd.f32 %v466, %v1414
        %v1803 = vadd.f32 %v467, %v1419
        %v1804 = vadd.f32 %v468, %v1422
        %v1805 = vadd.f32 %v469, %v1427
        %v1806 = vadd.f32 %v470, %v1430
        %v1807 = vadd.f32 %v471, %v1435
        %v1808 = vadd.f32 %v472, %v1438
        %v1809 = vadd.f32 %v473, %v1443
        %v1810 = vadd.f32 %v474, %v1446
        %v1811 = vadd.f32 %v475, %v1451
        %v1812 = vadd.f32 %v476, %v1454
        %v1813 = vadd.f32 %v477, %v1459
        %v1814 = vadd.f32 %v478, %v1462
        %v1815 = vadd.f32 %v479, %v1467
        %v1816 = vadd.f32 %v480, %v1470
        %v1817 = vadd.f32 %v481, %v1475
        %v1818 = vadd.f32 %v482, %v1478
        %v1819 = vadd.f32 %v483, %v1483
        %v1820 = vadd.f32 %v484, %v1486
        %v1821 = vadd.f32 %v485, %v1491
        %v1822 = vadd.f32 %v486, %v1494
        %v1823 = vadd.f32 %v487, %v1499
        %v1824 = vadd.f32 %v488, %v1502
        %v1825 = vadd.f32 %v489, %v1507
        %v1826 = vadd.f32 %v490, %v1510
        %v1827 = vadd.f32 %v491, %v1515
        %v1828 = vadd.f32 %v492, %v1518
        %v1829 = vadd.f32 %v493, %v1523
        %v1830 = vadd.f32 %v494, %v1526
        %v1831 = vadd.f32 %v495, %v1531
        %v1832 = vadd.f32 %v496, %v1534
        %v1833 = vadd.f32 %v497, %v1539
        %v1834 = vadd.f32 %v498, %v1542
        %v1835 = vadd.f32 %v499, %v1547
        %v1836 = vadd.f32 %v500, %v1550
        %v1837 = vadd.f32 %v501, %v1555
        %v1838 = vadd.f32 %v502, %v1558
        %v1839 = vadd.f32 %v503, %v1563
        %v1840 = vadd.f32 %v504, %v1566
        %v1841 = vadd.f32 %v505, %v1571
        %v1842 = vadd.f32 %v506, %v1574
        %v1843 = vadd.f32 %v507, %v1579
        %v1844 = vadd.f32 %v508, %v1582
        %v1845 = vadd.f32 %v509, %v1587
        %v1846 = vadd.f32 %v510, %v1590
        %v1847 = vadd.f32 %v511, %v1595
        %v1848 = vadd.f32 %v512, %v1598
        %v1849 = vadd.f32 %v513, %v1603
        %v1850 = vadd.f32 %v514, %v1606
        %v1851 = vadd.f32 %v515, %v1611
        %v1852 = vadd.f32 %v516, %v1614
        %v1853 = vadd.f32 %v517, %v1619
        %v1854 = vadd.f32 %v518, %v1622
        %v1855 = vadd.f32 %v519, %v1627
        %v1856 = vadd.f32 %v520, %v1630
        %v1857 = vadd.f32 %v521, %v1635
        %v1858 = vadd.f32 %v522, %v1638
        %v1859 = vadd.f32 %v523, %v1643
        %v1860 = vadd.f32 %v524, %v1646
        %v1861 = vadd.f32 %v525, %v1651
        %v1862 = vadd.f32 %v526, %v1654
        %v1863 = vadd.f32 %v527, %v1659
        %v1864 = vadd.f32 %v528, %v1662
        %v1865 = vadd.f32 %v529, %v1667
        %v1866 = vadd.f32 %v530, %v1670
        %v1867 = vadd.f32 %v531, %v1675
        %v1868 = vadd.f32 %v532, %v1678
        %v1869 = vadd.f32 %v533, %v1683
        %v1870 = vadd.f32 %v534, %v1686
        %v1871 = vadd.f32 %v535, %v1691
        %v1872 = vadd.f32 %v536, %v1694
        %v1873 = vadd.f32 %v537, %v1699
        %v1874 = vadd.f32 %v538, %v1702
        %v1875 = vadd.f32 %v539, %v1707
        %v1876 = vadd.f32 %v540, %v1710
        %v1877 = vadd.f32 %v541, %v1715
        %v1878 = vadd.f32 %v542, %v1718
        %v1879 = vadd.f32 %v543, %v1723
        %v1880 = vadd.f32 %v544, %v1726
        %v1881 = vadd.f32 %v545, %v1731
        %v1882 = vadd.f32 %v546, %v1734
        %v1883 = vadd.f32 %v547, %v1739
        %v1884 = vadd.f32 %v548, %v1742
        %v1885 = vadd.f32 %v549, %v1747
        %v1886 = vadd.f32 %v550, %v1750
        %v1887 = vadd.f32 %v551, %v1755
        %v1888 = vadd.f32 %v552, %v1758
        %1889 = vst [vmem:[#allocation2] sm:$0xff] %v1761
        %1890 = vst [vmem:[#allocation2 + $0x8] sm:$0xff] %v1762
        %1891 = vst [vmem:[#allocation2 + $0x10] sm:$0xff] %v1763
        %1892 = vst [vmem:[#allocation2 + $0x18] sm:$0xff] %v1764
        %1893 = vst [vmem:[#allocation2 + $0x20] sm:$0xff] %v1765
        %1894 = vst [vmem:[#allocation2 + $0x28] sm:$0xff] %v1766
        %1895 = vst [vmem:[#allocation2 + $0x30] sm:$0xff] %v1767
        %1896 = vst [vmem:[#allocation2 + $0x38] sm:$0xff] %v1768
        %1897 = vst [vmem:[#allocation2 + $0x40] sm:$0xff] %v1769
        %1898 = vst [vmem:[#allocation2 + $0x48] sm:$0xff] %v1770
        %1899 = vst [vmem:[#allocation2 + $0x50] sm:$0xff] %v1771
        %1900 = vst [vmem:[#allocation2 + $0x58] sm:$0xff] %v1772
        %1901 = vst [vmem:[#allocation2 + $0x60] sm:$0xff] %v1773
        %1902 = vst [vmem:[#allocation2 + $0x68] sm:$0xff] %v1774
        %1903 = vst [vmem:[#allocation2 + $0x70] sm:$0xff] %v1775
        %1904 = vst [vmem:[#allocation2 + $0x78] sm:$0xff] %v1776
        %1905 = vst [vmem:[#allocation2 + $0x80] sm:$0xff] %v1777
        %1906 = vst [vmem:[#allocation2 + $0x88] sm:$0xff] %v1778
        %1907 = vst [vmem:[#allocation2 + $0x90] sm:$0xff] %v1779
        %1908 = vst [vmem:[#allocation2 + $0x98] sm:$0xff] %v1780
        %1909 = vst [vmem:[#allocation2 + $0xa0] sm:$0xff] %v1781
        %1910 = vst [vmem:[#allocation2 + $0xa8] sm:$0xff] %v1782
        %1911 = vst [vmem:[#allocation2 + $0xb0] sm:$0xff] %v1783
        %1912 = vst [vmem:[#allocation2 + $0xb8] sm:$0xff] %v1784
        %1913 = vst [vmem:[#allocation2 + $0xc0] sm:$0xff] %v1785
        %1914 = vst [vmem:[#allocation2 + $0xc8] sm:$0xff] %v1786
        %1915 = vst [vmem:[#allocation2 + $0xd0] sm:$0xff] %v1787
        %1916 = vst [vmem:[#allocation2 + $0xd8] sm:$0xff] %v1788
        %1917 = vst [vmem:[#allocation2 + $0xe0] sm:$0xff] %v1789
        %1918 = vst [vmem:[#allocation2 + $0xe8] sm:$0xff] %v1790
        %1919 = vst [vmem:[#allocation2 + $0xf0] sm:$0xff] %v1791
        %1920 = vst [vmem:[#allocation2 + $0xf8] sm:$0xff] %v1792
        %1921 = vst [vmem:[#allocation2 + $0x100] sm:$0xff] %v1793
        %1922 = vst [vmem:[#allocation2 + $0x108] sm:$0xff] %v1794
        %1923 = vst [vmem:[#allocation2 + $0x110] sm:$0xff] %v1795
        %1924 = vst [vmem:[#allocation2 + $0x118] sm:$0xff] %v1796
        %1925 = vst [vmem:[#allocation2 + $0x120] sm:$0xff] %v1797
        %1926 = vst [vmem:[#allocation2 + $0x128] sm:$0xff] %v1798
        %1927 = vst [vmem:[#allocation2 + $0x130] sm:$0xff] %v1799
        %1928 = vst [vmem:[#allocation2 + $0x138] sm:$0xff] %v1800
        %1929 = vst [vmem:[#allocation2 + $0x140] sm:$0xff] %v1801
        %1930 = vst [vmem:[#allocation2 + $0x148] sm:$0xff] %v1802
        %1931 = vst [vmem:[#allocation2 + $0x150] sm:$0xff] %v1803
        %1932 = vst [vmem:[#allocation2 + $0x158] sm:$0xff] %v1804
        %1933 = vst [vmem:[#allocation2 + $0x160] sm:$0xff] %v1805
        %1934 = vst [vmem:[#allocation2 + $0x168] sm:$0xff] %v1806
        %1935 = vst [vmem:[#allocation2 + $0x170] sm:$0xff] %v1807
        %1936 = vst [vmem:[#allocation2 + $0x178] sm:$0xff] %v1808
        %1937 = vst [vmem:[#allocation2 + $0x180] sm:$0xff] %v1809
        %1938 = vst [vmem:[#allocation2 + $0x188] sm:$0xff] %v1810
        %1939 = vst [vmem:[#allocation2 + $0x190] sm:$0xff] %v1811
        %1940 = vst [vmem:[#allocation2 + $0x198] sm:$0xff] %v1812
        %1941 = vst [vmem:[#allocation2 + $0x1a0] sm:$0xff] %v1813
        %1942 = vst [vmem:[#allocation2 + $0x1a8] sm:$0xff] %v1814
        %1943 = vst [vmem:[#allocation2 + $0x1b0] sm:$0xff] %v1815
        %1944 = vst [vmem:[#allocation2 + $0x1b8] sm:$0xff] %v1816
        %1945 = vst [vmem:[#allocation2 + $0x1c0] sm:$0xff] %v1817
        %1946 = vst [vmem:[#allocation2 + $0x1c8] sm:$0xff] %v1818
        %1947 = vst [vmem:[#allocation2 + $0x1d0] sm:$0xff] %v1819
        %1948 = vst [vmem:[#allocation2 + $0x1d8] sm:$0xff] %v1820
        %1949 = vst [vmem:[#allocation2 + $0x1e0] sm:$0xff] %v1821
        %1950 = vst [vmem:[#allocation2 + $0x1e8] sm:$0xff] %v1822
        %1951 = vst [vmem:[#allocation2 + $0x1f0] sm:$0xff] %v1823
        %1952 = vst [vmem:[#allocation2 + $0x1f8] sm:$0xff] %v1824
        %1953 = vst [vmem:[#allocation2 + $0x200] sm:$0xff] %v1825
        %1954 = vst [vmem:[#allocation2 + $0x208] sm:$0xff] %v1826
        %1955 = vst [vmem:[#allocation2 + $0x210] sm:$0xff] %v1827
        %1956 = vst [vmem:[#allocation2 + $0x218] sm:$0xff] %v1828
        %1957 = vst [vmem:[#allocation2 + $0x220] sm:$0xff] %v1829
        %1958 = vst [vmem:[#allocation2 + $0x228] sm:$0xff] %v1830
        %1959 = vst [vmem:[#allocation2 + $0x230] sm:$0xff] %v1831
        %1960 = vst [vmem:[#allocation2 + $0x238] sm:$0xff] %v1832
        %1961 = vst [vmem:[#allocation2 + $0x240] sm:$0xff] %v1833
        %1962 = vst [vmem:[#allocation2 + $0x248] sm:$0xff] %v1834
        %1963 = vst [vmem:[#allocation2 + $0x250] sm:$0xff] %v1835
        %1964 = vst [vmem:[#allocation2 + $0x258] sm:$0xff] %v1836
        %1965 = vst [vmem:[#allocation2 + $0x260] sm:$0xff] %v1837
        %1966 = vst [vmem:[#allocation2 + $0x268] sm:$0xff] %v1838
        %1967 = vst [vmem:[#allocation2 + $0x270] sm:$0xff] %v1839
        %1968 = vst [vmem:[#allocation2 + $0x278] sm:$0xff] %v1840
        %1969 = vst [vmem:[#allocation2 + $0x280] sm:$0xff] %v1841
        %1970 = vst [vmem:[#allocation2 + $0x288] sm:$0xff] %v1842
        %1971 = vst [vmem:[#allocation2 + $0x290] sm:$0xff] %v1843
        %1972 = vst [vmem:[#allocation2 + $0x298] sm:$0xff] %v1844
        %1973 = vst [vmem:[#allocation2 + $0x2a0] sm:$0xff] %v1845
        %1974 = vst [vmem:[#allocation2 + $0x2a8] sm:$0xff] %v1846
        %1975 = vst [vmem:[#allocation2 + $0x2b0] sm:$0xff] %v1847
        %1976 = vst [vmem:[#allocation2 + $0x2b8] sm:$0xff] %v1848
        %1977 = vst [vmem:[#allocation2 + $0x2c0] sm:$0xff] %v1849
        %1978 = vst [vmem:[#allocation2 + $0x2c8] sm:$0xff] %v1850
        %1979 = vst [vmem:[#allocation2 + $0x2d0] sm:$0xff] %v1851
        %1980 = vst [vmem:[#allocation2 + $0x2d8] sm:$0xff] %v1852
        %1981 = vst [vmem:[#allocation2 + $0x2e0] sm:$0xff] %v1853
        %1982 = vst [vmem:[#allocation2 + $0x2e8] sm:$0xff] %v1854
        %1983 = vst [vmem:[#allocation2 + $0x2f0] sm:$0xff] %v1855
        %1984 = vst [vmem:[#allocation2 + $0x2f8] sm:$0xff] %v1856
        %1985 = vst [vmem:[#allocation2 + $0x300] sm:$0xff] %v1857
        %1986 = vst [vmem:[#allocation2 + $0x308] sm:$0xff] %v1858
        %1987 = vst [vmem:[#allocation2 + $0x310] sm:$0xff] %v1859
        %1988 = vst [vmem:[#allocation2 + $0x318] sm:$0xff] %v1860
        %1989 = vst [vmem:[#allocation2 + $0x320] sm:$0xff] %v1861
        %1990 = vst [vmem:[#allocation2 + $0x328] sm:$0xff] %v1862
        %1991 = vst [vmem:[#allocation2 + $0x330] sm:$0xff] %v1863
        %1992 = vst [vmem:[#allocation2 + $0x338] sm:$0xff] %v1864
        %1993 = vst [vmem:[#allocation2 + $0x340] sm:$0xff] %v1865
        %1994 = vst [vmem:[#allocation2 + $0x348] sm:$0xff] %v1866
        %1995 = vst [vmem:[#allocation2 + $0x350] sm:$0xff] %v1867
        %1996 = vst [vmem:[#allocation2 + $0x358] sm:$0xff] %v1868
        %1997 = vst [vmem:[#allocation2 + $0x360] sm:$0xff] %v1869
        %1998 = vst [vmem:[#allocation2 + $0x368] sm:$0xff] %v1870
        %1999 = vst [vmem:[#allocation2 + $0x370] sm:$0xff] %v1871
        %2000 = vst [vmem:[#allocation2 + $0x378] sm:$0xff] %v1872
        %2001 = vst [vmem:[#allocation2 + $0x380] sm:$0xff] %v1873
        %2002 = vst [vmem:[#allocation2 + $0x388] sm:$0xff] %v1874
        %2003 = vst [vmem:[#allocation2 + $0x390] sm:$0xff] %v1875
        %2004 = vst [vmem:[#allocation2 + $0x398] sm:$0xff] %v1876
        %2005 = vst [vmem:[#allocation2 + $0x3a0] sm:$0xff] %v1877
        %2006 = vst [vmem:[#allocation2 + $0x3a8] sm:$0xff] %v1878
        %2007 = vst [vmem:[#allocation2 + $0x3b0] sm:$0xff] %v1879
        %2008 = vst [vmem:[#allocation2 + $0x3b8] sm:$0xff] %v1880
        %2009 = vst [vmem:[#allocation2 + $0x3c0] sm:$0xff] %v1881
        %2010 = vst [vmem:[#allocation2 + $0x3c8] sm:$0xff] %v1882
        %2011 = vst [vmem:[#allocation2 + $0x3d0] sm:$0xff] %v1883
        %2012 = vst [vmem:[#allocation2 + $0x3d8] sm:$0xff] %v1884
        %2013 = vst [vmem:[#allocation2 + $0x3e0] sm:$0xff] %v1885
        %2014 = vst [vmem:[#allocation2 + $0x3e8] sm:$0xff] %v1886
        %2015 = vst [vmem:[#allocation2 + $0x3f0] sm:$0xff] %v1887
        %2016 = vst [vmem:[#allocation2 + $0x3f8] sm:$0xff] %v1888
        // Predicated region
        $region41: #{tpu_custom_call.1} parent=35 // pred_check
          %p2017 = pneg %p293
        $region42: #{tpu_custom_call.1} parent=35 // pred_check_branch
          %2019 = sbr.rel (%p2017) target = $region44
        $region43: #{tpu_custom_call.1} parent=35 // pred_region
          %v2020 = vld [vmem:[#allocation2] sm:$0xff]
          %v2021 = vld [vmem:[#allocation2 + $0x8] sm:$0xff]
          %v2022 = vld [vmem:[#allocation2 + $0x10] sm:$0xff]
          %v2023 = vld [vmem:[#allocation2 + $0x18] sm:$0xff]
          %v2024 = vld [vmem:[#allocation2 + $0x20] sm:$0xff]
          %v2025 = vld [vmem:[#allocation2 + $0x28] sm:$0xff]
          %v2026 = vld [vmem:[#allocation2 + $0x30] sm:$0xff]
          %v2027 = vld [vmem:[#allocation2 + $0x38] sm:$0xff]
          %v2028 = vld [vmem:[#allocation2 + $0x40] sm:$0xff]
          %v2029 = vld [vmem:[#allocation2 + $0x48] sm:$0xff]
          %v2030 = vld [vmem:[#allocation2 + $0x50] sm:$0xff]
          %v2031 = vld [vmem:[#allocation2 + $0x58] sm:$0xff]
          %v2032 = vld [vmem:[#allocation2 + $0x60] sm:$0xff]
          %v2033 = vld [vmem:[#allocation2 + $0x68] sm:$0xff]
          %v2034 = vld [vmem:[#allocation2 + $0x70] sm:$0xff]
          %v2035 = vld [vmem:[#allocation2 + $0x78] sm:$0xff]
          %v2036 = vld [vmem:[#allocation2 + $0x80] sm:$0xff]
          %v2037 = vld [vmem:[#allocation2 + $0x88] sm:$0xff]
          %v2038 = vld [vmem:[#allocation2 + $0x90] sm:$0xff]
          %v2039 = vld [vmem:[#allocation2 + $0x98] sm:$0xff]
          %v2040 = vld [vmem:[#allocation2 + $0xa0] sm:$0xff]
          %v2041 = vld [vmem:[#allocation2 + $0xa8] sm:$0xff]
          %v2042 = vld [vmem:[#allocation2 + $0xb0] sm:$0xff]
          %v2043 = vld [vmem:[#allocation2 + $0xb8] sm:$0xff]
          %v2044 = vld [vmem:[#allocation2 + $0xc0] sm:$0xff]
          %v2045 = vld [vmem:[#allocation2 + $0xc8] sm:$0xff]
          %v2046 = vld [vmem:[#allocation2 + $0xd0] sm:$0xff]
          %v2047 = vld [vmem:[#allocation2 + $0xd8] sm:$0xff]
          %v2048 = vld [vmem:[#allocation2 + $0xe0] sm:$0xff]
          %v2049 = vld [vmem:[#allocation2 + $0xe8] sm:$0xff]
          %v2050 = vld [vmem:[#allocation2 + $0xf0] sm:$0xff]
          %v2051 = vld [vmem:[#allocation2 + $0xf8] sm:$0xff]
          %v2052 = vld [vmem:[#allocation2 + $0x100] sm:$0xff]
          %v2053 = vld [vmem:[#allocation2 + $0x108] sm:$0xff]
          %v2054 = vld [vmem:[#allocation2 + $0x110] sm:$0xff]
          %v2055 = vld [vmem:[#allocation2 + $0x118] sm:$0xff]
          %v2056 = vld [vmem:[#allocation2 + $0x120] sm:$0xff]
          %v2057 = vld [vmem:[#allocation2 + $0x128] sm:$0xff]
          %v2058 = vld [vmem:[#allocation2 + $0x130] sm:$0xff]
          %v2059 = vld [vmem:[#allocation2 + $0x138] sm:$0xff]
          %v2060 = vld [vmem:[#allocation2 + $0x140] sm:$0xff]
          %v2061 = vld [vmem:[#allocation2 + $0x148] sm:$0xff]
          %v2062 = vld [vmem:[#allocation2 + $0x150] sm:$0xff]
          %v2063 = vld [vmem:[#allocation2 + $0x158] sm:$0xff]
          %v2064 = vld [vmem:[#allocation2 + $0x160] sm:$0xff]
          %v2065 = vld [vmem:[#allocation2 + $0x168] sm:$0xff]
          %v2066 = vld [vmem:[#allocation2 + $0x170] sm:$0xff]
          %v2067 = vld [vmem:[#allocation2 + $0x178] sm:$0xff]
          %v2068 = vld [vmem:[#allocation2 + $0x180] sm:$0xff]
          %v2069 = vld [vmem:[#allocation2 + $0x188] sm:$0xff]
          %v2070 = vld [vmem:[#allocation2 + $0x190] sm:$0xff]
          %v2071 = vld [vmem:[#allocation2 + $0x198] sm:$0xff]
          %v2072 = vld [vmem:[#allocation2 + $0x1a0] sm:$0xff]
          %v2073 = vld [vmem:[#allocation2 + $0x1a8] sm:$0xff]
          %v2074 = vld [vmem:[#allocation2 + $0x1b0] sm:$0xff]
          %v2075 = vld [vmem:[#allocation2 + $0x1b8] sm:$0xff]
          %v2076 = vld [vmem:[#allocation2 + $0x1c0] sm:$0xff]
          %v2077 = vld [vmem:[#allocation2 + $0x1c8] sm:$0xff]
          %v2078 = vld [vmem:[#allocation2 + $0x1d0] sm:$0xff]
          %v2079 = vld [vmem:[#allocation2 + $0x1d8] sm:$0xff]
          %v2080 = vld [vmem:[#allocation2 + $0x1e0] sm:$0xff]
          %v2081 = vld [vmem:[#allocation2 + $0x1e8] sm:$0xff]
          %v2082 = vld [vmem:[#allocation2 + $0x1f0] sm:$0xff]
          %v2083 = vld [vmem:[#allocation2 + $0x1f8] sm:$0xff]
          %v2084 = vld [vmem:[#allocation2 + $0x200] sm:$0xff]
          %v2085 = vld [vmem:[#allocation2 + $0x208] sm:$0xff]
          %v2086 = vld [vmem:[#allocation2 + $0x210] sm:$0xff]
          %v2087 = vld [vmem:[#allocation2 + $0x218] sm:$0xff]
          %v2088 = vld [vmem:[#allocation2 + $0x220] sm:$0xff]
          %v2089 = vld [vmem:[#allocation2 + $0x228] sm:$0xff]
          %v2090 = vld [vmem:[#allocation2 + $0x230] sm:$0xff]
          %v2091 = vld [vmem:[#allocation2 + $0x238] sm:$0xff]
          %v2092 = vld [vmem:[#allocation2 + $0x240] sm:$0xff]
          %v2093 = vld [vmem:[#allocation2 + $0x248] sm:$0xff]
          %v2094 = vld [vmem:[#allocation2 + $0x250] sm:$0xff]
          %v2095 = vld [vmem:[#allocation2 + $0x258] sm:$0xff]
          %v2096 = vld [vmem:[#allocation2 + $0x260] sm:$0xff]
          %v2097 = vld [vmem:[#allocation2 + $0x268] sm:$0xff]
          %v2098 = vld [vmem:[#allocation2 + $0x270] sm:$0xff]
          %v2099 = vld [vmem:[#allocation2 + $0x278] sm:$0xff]
          %v2100 = vld [vmem:[#allocation2 + $0x280] sm:$0xff]
          %v2101 = vld [vmem:[#allocation2 + $0x288] sm:$0xff]
          %v2102 = vld [vmem:[#allocation2 + $0x290] sm:$0xff]
          %v2103 = vld [vmem:[#allocation2 + $0x298] sm:$0xff]
          %v2104 = vld [vmem:[#allocation2 + $0x2a0] sm:$0xff]
          %v2105 = vld [vmem:[#allocation2 + $0x2a8] sm:$0xff]
          %v2106 = vld [vmem:[#allocation2 + $0x2b0] sm:$0xff]
          %v2107 = vld [vmem:[#allocation2 + $0x2b8] sm:$0xff]
          %v2108 = vld [vmem:[#allocation2 + $0x2c0] sm:$0xff]
          %v2109 = vld [vmem:[#allocation2 + $0x2c8] sm:$0xff]
          %v2110 = vld [vmem:[#allocation2 + $0x2d0] sm:$0xff]
          %v2111 = vld [vmem:[#allocation2 + $0x2d8] sm:$0xff]
          %v2112 = vld [vmem:[#allocation2 + $0x2e0] sm:$0xff]
          %v2113 = vld [vmem:[#allocation2 + $0x2e8] sm:$0xff]
          %v2114 = vld [vmem:[#allocation2 + $0x2f0] sm:$0xff]
          %v2115 = vld [vmem:[#allocation2 + $0x2f8] sm:$0xff]
          %v2116 = vld [vmem:[#allocation2 + $0x300] sm:$0xff]
          %v2117 = vld [vmem:[#allocation2 + $0x308] sm:$0xff]
          %v2118 = vld [vmem:[#allocation2 + $0x310] sm:$0xff]
          %v2119 = vld [vmem:[#allocation2 + $0x318] sm:$0xff]
          %v2120 = vld [vmem:[#allocation2 + $0x320] sm:$0xff]
          %v2121 = vld [vmem:[#allocation2 + $0x328] sm:$0xff]
          %v2122 = vld [vmem:[#allocation2 + $0x330] sm:$0xff]
          %v2123 = vld [vmem:[#allocation2 + $0x338] sm:$0xff]
          %v2124 = vld [vmem:[#allocation2 + $0x340] sm:$0xff]
          %v2125 = vld [vmem:[#allocation2 + $0x348] sm:$0xff]
          %v2126 = vld [vmem:[#allocation2 + $0x350] sm:$0xff]
          %v2127 = vld [vmem:[#allocation2 + $0x358] sm:$0xff]
          %v2128 = vld [vmem:[#allocation2 + $0x360] sm:$0xff]
          %v2129 = vld [vmem:[#allocation2 + $0x368] sm:$0xff]
          %v2130 = vld [vmem:[#allocation2 + $0x370] sm:$0xff]
          %v2131 = vld [vmem:[#allocation2 + $0x378] sm:$0xff]
          %v2132 = vld [vmem:[#allocation2 + $0x380] sm:$0xff]
          %v2133 = vld [vmem:[#allocation2 + $0x388] sm:$0xff]
          %v2134 = vld [vmem:[#allocation2 + $0x390] sm:$0xff]
          %v2135 = vld [vmem:[#allocation2 + $0x398] sm:$0xff]
          %v2136 = vld [vmem:[#allocation2 + $0x3a0] sm:$0xff]
          %v2137 = vld [vmem:[#allocation2 + $0x3a8] sm:$0xff]
          %v2138 = vld [vmem:[#allocation2 + $0x3b0] sm:$0xff]
          %v2139 = vld [vmem:[#allocation2 + $0x3b8] sm:$0xff]
          %v2140 = vld [vmem:[#allocation2 + $0x3c0] sm:$0xff]
          %v2141 = vld [vmem:[#allocation2 + $0x3c8] sm:$0xff]
          %v2142 = vld [vmem:[#allocation2 + $0x3d0] sm:$0xff]
          %v2143 = vld [vmem:[#allocation2 + $0x3d8] sm:$0xff]
          %v2144 = vld [vmem:[#allocation2 + $0x3e0] sm:$0xff]
          %v2145 = vld [vmem:[#allocation2 + $0x3e8] sm:$0xff]
          %v2146 = vld [vmem:[#allocation2 + $0x3f0] sm:$0xff]
          %v2147 = vld [vmem:[#allocation2 + $0x3f8] sm:$0xff]
          %v2148 = vld [vmem:[%s287] sm:$0x1]
          %v2150 = vlaneseq
          %v2151 = vshrl.u32 %v2150, 7
          %v2152 = vsub.s32 0, %v2151
          %v2153 = vrot.slane %v2148, %v2152
          %v2155 = vmul.f32 %v2020, %v2153
          %v2156 = vmul.f32 %v2021, %v2153
          %v2157 = vmul.f32 %v2022, %v2153
          %v2158 = vmul.f32 %v2023, %v2153
          %v2159 = vmul.f32 %v2024, %v2153
          %v2160 = vmul.f32 %v2025, %v2153
          %v2161 = vmul.f32 %v2026, %v2153
          %v2162 = vmul.f32 %v2027, %v2153
          %v2163 = vmul.f32 %v2028, %v2153
          %v2164 = vmul.f32 %v2029, %v2153
          %v2165 = vmul.f32 %v2030, %v2153
          %v2166 = vmul.f32 %v2031, %v2153
          %v2167 = vmul.f32 %v2032, %v2153
          %v2168 = vmul.f32 %v2033, %v2153
          %v2169 = vmul.f32 %v2034, %v2153
          %v2170 = vmul.f32 %v2035, %v2153
          %v2171 = vmul.f32 %v2036, %v2153
          %v2172 = vmul.f32 %v2037, %v2153
          %v2173 = vmul.f32 %v2038, %v2153
          %v2174 = vmul.f32 %v2039, %v2153
          %v2175 = vmul.f32 %v2040, %v2153
          %v2176 = vmul.f32 %v2041, %v2153
          %v2177 = vmul.f32 %v2042, %v2153
          %v2178 = vmul.f32 %v2043, %v2153
          %v2179 = vmul.f32 %v2044, %v2153
          %v2180 = vmul.f32 %v2045, %v2153
          %v2181 = vmul.f32 %v2046, %v2153
          %v2182 = vmul.f32 %v2047, %v2153
          %v2183 = vmul.f32 %v2048, %v2153
          %v2184 = vmul.f32 %v2049, %v2153
          %v2185 = vmul.f32 %v2050, %v2153
          %v2186 = vmul.f32 %v2051, %v2153
          %v2187 = vmul.f32 %v2052, %v2153
          %v2188 = vmul.f32 %v2053, %v2153
          %v2189 = vmul.f32 %v2054, %v2153
          %v2190 = vmul.f32 %v2055, %v2153
          %v2191 = vmul.f32 %v2056, %v2153
          %v2192 = vmul.f32 %v2057, %v2153
          %v2193 = vmul.f32 %v2058, %v2153
          %v2194 = vmul.f32 %v2059, %v2153
          %v2195 = vmul.f32 %v2060, %v2153
          %v2196 = vmul.f32 %v2061, %v2153
          %v2197 = vmul.f32 %v2062, %v2153
          %v2198 = vmul.f32 %v2063, %v2153
          %v2199 = vmul.f32 %v2064, %v2153
          %v2200 = vmul.f32 %v2065, %v2153
          %v2201 = vmul.f32 %v2066, %v2153
          %v2202 = vmul.f32 %v2067, %v2153
          %v2203 = vmul.f32 %v2068, %v2153
          %v2204 = vmul.f32 %v2069, %v2153
          %v2205 = vmul.f32 %v2070, %v2153
          %v2206 = vmul.f32 %v2071, %v2153
          %v2207 = vmul.f32 %v2072, %v2153
          %v2208 = vmul.f32 %v2073, %v2153
          %v2209 = vmul.f32 %v2074, %v2153
          %v2210 = vmul.f32 %v2075, %v2153
          %v2211 = vmul.f32 %v2076, %v2153
          %v2212 = vmul.f32 %v2077, %v2153
          %v2213 = vmul.f32 %v2078, %v2153
          %v2214 = vmul.f32 %v2079, %v2153
          %v2215 = vmul.f32 %v2080, %v2153
          %v2216 = vmul.f32 %v2081, %v2153
          %v2217 = vmul.f32 %v2082, %v2153
          %v2218 = vmul.f32 %v2083, %v2153
          %v2219 = vmul.f32 %v2084, %v2153
          %v2220 = vmul.f32 %v2085, %v2153
          %v2221 = vmul.f32 %v2086, %v2153
          %v2222 = vmul.f32 %v2087, %v2153
          %v2223 = vmul.f32 %v2088, %v2153
          %v2224 = vmul.f32 %v2089, %v2153
          %v2225 = vmul.f32 %v2090, %v2153
          %v2226 = vmul.f32 %v2091, %v2153
          %v2227 = vmul.f32 %v2092, %v2153
          %v2228 = vmul.f32 %v2093, %v2153
          %v2229 = vmul.f32 %v2094, %v2153
          %v2230 = vmul.f32 %v2095, %v2153
          %v2231 = vmul.f32 %v2096, %v2153
          %v2232 = vmul.f32 %v2097, %v2153
          %v2233 = vmul.f32 %v2098, %v2153
          %v2234 = vmul.f32 %v2099, %v2153
          %v2235 = vmul.f32 %v2100, %v2153
          %v2236 = vmul.f32 %v2101, %v2153
          %v2237 = vmul.f32 %v2102, %v2153
          %v2238 = vmul.f32 %v2103, %v2153
          %v2239 = vmul.f32 %v2104, %v2153
          %v2240 = vmul.f32 %v2105, %v2153
          %v2241 = vmul.f32 %v2106, %v2153
          %v2242 = vmul.f32 %v2107, %v2153
          %v2243 = vmul.f32 %v2108, %v2153
          %v2244 = vmul.f32 %v2109, %v2153
          %v2245 = vmul.f32 %v2110, %v2153
          %v2246 = vmul.f32 %v2111, %v2153
          %v2247 = vmul.f32 %v2112, %v2153
          %v2248 = vmul.f32 %v2113, %v2153
          %v2249 = vmul.f32 %v2114, %v2153
          %v2250 = vmul.f32 %v2115, %v2153
          %v2251 = vmul.f32 %v2116, %v2153
          %v2252 = vmul.f32 %v2117, %v2153
          %v2253 = vmul.f32 %v2118, %v2153
          %v2254 = vmul.f32 %v2119, %v2153
          %v2255 = vmul.f32 %v2120, %v2153
          %v2256 = vmul.f32 %v2121, %v2153
          %v2257 = vmul.f32 %v2122, %v2153
          %v2258 = vmul.f32 %v2123, %v2153
          %v2259 = vmul.f32 %v2124, %v2153
          %v2260 = vmul.f32 %v2125, %v2153
          %v2261 = vmul.f32 %v2126, %v2153
          %v2262 = vmul.f32 %v2127, %v2153
          %v2263 = vmul.f32 %v2128, %v2153
          %v2264 = vmul.f32 %v2129, %v2153
          %v2265 = vmul.f32 %v2130, %v2153
          %v2266 = vmul.f32 %v2131, %v2153
          %v2267 = vmul.f32 %v2132, %v2153
          %v2268 = vmul.f32 %v2133, %v2153
          %v2269 = vmul.f32 %v2134, %v2153
          %v2270 = vmul.f32 %v2135, %v2153
          %v2271 = vmul.f32 %v2136, %v2153
          %v2272 = vmul.f32 %v2137, %v2153
          %v2273 = vmul.f32 %v2138, %v2153
          %v2274 = vmul.f32 %v2139, %v2153
          %v2275 = vmul.f32 %v2140, %v2153
          %v2276 = vmul.f32 %v2141, %v2153
          %v2277 = vmul.f32 %v2142, %v2153
          %v2278 = vmul.f32 %v2143, %v2153
          %v2279 = vmul.f32 %v2144, %v2153
          %v2280 = vmul.f32 %v2145, %v2153
          %v2281 = vmul.f32 %v2146, %v2153
          %v2282 = vmul.f32 %v2147, %v2153
          %v2283 = vld [vmem:[%s290] sm:$0x1]
          %v2285 = vlaneseq
          %v2286 = vshrl.u32 %v2285, 7
          %v2287 = vsub.s32 0, %v2286
          %v2288 = vrot.slane %v2283, %v2287
          %v2290 = vadd.f32 %v2155, %v2288
          %v2291 = vadd.f32 %v2156, %v2288
          %v2292 = vadd.f32 %v2157, %v2288
          %v2293 = vadd.f32 %v2158, %v2288
          %v2294 = vadd.f32 %v2159, %v2288
          %v2295 = vadd.f32 %v2160, %v2288
          %v2296 = vadd.f32 %v2161, %v2288
          %v2297 = vadd.f32 %v2162, %v2288
          %v2298 = vadd.f32 %v2163, %v2288
          %v2299 = vadd.f32 %v2164, %v2288
          %v2300 = vadd.f32 %v2165, %v2288
          %v2301 = vadd.f32 %v2166, %v2288
          %v2302 = vadd.f32 %v2167, %v2288
          %v2303 = vadd.f32 %v2168, %v2288
          %v2304 = vadd.f32 %v2169, %v2288
          %v2305 = vadd.f32 %v2170, %v2288
          %v2306 = vadd.f32 %v2171, %v2288
          %v2307 = vadd.f32 %v2172, %v2288
          %v2308 = vadd.f32 %v2173, %v2288
          %v2309 = vadd.f32 %v2174, %v2288
          %v2310 = vadd.f32 %v2175, %v2288
          %v2311 = vadd.f32 %v2176, %v2288
          %v2312 = vadd.f32 %v2177, %v2288
          %v2313 = vadd.f32 %v2178, %v2288
          %v2314 = vadd.f32 %v2179, %v2288
          %v2315 = vadd.f32 %v2180, %v2288
          %v2316 = vadd.f32 %v2181, %v2288
          %v2317 = vadd.f32 %v2182, %v2288
          %v2318 = vadd.f32 %v2183, %v2288
          %v2319 = vadd.f32 %v2184, %v2288
          %v2320 = vadd.f32 %v2185, %v2288
          %v2321 = vadd.f32 %v2186, %v2288
          %v2322 = vadd.f32 %v2187, %v2288
          %v2323 = vadd.f32 %v2188, %v2288
          %v2324 = vadd.f32 %v2189, %v2288
          %v2325 = vadd.f32 %v2190, %v2288
          %v2326 = vadd.f32 %v2191, %v2288
          %v2327 = vadd.f32 %v2192, %v2288
          %v2328 = vadd.f32 %v2193, %v2288
          %v2329 = vadd.f32 %v2194, %v2288
          %v2330 = vadd.f32 %v2195, %v2288
          %v2331 = vadd.f32 %v2196, %v2288
          %v2332 = vadd.f32 %v2197, %v2288
          %v2333 = vadd.f32 %v2198, %v2288
          %v2334 = vadd.f32 %v2199, %v2288
          %v2335 = vadd.f32 %v2200, %v2288
          %v2336 = vadd.f32 %v2201, %v2288
          %v2337 = vadd.f32 %v2202, %v2288
          %v2338 = vadd.f32 %v2203, %v2288
          %v2339 = vadd.f32 %v2204, %v2288
          %v2340 = vadd.f32 %v2205, %v2288
          %v2341 = vadd.f32 %v2206, %v2288
          %v2342 = vadd.f32 %v2207, %v2288
          %v2343 = vadd.f32 %v2208, %v2288
          %v2344 = vadd.f32 %v2209, %v2288
          %v2345 = vadd.f32 %v2210, %v2288
          %v2346 = vadd.f32 %v2211, %v2288
          %v2347 = vadd.f32 %v2212, %v2288
          %v2348 = vadd.f32 %v2213, %v2288
          %v2349 = vadd.f32 %v2214, %v2288
          %v2350 = vadd.f32 %v2215, %v2288
          %v2351 = vadd.f32 %v2216, %v2288
          %v2352 = vadd.f32 %v2217, %v2288
          %v2353 = vadd.f32 %v2218, %v2288
          %v2354 = vadd.f32 %v2219, %v2288
          %v2355 = vadd.f32 %v2220, %v2288
          %v2356 = vadd.f32 %v2221, %v2288
          %v2357 = vadd.f32 %v2222, %v2288
          %v2358 = vadd.f32 %v2223, %v2288
          %v2359 = vadd.f32 %v2224, %v2288
          %v2360 = vadd.f32 %v2225, %v2288
          %v2361 = vadd.f32 %v2226, %v2288
          %v2362 = vadd.f32 %v2227, %v2288
          %v2363 = vadd.f32 %v2228, %v2288
          %v2364 = vadd.f32 %v2229, %v2288
          %v2365 = vadd.f32 %v2230, %v2288
          %v2366 = vadd.f32 %v2231, %v2288
          %v2367 = vadd.f32 %v2232, %v2288
          %v2368 = vadd.f32 %v2233, %v2288
          %v2369 = vadd.f32 %v2234, %v2288
          %v2370 = vadd.f32 %v2235, %v2288
          %v2371 = vadd.f32 %v2236, %v2288
          %v2372 = vadd.f32 %v2237, %v2288
          %v2373 = vadd.f32 %v2238, %v2288
          %v2374 = vadd.f32 %v2239, %v2288
          %v2375 = vadd.f32 %v2240, %v2288
          %v2376 = vadd.f32 %v2241, %v2288
          %v2377 = vadd.f32 %v2242, %v2288
          %v2378 = vadd.f32 %v2243, %v2288
          %v2379 = vadd.f32 %v2244, %v2288
          %v2380 = vadd.f32 %v2245, %v2288
          %v2381 = vadd.f32 %v2246, %v2288
          %v2382 = vadd.f32 %v2247, %v2288
          %v2383 = vadd.f32 %v2248, %v2288
          %v2384 = vadd.f32 %v2249, %v2288
          %v2385 = vadd.f32 %v2250, %v2288
          %v2386 = vadd.f32 %v2251, %v2288
          %v2387 = vadd.f32 %v2252, %v2288
          %v2388 = vadd.f32 %v2253, %v2288
          %v2389 = vadd.f32 %v2254, %v2288
          %v2390 = vadd.f32 %v2255, %v2288
          %v2391 = vadd.f32 %v2256, %v2288
          %v2392 = vadd.f32 %v2257, %v2288
          %v2393 = vadd.f32 %v2258, %v2288
          %v2394 = vadd.f32 %v2259, %v2288
          %v2395 = vadd.f32 %v2260, %v2288
          %v2396 = vadd.f32 %v2261, %v2288
          %v2397 = vadd.f32 %v2262, %v2288
          %v2398 = vadd.f32 %v2263, %v2288
          %v2399 = vadd.f32 %v2264, %v2288
          %v2400 = vadd.f32 %v2265, %v2288
          %v2401 = vadd.f32 %v2266, %v2288
          %v2402 = vadd.f32 %v2267, %v2288
          %v2403 = vadd.f32 %v2268, %v2288
          %v2404 = vadd.f32 %v2269, %v2288
          %v2405 = vadd.f32 %v2270, %v2288
          %v2406 = vadd.f32 %v2271, %v2288
          %v2407 = vadd.f32 %v2272, %v2288
          %v2408 = vadd.f32 %v2273, %v2288
          %v2409 = vadd.f32 %v2274, %v2288
          %v2410 = vadd.f32 %v2275, %v2288
          %v2411 = vadd.f32 %v2276, %v2288
          %v2412 = vadd.f32 %v2277, %v2288
          %v2413 = vadd.f32 %v2278, %v2288
          %v2414 = vadd.f32 %v2279, %v2288
          %v2415 = vadd.f32 %v2280, %v2288
          %v2416 = vadd.f32 %v2281, %v2288
          %v2417 = vadd.f32 %v2282, %v2288
          %v2418 = vmax.f32 %v2290, 0.0
          %v2419 = vmax.f32 %v2291, 0.0
          %v2420 = vmax.f32 %v2292, 0.0
          %v2421 = vmax.f32 %v2293, 0.0
          %v2422 = vmax.f32 %v2294, 0.0
          %v2423 = vmax.f32 %v2295, 0.0
          %v2424 = vmax.f32 %v2296, 0.0
          %v2425 = vmax.f32 %v2297, 0.0
          %v2426 = vmax.f32 %v2298, 0.0
          %v2427 = vmax.f32 %v2299, 0.0
          %v2428 = vmax.f32 %v2300, 0.0
          %v2429 = vmax.f32 %v2301, 0.0
          %v2430 = vmax.f32 %v2302, 0.0
          %v2431 = vmax.f32 %v2303, 0.0
          %v2432 = vmax.f32 %v2304, 0.0
          %v2433 = vmax.f32 %v2305, 0.0
          %v2434 = vmax.f32 %v2306, 0.0
          %v2435 = vmax.f32 %v2307, 0.0
          %v2436 = vmax.f32 %v2308, 0.0
          %v2437 = vmax.f32 %v2309, 0.0
          %v2438 = vmax.f32 %v2310, 0.0
          %v2439 = vmax.f32 %v2311, 0.0
          %v2440 = vmax.f32 %v2312, 0.0
          %v2441 = vmax.f32 %v2313, 0.0
          %v2442 = vmax.f32 %v2314, 0.0
          %v2443 = vmax.f32 %v2315, 0.0
          %v2444 = vmax.f32 %v2316, 0.0
          %v2445 = vmax.f32 %v2317, 0.0
          %v2446 = vmax.f32 %v2318, 0.0
          %v2447 = vmax.f32 %v2319, 0.0
          %v2448 = vmax.f32 %v2320, 0.0
          %v2449 = vmax.f32 %v2321, 0.0
          %v2450 = vmax.f32 %v2322, 0.0
          %v2451 = vmax.f32 %v2323, 0.0
          %v2452 = vmax.f32 %v2324, 0.0
          %v2453 = vmax.f32 %v2325, 0.0
          %v2454 = vmax.f32 %v2326, 0.0
          %v2455 = vmax.f32 %v2327, 0.0
          %v2456 = vmax.f32 %v2328, 0.0
          %v2457 = vmax.f32 %v2329, 0.0
          %v2458 = vmax.f32 %v2330, 0.0
          %v2459 = vmax.f32 %v2331, 0.0
          %v2460 = vmax.f32 %v2332, 0.0
          %v2461 = vmax.f32 %v2333, 0.0
          %v2462 = vmax.f32 %v2334, 0.0
          %v2463 = vmax.f32 %v2335, 0.0
          %v2464 = vmax.f32 %v2336, 0.0
          %v2465 = vmax.f32 %v2337, 0.0
          %v2466 = vmax.f32 %v2338, 0.0
          %v2467 = vmax.f32 %v2339, 0.0
          %v2468 = vmax.f32 %v2340, 0.0
          %v2469 = vmax.f32 %v2341, 0.0
          %v2470 = vmax.f32 %v2342, 0.0
          %v2471 = vmax.f32 %v2343, 0.0
          %v2472 = vmax.f32 %v2344, 0.0
          %v2473 = vmax.f32 %v2345, 0.0
          %v2474 = vmax.f32 %v2346, 0.0
          %v2475 = vmax.f32 %v2347, 0.0
          %v2476 = vmax.f32 %v2348, 0.0
          %v2477 = vmax.f32 %v2349, 0.0
          %v2478 = vmax.f32 %v2350, 0.0
          %v2479 = vmax.f32 %v2351, 0.0
          %v2480 = vmax.f32 %v2352, 0.0
          %v2481 = vmax.f32 %v2353, 0.0
          %v2482 = vmax.f32 %v2354, 0.0
          %v2483 = vmax.f32 %v2355, 0.0
          %v2484 = vmax.f32 %v2356, 0.0
          %v2485 = vmax.f32 %v2357, 0.0
          %v2486 = vmax.f32 %v2358, 0.0
          %v2487 = vmax.f32 %v2359, 0.0
          %v2488 = vmax.f32 %v2360, 0.0
          %v2489 = vmax.f32 %v2361, 0.0
          %v2490 = vmax.f32 %v2362, 0.0
          %v2491 = vmax.f32 %v2363, 0.0
          %v2492 = vmax.f32 %v2364, 0.0
          %v2493 = vmax.f32 %v2365, 0.0
          %v2494 = vmax.f32 %v2366, 0.0
          %v2495 = vmax.f32 %v2367, 0.0
          %v2496 = vmax.f32 %v2368, 0.0
          %v2497 = vmax.f32 %v2369, 0.0
          %v2498 = vmax.f32 %v2370, 0.0
          %v2499 = vmax.f32 %v2371, 0.0
          %v2500 = vmax.f32 %v2372, 0.0
          %v2501 = vmax.f32 %v2373, 0.0
          %v2502 = vmax.f32 %v2374, 0.0
          %v2503 = vmax.f32 %v2375, 0.0
          %v2504 = vmax.f32 %v2376, 0.0
          %v2505 = vmax.f32 %v2377, 0.0
          %v2506 = vmax.f32 %v2378, 0.0
          %v2507 = vmax.f32 %v2379, 0.0
          %v2508 = vmax.f32 %v2380, 0.0
          %v2509 = vmax.f32 %v2381, 0.0
          %v2510 = vmax.f32 %v2382, 0.0
          %v2511 = vmax.f32 %v2383, 0.0
          %v2512 = vmax.f32 %v2384, 0.0
          %v2513 = vmax.f32 %v2385, 0.0
          %v2514 = vmax.f32 %v2386, 0.0
          %v2515 = vmax.f32 %v2387, 0.0
          %v2516 = vmax.f32 %v2388, 0.0
          %v2517 = vmax.f32 %v2389, 0.0
          %v2518 = vmax.f32 %v2390, 0.0
          %v2519 = vmax.f32 %v2391, 0.0
          %v2520 = vmax.f32 %v2392, 0.0
          %v2521 = vmax.f32 %v2393, 0.0
          %v2522 = vmax.f32 %v2394, 0.0
          %v2523 = vmax.f32 %v2395, 0.0
          %v2524 = vmax.f32 %v2396, 0.0
          %v2525 = vmax.f32 %v2397, 0.0
          %v2526 = vmax.f32 %v2398, 0.0
          %v2527 = vmax.f32 %v2399, 0.0
          %v2528 = vmax.f32 %v2400, 0.0
          %v2529 = vmax.f32 %v2401, 0.0
          %v2530 = vmax.f32 %v2402, 0.0
          %v2531 = vmax.f32 %v2403, 0.0
          %v2532 = vmax.f32 %v2404, 0.0
          %v2533 = vmax.f32 %v2405, 0.0
          %v2534 = vmax.f32 %v2406, 0.0
          %v2535 = vmax.f32 %v2407, 0.0
          %v2536 = vmax.f32 %v2408, 0.0
          %v2537 = vmax.f32 %v2409, 0.0
          %v2538 = vmax.f32 %v2410, 0.0
          %v2539 = vmax.f32 %v2411, 0.0
          %v2540 = vmax.f32 %v2412, 0.0
          %v2541 = vmax.f32 %v2413, 0.0
          %v2542 = vmax.f32 %v2414, 0.0
          %v2543 = vmax.f32 %v2415, 0.0
          %v2544 = vmax.f32 %v2416, 0.0
          %v2545 = vmax.f32 %v2417, 0.0
          %v2546 = vpack.c.bf16 %v2419, %v2418
          %v2547 = vpack.c.bf16 %v2421, %v2420
          %v2548 = vpack.c.bf16 %v2423, %v2422
          %v2549 = vpack.c.bf16 %v2425, %v2424
          %v2550 = vpack.c.bf16 %v2427, %v2426
          %v2551 = vpack.c.bf16 %v2429, %v2428
          %v2552 = vpack.c.bf16 %v2431, %v2430
          %v2553 = vpack.c.bf16 %v2433, %v2432
          %v2554 = vpack.c.bf16 %v2435, %v2434
          %v2555 = vpack.c.bf16 %v2437, %v2436
          %v2556 = vpack.c.bf16 %v2439, %v2438
          %v2557 = vpack.c.bf16 %v2441, %v2440
          %v2558 = vpack.c.bf16 %v2443, %v2442
          %v2559 = vpack.c.bf16 %v2445, %v2444
          %v2560 = vpack.c.bf16 %v2447, %v2446
          %v2561 = vpack.c.bf16 %v2449, %v2448
          %v2562 = vpack.c.bf16 %v2451, %v2450
          %v2563 = vpack.c.bf16 %v2453, %v2452
          %v2564 = vpack.c.bf16 %v2455, %v2454
          %v2565 = vpack.c.bf16 %v2457, %v2456
          %v2566 = vpack.c.bf16 %v2459, %v2458
          %v2567 = vpack.c.bf16 %v2461, %v2460
          %v2568 = vpack.c.bf16 %v2463, %v2462
          %v2569 = vpack.c.bf16 %v2465, %v2464
          %v2570 = vpack.c.bf16 %v2467, %v2466
          %v2571 = vpack.c.bf16 %v2469, %v2468
          %v2572 = vpack.c.bf16 %v2471, %v2470
          %v2573 = vpack.c.bf16 %v2473, %v2472
          %v2574 = vpack.c.bf16 %v2475, %v2474
          %v2575 = vpack.c.bf16 %v2477, %v2476
          %v2576 = vpack.c.bf16 %v2479, %v2478
          %v2577 = vpack.c.bf16 %v2481, %v2480
          %v2578 = vpack.c.bf16 %v2483, %v2482
          %v2579 = vpack.c.bf16 %v2485, %v2484
          %v2580 = vpack.c.bf16 %v2487, %v2486
          %v2581 = vpack.c.bf16 %v2489, %v2488
          %v2582 = vpack.c.bf16 %v2491, %v2490
          %v2583 = vpack.c.bf16 %v2493, %v2492
          %v2584 = vpack.c.bf16 %v2495, %v2494
          %v2585 = vpack.c.bf16 %v2497, %v2496
          %v2586 = vpack.c.bf16 %v2499, %v2498
          %v2587 = vpack.c.bf16 %v2501, %v2500
          %v2588 = vpack.c.bf16 %v2503, %v2502
          %v2589 = vpack.c.bf16 %v2505, %v2504
          %v2590 = vpack.c.bf16 %v2507, %v2506
          %v2591 = vpack.c.bf16 %v2509, %v2508
          %v2592 = vpack.c.bf16 %v2511, %v2510
          %v2593 = vpack.c.bf16 %v2513, %v2512
          %v2594 = vpack.c.bf16 %v2515, %v2514
          %v2595 = vpack.c.bf16 %v2517, %v2516
          %v2596 = vpack.c.bf16 %v2519, %v2518
          %v2597 = vpack.c.bf16 %v2521, %v2520
          %v2598 = vpack.c.bf16 %v2523, %v2522
          %v2599 = vpack.c.bf16 %v2525, %v2524
          %v2600 = vpack.c.bf16 %v2527, %v2526
          %v2601 = vpack.c.bf16 %v2529, %v2528
          %v2602 = vpack.c.bf16 %v2531, %v2530
          %v2603 = vpack.c.bf16 %v2533, %v2532
          %v2604 = vpack.c.bf16 %v2535, %v2534
          %v2605 = vpack.c.bf16 %v2537, %v2536
          %v2606 = vpack.c.bf16 %v2539, %v2538
          %v2607 = vpack.c.bf16 %v2541, %v2540
          %v2608 = vpack.c.bf16 %v2543, %v2542
          %v2609 = vpack.c.bf16 %v2545, %v2544
          %v2674 = vunpack.c.l.b16 %v2546
          %v2675 = vunpack.c.h.b16 %v2546
          %v2676 = vunpack.c.l.b16 %v2547
          %v2677 = vunpack.c.h.b16 %v2547
          %v2678 = vunpack.c.l.b16 %v2548
          %v2679 = vunpack.c.h.b16 %v2548
          %v2680 = vunpack.c.l.b16 %v2549
          %v2681 = vunpack.c.h.b16 %v2549
          %v2682 = vunpack.c.l.b16 %v2550
          %v2683 = vunpack.c.h.b16 %v2550
          %v2684 = vunpack.c.l.b16 %v2551
          %v2685 = vunpack.c.h.b16 %v2551
          %v2686 = vunpack.c.l.b16 %v2552
          %v2687 = vunpack.c.h.b16 %v2552
          %v2688 = vunpack.c.l.b16 %v2553
          %v2689 = vunpack.c.h.b16 %v2553
          %v2690 = vunpack.c.l.b16 %v2554
          %v2691 = vunpack.c.h.b16 %v2554
          %v2692 = vunpack.c.l.b16 %v2555
          %v2693 = vunpack.c.h.b16 %v2555
          %v2694 = vunpack.c.l.b16 %v2556
          %v2695 = vunpack.c.h.b16 %v2556
          %v2696 = vunpack.c.l.b16 %v2557
          %v2697 = vunpack.c.h.b16 %v2557
          %v2698 = vunpack.c.l.b16 %v2558
          %v2699 = vunpack.c.h.b16 %v2558
          %v2700 = vunpack.c.l.b16 %v2559
          %v2701 = vunpack.c.h.b16 %v2559
          %v2702 = vunpack.c.l.b16 %v2560
          %v2703 = vunpack.c.h.b16 %v2560
          %v2704 = vunpack.c.l.b16 %v2561
          %v2705 = vunpack.c.h.b16 %v2561
          %v2706 = vunpack.c.l.b16 %v2562
          %v2707 = vunpack.c.h.b16 %v2562
          %v2708 = vunpack.c.l.b16 %v2563
          %v2709 = vunpack.c.h.b16 %v2563
          %v2710 = vunpack.c.l.b16 %v2564
          %v2711 = vunpack.c.h.b16 %v2564
          %v2712 = vunpack.c.l.b16 %v2565
          %v2713 = vunpack.c.h.b16 %v2565
          %v2714 = vunpack.c.l.b16 %v2566
          %v2715 = vunpack.c.h.b16 %v2566
          %v2716 = vunpack.c.l.b16 %v2567
          %v2717 = vunpack.c.h.b16 %v2567
          %v2718 = vunpack.c.l.b16 %v2568
          %v2719 = vunpack.c.h.b16 %v2568
          %v2720 = vunpack.c.l.b16 %v2569
          %v2721 = vunpack.c.h.b16 %v2569
          %v2722 = vunpack.c.l.b16 %v2570
          %v2723 = vunpack.c.h.b16 %v2570
          %v2724 = vunpack.c.l.b16 %v2571
          %v2725 = vunpack.c.h.b16 %v2571
          %v2726 = vunpack.c.l.b16 %v2572
          %v2727 = vunpack.c.h.b16 %v2572
          %v2728 = vunpack.c.l.b16 %v2573
          %v2729 = vunpack.c.h.b16 %v2573
          %v2730 = vunpack.c.l.b16 %v2574
          %v2731 = vunpack.c.h.b16 %v2574
          %v2732 = vunpack.c.l.b16 %v2575
          %v2733 = vunpack.c.h.b16 %v2575
          %v2734 = vunpack.c.l.b16 %v2576
          %v2735 = vunpack.c.h.b16 %v2576
          %v2736 = vunpack.c.l.b16 %v2577
          %v2737 = vunpack.c.h.b16 %v2577
          %v2738 = vunpack.c.l.b16 %v2578
          %v2739 = vunpack.c.h.b16 %v2578
          %v2740 = vunpack.c.l.b16 %v2579
          %v2741 = vunpack.c.h.b16 %v2579
          %v2742 = vunpack.c.l.b16 %v2580
          %v2743 = vunpack.c.h.b16 %v2580
          %v2744 = vunpack.c.l.b16 %v2581
          %v2745 = vunpack.c.h.b16 %v2581
          %v2746 = vunpack.c.l.b16 %v2582
          %v2747 = vunpack.c.h.b16 %v2582
          %v2748 = vunpack.c.l.b16 %v2583
          %v2749 = vunpack.c.h.b16 %v2583
          %v2750 = vunpack.c.l.b16 %v2584
          %v2751 = vunpack.c.h.b16 %v2584
          %v2752 = vunpack.c.l.b16 %v2585
          %v2753 = vunpack.c.h.b16 %v2585
          %v2754 = vunpack.c.l.b16 %v2586
          %v2755 = vunpack.c.h.b16 %v2586
          %v2756 = vunpack.c.l.b16 %v2587
          %v2757 = vunpack.c.h.b16 %v2587
          %v2758 = vunpack.c.l.b16 %v2588
          %v2759 = vunpack.c.h.b16 %v2588
          %v2760 = vunpack.c.l.b16 %v2589
          %v2761 = vunpack.c.h.b16 %v2589
          %v2762 = vunpack.c.l.b16 %v2590
          %v2763 = vunpack.c.h.b16 %v2590
          %v2764 = vunpack.c.l.b16 %v2591
          %v2765 = vunpack.c.h.b16 %v2591
          %v2766 = vunpack.c.l.b16 %v2592
          %v2767 = vunpack.c.h.b16 %v2592
          %v2768 = vunpack.c.l.b16 %v2593
          %v2769 = vunpack.c.h.b16 %v2593
          %v2770 = vunpack.c.l.b16 %v2594
          %v2771 = vunpack.c.h.b16 %v2594
          %v2772 = vunpack.c.l.b16 %v2595
          %v2773 = vunpack.c.h.b16 %v2595
          %v2774 = vunpack.c.l.b16 %v2596
          %v2775 = vunpack.c.h.b16 %v2596
          %v2776 = vunpack.c.l.b16 %v2597
          %v2777 = vunpack.c.h.b16 %v2597
          %v2778 = vunpack.c.l.b16 %v2598
          %v2779 = vunpack.c.h.b16 %v2598
          %v2780 = vunpack.c.l.b16 %v2599
          %v2781 = vunpack.c.h.b16 %v2599
          %v2782 = vunpack.c.l.b16 %v2600
          %v2783 = vunpack.c.h.b16 %v2600
          %v2784 = vunpack.c.l.b16 %v2601
          %v2785 = vunpack.c.h.b16 %v2601
          %v2786 = vunpack.c.l.b16 %v2602
          %v2787 = vunpack.c.h.b16 %v2602
          %v2788 = vunpack.c.l.b16 %v2603
          %v2789 = vunpack.c.h.b16 %v2603
          %v2790 = vunpack.c.l.b16 %v2604
          %v2791 = vunpack.c.h.b16 %v2604
          %v2792 = vunpack.c.l.b16 %v2605
          %v2793 = vunpack.c.h.b16 %v2605
          %v2794 = vunpack.c.l.b16 %v2606
          %v2795 = vunpack.c.h.b16 %v2606
          %v2796 = vunpack.c.l.b16 %v2607
          %v2797 = vunpack.c.h.b16 %v2607
          %v2798 = vunpack.c.l.b16 %v2608
          %v2799 = vunpack.c.h.b16 %v2608
          %v2800 = vunpack.c.l.b16 %v2609
          %v2801 = vunpack.c.h.b16 %v2609
          %v2802 = vpack.c.b16 %v2674, %v2674
          %v2803 = vpack.c.b16 %v2675, %v2675
          %v2804 = vpack.c.b16 %v2676, %v2676
          %v2805 = vpack.c.b16 %v2677, %v2677
          %v2806 = vpack.c.b16 %v2678, %v2678
          %v2807 = vpack.c.b16 %v2679, %v2679
          %v2808 = vpack.c.b16 %v2680, %v2680
          %v2809 = vpack.c.b16 %v2681, %v2681
          %v2810 = vpack.c.b16 %v2682, %v2682
          %v2811 = vpack.c.b16 %v2683, %v2683
          %v2812 = vpack.c.b16 %v2684, %v2684
          %v2813 = vpack.c.b16 %v2685, %v2685
          %v2814 = vpack.c.b16 %v2686, %v2686
          %v2815 = vpack.c.b16 %v2687, %v2687
          %v2816 = vpack.c.b16 %v2688, %v2688
          %v2817 = vpack.c.b16 %v2689, %v2689
          %v2818 = vpack.c.b16 %v2690, %v2690
          %v2819 = vpack.c.b16 %v2691, %v2691
          %v2820 = vpack.c.b16 %v2692, %v2692
          %v2821 = vpack.c.b16 %v2693, %v2693
          %v2822 = vpack.c.b16 %v2694, %v2694
          %v2823 = vpack.c.b16 %v2695, %v2695
          %v2824 = vpack.c.b16 %v2696, %v2696
          %v2825 = vpack.c.b16 %v2697, %v2697
          %v2826 = vpack.c.b16 %v2698, %v2698
          %v2827 = vpack.c.b16 %v2699, %v2699
          %v2828 = vpack.c.b16 %v2700, %v2700
          %v2829 = vpack.c.b16 %v2701, %v2701
          %v2830 = vpack.c.b16 %v2702, %v2702
          %v2831 = vpack.c.b16 %v2703, %v2703
          %v2832 = vpack.c.b16 %v2704, %v2704
          %v2833 = vpack.c.b16 %v2705, %v2705
          %v2834 = vpack.c.b16 %v2706, %v2706
          %v2835 = vpack.c.b16 %v2707, %v2707
          %v2836 = vpack.c.b16 %v2708, %v2708
          %v2837 = vpack.c.b16 %v2709, %v2709
          %v2838 = vpack.c.b16 %v2710, %v2710
          %v2839 = vpack.c.b16 %v2711, %v2711
          %v2840 = vpack.c.b16 %v2712, %v2712
          %v2841 = vpack.c.b16 %v2713, %v2713
          %v2842 = vpack.c.b16 %v2714, %v2714
          %v2843 = vpack.c.b16 %v2715, %v2715
          %v2844 = vpack.c.b16 %v2716, %v2716
          %v2845 = vpack.c.b16 %v2717, %v2717
          %v2846 = vpack.c.b16 %v2718, %v2718
          %v2847 = vpack.c.b16 %v2719, %v2719
          %v2848 = vpack.c.b16 %v2720, %v2720
          %v2849 = vpack.c.b16 %v2721, %v2721
          %v2850 = vpack.c.b16 %v2722, %v2722
          %v2851 = vpack.c.b16 %v2723, %v2723
          %v2852 = vpack.c.b16 %v2724, %v2724
          %v2853 = vpack.c.b16 %v2725, %v2725
          %v2854 = vpack.c.b16 %v2726, %v2726
          %v2855 = vpack.c.b16 %v2727, %v2727
          %v2856 = vpack.c.b16 %v2728, %v2728
          %v2857 = vpack.c.b16 %v2729, %v2729
          %v2858 = vpack.c.b16 %v2730, %v2730
          %v2859 = vpack.c.b16 %v2731, %v2731
          %v2860 = vpack.c.b16 %v2732, %v2732
          %v2861 = vpack.c.b16 %v2733, %v2733
          %v2862 = vpack.c.b16 %v2734, %v2734
          %v2863 = vpack.c.b16 %v2735, %v2735
          %v2864 = vpack.c.b16 %v2736, %v2736
          %v2865 = vpack.c.b16 %v2737, %v2737
          %v2866 = vpack.c.b16 %v2738, %v2738
          %v2867 = vpack.c.b16 %v2739, %v2739
          %v2868 = vpack.c.b16 %v2740, %v2740
          %v2869 = vpack.c.b16 %v2741, %v2741
          %v2870 = vpack.c.b16 %v2742, %v2742
          %v2871 = vpack.c.b16 %v2743, %v2743
          %v2872 = vpack.c.b16 %v2744, %v2744
          %v2873 = vpack.c.b16 %v2745, %v2745
          %v2874 = vpack.c.b16 %v2746, %v2746
          %v2875 = vpack.c.b16 %v2747, %v2747
          %v2876 = vpack.c.b16 %v2748, %v2748
          %v2877 = vpack.c.b16 %v2749, %v2749
          %v2878 = vpack.c.b16 %v2750, %v2750
          %v2879 = vpack.c.b16 %v2751, %v2751
          %v2880 = vpack.c.b16 %v2752, %v2752
          %v2881 = vpack.c.b16 %v2753, %v2753
          %v2882 = vpack.c.b16 %v2754, %v2754
          %v2883 = vpack.c.b16 %v2755, %v2755
          %v2884 = vpack.c.b16 %v2756, %v2756
          %v2885 = vpack.c.b16 %v2757, %v2757
          %v2886 = vpack.c.b16 %v2758, %v2758
          %v2887 = vpack.c.b16 %v2759, %v2759
          %v2888 = vpack.c.b16 %v2760, %v2760
          %v2889 = vpack.c.b16 %v2761, %v2761
          %v2890 = vpack.c.b16 %v2762, %v2762
          %v2891 = vpack.c.b16 %v2763, %v2763
          %v2892 = vpack.c.b16 %v2764, %v2764
          %v2893 = vpack.c.b16 %v2765, %v2765
          %v2894 = vpack.c.b16 %v2766, %v2766
          %v2895 = vpack.c.b16 %v2767, %v2767
          %v2896 = vpack.c.b16 %v2768, %v2768
          %v2897 = vpack.c.b16 %v2769, %v2769
          %v2898 = vpack.c.b16 %v2770, %v2770
          %v2899 = vpack.c.b16 %v2771, %v2771
          %v2900 = vpack.c.b16 %v2772, %v2772
          %v2901 = vpack.c.b16 %v2773, %v2773
          %v2902 = vpack.c.b16 %v2774, %v2774
          %v2903 = vpack.c.b16 %v2775, %v2775
          %v2904 = vpack.c.b16 %v2776, %v2776
          %v2905 = vpack.c.b16 %v2777, %v2777
          %v2906 = vpack.c.b16 %v2778, %v2778
          %v2907 = vpack.c.b16 %v2779, %v2779
          %v2908 = vpack.c.b16 %v2780, %v2780
          %v2909 = vpack.c.b16 %v2781, %v2781
          %v2910 = vpack.c.b16 %v2782, %v2782
          %v2911 = vpack.c.b16 %v2783, %v2783
          %v2912 = vpack.c.b16 %v2784, %v2784
          %v2913 = vpack.c.b16 %v2785, %v2785
          %v2914 = vpack.c.b16 %v2786, %v2786
          %v2915 = vpack.c.b16 %v2787, %v2787
          %v2916 = vpack.c.b16 %v2788, %v2788
          %v2917 = vpack.c.b16 %v2789, %v2789
          %v2918 = vpack.c.b16 %v2790, %v2790
          %v2919 = vpack.c.b16 %v2791, %v2791
          %v2920 = vpack.c.b16 %v2792, %v2792
          %v2921 = vpack.c.b16 %v2793, %v2793
          %v2922 = vpack.c.b16 %v2794, %v2794
          %v2923 = vpack.c.b16 %v2795, %v2795
          %v2924 = vpack.c.b16 %v2796, %v2796
          %v2925 = vpack.c.b16 %v2797, %v2797
          %v2926 = vpack.c.b16 %v2798, %v2798
          %v2927 = vpack.c.b16 %v2799, %v2799
          %v2928 = vpack.c.b16 %v2800, %v2800
          %v2929 = vpack.c.b16 %v2801, %v2801
          %3058 = vst [vmem:[%s266] sm:$0xf] %v2802
          %3059 = vst [vmem:[%s266 + $0x4] sm:$0xf] %v2803
          %3060 = vst [vmem:[%s266 + $0x8] sm:$0xf] %v2804
          %3061 = vst [vmem:[%s266 + $0xc] sm:$0xf] %v2805
          %3062 = vst [vmem:[%s266 + $0x10] sm:$0xf] %v2806
          %3063 = vst [vmem:[%s266 + $0x14] sm:$0xf] %v2807
          %3064 = vst [vmem:[%s266 + $0x18] sm:$0xf] %v2808
          %3065 = vst [vmem:[%s266 + $0x1c] sm:$0xf] %v2809
          %3066 = vst [vmem:[%s266 + $0x20] sm:$0xf] %v2810
          %3067 = vst [vmem:[%s266 + $0x24] sm:$0xf] %v2811
          %3068 = vst [vmem:[%s266 + $0x28] sm:$0xf] %v2812
          %3069 = vst [vmem:[%s266 + $0x2c] sm:$0xf] %v2813
          %3070 = vst [vmem:[%s266 + $0x30] sm:$0xf] %v2814
          %3071 = vst [vmem:[%s266 + $0x34] sm:$0xf] %v2815
          %3072 = vst [vmem:[%s266 + $0x38] sm:$0xf] %v2816
          %3073 = vst [vmem:[%s266 + $0x3c] sm:$0xf] %v2817
          %3074 = vst [vmem:[%s266 + $0x40] sm:$0xf] %v2818
          %3075 = vst [vmem:[%s266 + $0x44] sm:$0xf] %v2819
          %3076 = vst [vmem:[%s266 + $0x48] sm:$0xf] %v2820
          %3077 = vst [vmem:[%s266 + $0x4c] sm:$0xf] %v2821
          %3078 = vst [vmem:[%s266 + $0x50] sm:$0xf] %v2822
          %3079 = vst [vmem:[%s266 + $0x54] sm:$0xf] %v2823
          %3080 = vst [vmem:[%s266 + $0x58] sm:$0xf] %v2824
          %3081 = vst [vmem:[%s266 + $0x5c] sm:$0xf] %v2825
          %3082 = vst [vmem:[%s266 + $0x60] sm:$0xf] %v2826
          %3083 = vst [vmem:[%s266 + $0x64] sm:$0xf] %v2827
          %3084 = vst [vmem:[%s266 + $0x68] sm:$0xf] %v2828
          %3085 = vst [vmem:[%s266 + $0x6c] sm:$0xf] %v2829
          %3086 = vst [vmem:[%s266 + $0x70] sm:$0xf] %v2830
          %3087 = vst [vmem:[%s266 + $0x74] sm:$0xf] %v2831
          %3088 = vst [vmem:[%s266 + $0x78] sm:$0xf] %v2832
          %3089 = vst [vmem:[%s266 + $0x7c] sm:$0xf] %v2833
          %3090 = vst [vmem:[%s266 + $0x80] sm:$0xf] %v2834
          %3091 = vst [vmem:[%s266 + $0x84] sm:$0xf] %v2835
          %3092 = vst [vmem:[%s266 + $0x88] sm:$0xf] %v2836
          %3093 = vst [vmem:[%s266 + $0x8c] sm:$0xf] %v2837
          %3094 = vst [vmem:[%s266 + $0x90] sm:$0xf] %v2838
          %3095 = vst [vmem:[%s266 + $0x94] sm:$0xf] %v2839
          %3096 = vst [vmem:[%s266 + $0x98] sm:$0xf] %v2840
          %3097 = vst [vmem:[%s266 + $0x9c] sm:$0xf] %v2841
          %3098 = vst [vmem:[%s266 + $0xa0] sm:$0xf] %v2842
          %3099 = vst [vmem:[%s266 + $0xa4] sm:$0xf] %v2843
          %3100 = vst [vmem:[%s266 + $0xa8] sm:$0xf] %v2844
          %3101 = vst [vmem:[%s266 + $0xac] sm:$0xf] %v2845
          %3102 = vst [vmem:[%s266 + $0xb0] sm:$0xf] %v2846
          %3103 = vst [vmem:[%s266 + $0xb4] sm:$0xf] %v2847
          %3104 = vst [vmem:[%s266 + $0xb8] sm:$0xf] %v2848
          %3105 = vst [vmem:[%s266 + $0xbc] sm:$0xf] %v2849
          %3106 = vst [vmem:[%s266 + $0xc0] sm:$0xf] %v2850
          %3107 = vst [vmem:[%s266 + $0xc4] sm:$0xf] %v2851
          %3108 = vst [vmem:[%s266 + $0xc8] sm:$0xf] %v2852
          %3109 = vst [vmem:[%s266 + $0xcc] sm:$0xf] %v2853
          %3110 = vst [vmem:[%s266 + $0xd0] sm:$0xf] %v2854
          %3111 = vst [vmem:[%s266 + $0xd4] sm:$0xf] %v2855
          %3112 = vst [vmem:[%s266 + $0xd8] sm:$0xf] %v2856
          %3113 = vst [vmem:[%s266 + $0xdc] sm:$0xf] %v2857
          %3114 = vst [vmem:[%s266 + $0xe0] sm:$0xf] %v2858
          %3115 = vst [vmem:[%s266 + $0xe4] sm:$0xf] %v2859
          %3116 = vst [vmem:[%s266 + $0xe8] sm:$0xf] %v2860
          %3117 = vst [vmem:[%s266 + $0xec] sm:$0xf] %v2861
          %3118 = vst [vmem:[%s266 + $0xf0] sm:$0xf] %v2862
          %3119 = vst [vmem:[%s266 + $0xf4] sm:$0xf] %v2863
          %3120 = vst [vmem:[%s266 + $0xf8] sm:$0xf] %v2864
          %3121 = vst [vmem:[%s266 + $0xfc] sm:$0xf] %v2865
          %3122 = vst [vmem:[%s266 + $0x100] sm:$0xf] %v2866
          %3123 = vst [vmem:[%s266 + $0x104] sm:$0xf] %v2867
          %3124 = vst [vmem:[%s266 + $0x108] sm:$0xf] %v2868
          %3125 = vst [vmem:[%s266 + $0x10c] sm:$0xf] %v2869
          %3126 = vst [vmem:[%s266 + $0x110] sm:$0xf] %v2870
          %3127 = vst [vmem:[%s266 + $0x114] sm:$0xf] %v2871
          %3128 = vst [vmem:[%s266 + $0x118] sm:$0xf] %v2872
          %3129 = vst [vmem:[%s266 + $0x11c] sm:$0xf] %v2873
          %3130 = vst [vmem:[%s266 + $0x120] sm:$0xf] %v2874
          %3131 = vst [vmem:[%s266 + $0x124] sm:$0xf] %v2875
          %3132 = vst [vmem:[%s266 + $0x128] sm:$0xf] %v2876
          %3133 = vst [vmem:[%s266 + $0x12c] sm:$0xf] %v2877
          %3134 = vst [vmem:[%s266 + $0x130] sm:$0xf] %v2878
          %3135 = vst [vmem:[%s266 + $0x134] sm:$0xf] %v2879
          %3136 = vst [vmem:[%s266 + $0x138] sm:$0xf] %v2880
          %3137 = vst [vmem:[%s266 + $0x13c] sm:$0xf] %v2881
          %3138 = vst [vmem:[%s266 + $0x140] sm:$0xf] %v2882
          %3139 = vst [vmem:[%s266 + $0x144] sm:$0xf] %v2883
          %3140 = vst [vmem:[%s266 + $0x148] sm:$0xf] %v2884
          %3141 = vst [vmem:[%s266 + $0x14c] sm:$0xf] %v2885
          %3142 = vst [vmem:[%s266 + $0x150] sm:$0xf] %v2886
          %3143 = vst [vmem:[%s266 + $0x154] sm:$0xf] %v2887
          %3144 = vst [vmem:[%s266 + $0x158] sm:$0xf] %v2888
          %3145 = vst [vmem:[%s266 + $0x15c] sm:$0xf] %v2889
          %3146 = vst [vmem:[%s266 + $0x160] sm:$0xf] %v2890
          %3147 = vst [vmem:[%s266 + $0x164] sm:$0xf] %v2891
          %3148 = vst [vmem:[%s266 + $0x168] sm:$0xf] %v2892
          %3149 = vst [vmem:[%s266 + $0x16c] sm:$0xf] %v2893
          %3150 = vst [vmem:[%s266 + $0x170] sm:$0xf] %v2894
          %3151 = vst [vmem:[%s266 + $0x174] sm:$0xf] %v2895
          %3152 = vst [vmem:[%s266 + $0x178] sm:$0xf] %v2896
          %3153 = vst [vmem:[%s266 + $0x17c] sm:$0xf] %v2897
          %3154 = vst [vmem:[%s266 + $0x180] sm:$0xf] %v2898
          %3155 = vst [vmem:[%s266 + $0x184] sm:$0xf] %v2899
          %3156 = vst [vmem:[%s266 + $0x188] sm:$0xf] %v2900
          %3157 = vst [vmem:[%s266 + $0x18c] sm:$0xf] %v2901
          %3158 = vst [vmem:[%s266 + $0x190] sm:$0xf] %v2902
          %3159 = vst [vmem:[%s266 + $0x194] sm:$0xf] %v2903
          %3160 = vst [vmem:[%s266 + $0x198] sm:$0xf] %v2904
          %3161 = vst [vmem:[%s266 + $0x19c] sm:$0xf] %v2905
          %3162 = vst [vmem:[%s266 + $0x1a0] sm:$0xf] %v2906
          %3163 = vst [vmem:[%s266 + $0x1a4] sm:$0xf] %v2907
          %3164 = vst [vmem:[%s266 + $0x1a8] sm:$0xf] %v2908
          %3165 = vst [vmem:[%s266 + $0x1ac] sm:$0xf] %v2909
          %3166 = vst [vmem:[%s266 + $0x1b0] sm:$0xf] %v2910
          %3167 = vst [vmem:[%s266 + $0x1b4] sm:$0xf] %v2911
          %3168 = vst [vmem:[%s266 + $0x1b8] sm:$0xf] %v2912
          %3169 = vst [vmem:[%s266 + $0x1bc] sm:$0xf] %v2913
          %3170 = vst [vmem:[%s266 + $0x1c0] sm:$0xf] %v2914
          %3171 = vst [vmem:[%s266 + $0x1c4] sm:$0xf] %v2915
          %3172 = vst [vmem:[%s266 + $0x1c8] sm:$0xf] %v2916
          %3173 = vst [vmem:[%s266 + $0x1cc] sm:$0xf] %v2917
          %3174 = vst [vmem:[%s266 + $0x1d0] sm:$0xf] %v2918
          %3175 = vst [vmem:[%s266 + $0x1d4] sm:$0xf] %v2919
          %3176 = vst [vmem:[%s266 + $0x1d8] sm:$0xf] %v2920
          %3177 = vst [vmem:[%s266 + $0x1dc] sm:$0xf] %v2921
          %3178 = vst [vmem:[%s266 + $0x1e0] sm:$0xf] %v2922
          %3179 = vst [vmem:[%s266 + $0x1e4] sm:$0xf] %v2923
          %3180 = vst [vmem:[%s266 + $0x1e8] sm:$0xf] %v2924
          %3181 = vst [vmem:[%s266 + $0x1ec] sm:$0xf] %v2925
          %3182 = vst [vmem:[%s266 + $0x1f0] sm:$0xf] %v2926
          %3183 = vst [vmem:[%s266 + $0x1f4] sm:$0xf] %v2927
          %3184 = vst [vmem:[%s266 + $0x1f8] sm:$0xf] %v2928
          %3185 = vst [vmem:[%s266 + $0x1fc] sm:$0xf] %v2929
        $region44: #{tpu_custom_call.1} parent=35 // pred_fallthru
          _
        %s3186 = sand.u32 %s155, 1
        %s3187 = scalar_lea.sflag [#allocation4], %s3186
        %s3188 = sand.u32 %s155, 1
        %s3189 = smul.addr %s3188, 512
        %s3190 = scalar_lea.vmem [#allocation3], %s3189
        // Predicated region
        $region45: #{tpu_custom_call.1} parent=35 // pred_check
          %p3191 = pneg %p165
        $region46: #{tpu_custom_call.1} parent=35 // pred_check_branch
          %3193 = sbr.rel (%p3191) target = $region48
        $region47: #{tpu_custom_call.1} parent=35 // pred_region
          %s3194 = smul.u32 128, %s23
          %s3196 = ssub.s32 8192, 8192
          %3197 = vsyncadd %s3187, %s3196
          %s3198 = sadd.s32 %s24, %s3194
          %s3199 = smul.addr %s3198, 64
          %s3200 = scalar_lea.hbm %s4, %s3199
          %s3201 = sshll.u32 %s3190, 4
          %s3202 = int_to_ptr.vmem [resolvable:$true] %s3201
          %3207 = dma.vmem_to_hbm [thread:$0]  %s3202, 8192, %s3200, %s3187, 64, 64, 4
        $region48: #{tpu_custom_call.1} parent=35 // pred_fallthru
          _
      $region36: #{tpu_custom_call.1} parent=5 // pred_fallthru
        _
      %p3208 = scmp.le.s32.totalorder 2, %s13
      // Predicated region
      $region49: #{tpu_custom_call.1} parent=5 // pred_check
        %p3209 = pneg %p3208
      $region50: #{tpu_custom_call.1} parent=5 // pred_check_branch
        %3211 = sbr.rel (%p3209) target = $region52
      $region51: #{tpu_custom_call.1} parent=5 // pred_region
        %s3212 = ssub.s32 %s13, 2
        // Predicated region
        $region53: #{tpu_custom_call.1} parent=51 // pred_check
          %p3213 = pneg %p171
        $region54: #{tpu_custom_call.1} parent=51 // pred_check_branch
          %3215 = sbr.rel (%p3213) target = $region56
        $region55: #{tpu_custom_call.1} parent=51 // pred_region
          %s3216 = sand.u32 %s156, 1
          %s3217 = scalar_lea.sflag [#allocation4], %s3216
          %s3218 = sand.u32 %s156, 1
          %s3219 = smul.addr %s3218, 512
          %s3220 = scalar_lea.vmem [#allocation3], %s3219
          %3221 = dma.done %s3217, 8192
        $region56: #{tpu_custom_call.1} parent=51 // pred_fallthru
          _
      $region52: #{tpu_custom_call.1} parent=5 // pred_fallthru
        _
    $region6: #{tpu_custom_call.1} parent=1 // loop_footer
      %s17 = sadd.s32 1, %s13
    $region7: #{tpu_custom_call.1} parent=1 // loop_footer_branch
      %12 = sbr.rel target = $region3
    $region8: #{tpu_custom_call.1} parent=1 // loop_exit
      _
    %3222 = vsyncpa [#allocation4], 1
    %s3223 = scalar_lea.sflag [#allocation4], 1
    %3224 = vsyncpa %s3223, 1

</llo_original>
